<compile_context>
chip_gen: v7x
topology: tpu7x:2x2x1
jax: 0.10.0
libtpu: 0.0.40
codegen_flags: <defaults>
</compile_context>

<pallas_src>
import functools

import jax
import jax.numpy as jnp
from jax.experimental import pallas as pl
from jax.experimental.pallas import tpu as pltpu

BN_EPS = 1e-5
GEMM_DTYPE = jnp.bfloat16            # jnp.float32 reproduces the f32 reference < 1e-2
_VMEM_LIMIT_BYTES = 32 * 1024 * 1024  # explicit scoped-VMEM limit (safe on v5e/v6e/v7x)


# ---------------------------------------------------------------------------
# Kernel 1: ConvTranspose2d(kernel=2, stride=2) + bias + 2x2 pixel shuffle.
#           One MXU GEMM per grid step against the hstacked kron matrix.
# ---------------------------------------------------------------------------
def _upconv_ps_kernel(x_ref, m_ref, b_ref, o_ref):
    # x_ref: (B, H, W*Cin)     lane-dense input rows (GEMM dtype)
    # m_ref: (W*Cin, 4*W*Co)   hstack over row-phase s of kron(I_W, Wt_s)
    # b_ref: (1, 4*W*Co)       bias tiled over (s, w, t)
    # o_ref: (B, H, 4*W*Co)    column order (s, w, t, co) -> free reshape to (N,2H,2W,Co)
    bb, h, k = x_ref.shape
    x = x_ref[...].reshape(bb * h, k).astype(m_ref.dtype)
    y = jnp.dot(x, m_ref[...], preferred_element_type=jnp.float32) + b_ref[...]
    o_ref[...] = y.reshape(bb, h, -1).astype(o_ref.dtype)


# ---------------------------------------------------------------------------
# Kernel 2: 3x3 'same' conv as three sublane-aligned banded GEMMs combined with
#           XLU rolls + boundary masks, optional fused input BN+ReLU, and BN
#           partial statistics (lane-dense column sums) in the epilogue.
# ---------------------------------------------------------------------------
def _conv3x3_stats_kernel(x_ref, rhs_ref, b_ref, *rest, fuse_in_norm_relu):
    if fuse_in_norm_relu:
        scale_ref, shift_ref, h_ref, sum_ref, sq_ref = rest
    else:
        h_ref, sum_ref, sq_ref = rest

    bb, hc, kdim = x_ref.shape
    ldim = rhs_ref.shape[2]
    m = bb * hc

    x = x_ref[...].reshape(m, kdim)
    if fuse_in_norm_relu:                     # BN1-apply + ReLU fused into conv2's input
        x = jnp.maximum(x.astype(jnp.float32) * scale_ref[...] + shift_ref[...], 0.0)
    xg = x.astype(rhs_ref.dtype)              # MXU operand dtype (bf16 by default)

    a0 = jnp.dot(xg, rhs_ref[0], preferred_element_type=jnp.float32)
    a1 = jnp.dot(xg, rhs_ref[1], preferred_element_type=jnp.float32)
    a2 = jnp.dot(xg, rhs_ref[2], preferred_element_type=jnp.float32)

    # 'same' H padding: y[h] = a0[h-1] + a1[h] + a2[h+1] with zero rows at each image
    # boundary.  Rolls use the otherwise-idle XLU; the masks keep per-image boundaries
    # correct even with several images packed along the sublane axis.
    hrow = jax.lax.broadcasted_iota(jnp.int32, (m, ldim), 0) % hc
    acc = a1 + b_ref[...]
    acc = acc + jnp.where(hrow == 0, 0.0, pltpu.roll(a0, shift=1, axis=0))
    acc = acc + jnp.where(hrow == hc - 1, 0.0, pltpu.roll(a2, shift=m - 1, axis=0))

    h_ref[...] = acc.reshape(bb, hc, ldim).astype(h_ref.dtype)

    # BatchNorm partial statistics straight from the resident f32 accumulator; outputs
    # stay lane-dense (1, W*Cout) -- the tiny (w -> cout) fold happens outside.
    sum_ref[0] = jnp.sum(acc, axis=0, keepdims=True)
    sq_ref[0] = jnp.sum(acc * acc, axis=0, keepdims=True)


# ---------------------------------------------------------------------------
# Kernel 3: BN2-normalize + identity residual add + ReLU (fully lane-dense).
# ---------------------------------------------------------------------------
def _bn_add_relu_kernel(x_ref, r_ref, scale_ref, shift_ref, o_ref):
    bb, h, wc = x_ref.shape
    x = x_ref[...].reshape(bb * h, wc)
    r = r_ref[...].reshape(bb * h, wc).astype(jnp.float32)
    y = jnp.maximum(x * scale_ref[...] + shift_ref[...] + r, 0.0)
    o_ref[...] = y.reshape(bb, h, wc)


# ---------------------------------------------------------------------------
# Host-side helpers
# ---------------------------------------------------------------------------
def _pick_batch_block(n, rows_per_image, target_rows=256):
    """Largest divisor of n whose packed GEMM M (= bb * rows_per_image) stays <= target."""
    bb = 1
    for cand in range(2, n + 1):
        if n % cand == 0 and cand * rows_per_image <= max(rows_per_image, target_rows):
            bb = cand
    return bb


def _check_tpu_alignment(row_dims, lane_dims):
    for name, v in row_dims:
        assert v % 8 == 0, f"{name}={v} must be a multiple of 8 (sublane tile); pad H"
    for name, v in lane_dims:
        assert v % 128 == 0, (f"{name}={v} must be a multiple of 128 (lane tile); "
                              "pad W or channels")


def _banded_conv3x3_mats(wk, w):
    """wk: (3, 3, Cin, Cout) -> (3, W*Cin, W*Cout) banded matrices; 'same' padding along
    W is folded in by the truncated shifted identities.  Init-time only."""
    mats = []
    for kh in range(3):
        m = jnp.zeros((w * wk.shape[2], w * wk.shape[3]), jnp.float32)
        for kw in range(3):
            sel = jnp.eye(w, w, k=1 - kw, dtype=jnp.float32)   # sel[w_out+kw-1, w_out]=1
            m = m + jnp.kron(sel, wk[kh, kw].astype(jnp.float32))
        mats.append(m)
    return jnp.stack(mats)


def prepare_unet_up_block(params, hi, wi, gemm_dtype=GEMM_DTYPE):
    """One-time (init) restructuring of the module weights into MXU-friendly GEMM
    operands -- hoisted out of the per-call jitted forward."""
    wo = 2 * wi
    up_w = jnp.asarray(params["up_w"], jnp.float32)      # (Cin, Co, 2, 2) PyTorch layout
    up_b = jnp.asarray(params["up_b"], jnp.float32)
    cin, co = up_w.shape[0], up_w.shape[1]
    wt = jnp.transpose(up_w, (2, 0, 3, 1)).reshape(2, cin, 2 * co)   # (s, ci, t*Co+co)
    eye_w = jnp.eye(wi, dtype=jnp.float32)
    upmat = jnp.concatenate(
        [jnp.kron(eye_w, wt[0]), jnp.kron(eye_w, wt[1])], axis=1)    # (W*Cin, 4*W*Co)
    w1 = jnp.asarray(params["w1"], jnp.float32)          # (3, 3, Cin1, C1)
    w2 = jnp.asarray(params["w2"], jnp.float32)
    c1, c2 = w1.shape[3], w2.shape[3]
    return {
        "upmat": upmat.astype(gemm_dtype),
        "up_bias": jnp.tile(up_b, 4 * wi).reshape(1, 4 * wi * co),
        "rhs1": _banded_conv3x3_mats(w1, wo).astype(gemm_dtype),
        "b1_t": jnp.tile(jnp.asarray(params["b1"], jnp.float32), wo).reshape(1, wo * c1),
        "rhs2": _banded_conv3x3_mats(w2, wo).astype(gemm_dtype),
        "b2_t": jnp.tile(jnp.asarray(params["b2"], jnp.float32), wo).reshape(1, wo * c2),
        "g1": jnp.asarray(params["g1"], jnp.float32),
        "be1": jnp.asarray(params["be1"], jnp.float32),
        "g2": jnp.asarray(params["g2"], jnp.float32),
        "be2": jnp.asarray(params["be2"], jnp.float32),
    }


def _bn_scale_shift(ssum, ssq, gamma, beta, count, wo, cout):
    total = jnp.sum(ssum.reshape(-1, wo, cout), axis=(0, 1))
    total_sq = jnp.sum(ssq.reshape(-1, wo, cout), axis=(0, 1))
    mean = total / count
    # Clamp guards the E[x^2]-mean^2 cancellation.
    # TODO(synk): shifted / Welford accumulation if |mean| >> std at production scale.
    var = jnp.maximum(total_sq / count - mean * mean, 0.0)
    scale = gamma * jax.lax.rsqrt(var + BN_EPS)
    shift = beta - mean * scale
    return scale, shift


def _conv3x3_bn_stats(x_rows, rhs, bias_t, *, scale_t=None, shift_t=None,
                      out_dtype=jnp.float32):
    n, hc, kdim = x_rows.shape
    ldim = rhs.shape[-1]
    bb = _pick_batch_block(n, hc)
    g = n // bb
    fuse = scale_t is not None
    kern = functools.partial(_conv3x3_stats_kernel, fuse_in_norm_relu=fuse)

    in_specs = [pl.BlockSpec((bb, hc, kdim), lambda i: (i, 0, 0)),
                pl.BlockSpec((3, kdim, ldim), lambda i: (0, 0, 0)),
                pl.BlockSpec((1, ldim), lambda i: (0, 0))]
    args = [x_rows, rhs, bias_t]
    if fuse:
        in_specs += [pl.BlockSpec((1, kdim), lambda i: (0, 0)),
                     pl.BlockSpec((1, kdim), lambda i: (0, 0))]
        args += [scale_t, shift_t]

    cost = pl.CostEstimate(
        flops=2 * 3 * n * hc * kdim * ldim,
        transcendentals=0,
        bytes_accessed=(x_rows.dtype.itemsize * n * hc * kdim
                        + rhs.dtype.itemsize * 3 * kdim * ldim
                        + jnp.dtype(out_dtype).itemsize * n * hc * ldim
                        + 4 * (ldim + 2 * g * ldim)))

    return pl.pallas_call(
        kern,
        out_shape=(jax.ShapeDtypeStruct((n, hc, ldim), out_dtype),
                   jax.ShapeDtypeStruct((g, 1, ldim), jnp.float32),
                   jax.ShapeDtypeStruct((g, 1, ldim), jnp.float32)),
        grid=(g,),
        in_specs=in_specs,
        out_specs=(pl.BlockSpec((bb, hc, ldim), lambda i: (i, 0, 0)),
                   pl.BlockSpec((1, 1, ldim), lambda i: (i, 0, 0)),
                   pl.BlockSpec((1, 1, ldim), lambda i: (i, 0, 0))),
        compiler_params=pltpu.CompilerParams(
            dimension_semantics=("parallel",), vmem_limit_bytes=_VMEM_LIMIT_BYTES),
        cost_estimate=cost,
    )(*args)


# ---------------------------------------------------------------------------
# Full UNetUpBlock forward (NCHW in / NCHW out, like the PyTorch module)
# ---------------------------------------------------------------------------
def unet_up_block_forward(x_nchw, bridge_nchw, prep):
    n, cin, hi, wi = x_nchw.shape
    ho, wo = 2 * hi, 2 * wi
    cb = bridge_nchw.shape[1]

    upmat, up_bias = prep["upmat"], prep["up_bias"]
    rhs1, b1_t = prep["rhs1"], prep["b1_t"]
    rhs2, b2_t = prep["rhs2"], prep["b2_t"]
    gemm_dtype = upmat.dtype

    twol = upmat.shape[1]                    # 4 * wi * co
    co = twol // (4 * wi)
    cin1 = rhs1.shape[1] // wo
    c1 = rhs1.shape[2] // wo
    c2 = rhs2.shape[2] // wo
    assert upmat.shape[0] == wi * cin, "prepared weights do not match the input shape"
    assert cin1 == co + cb, "conv1 in_channels must equal upconv out_channels + bridge"
    assert c2 == cin1, "identity residual requires out_channels == concat channels"
    _check_tpu_alignment(
        row_dims=[("H", hi), ("2H", ho)],
        lane_dims=[("W*Cin", wi * cin), ("4*W*Co", twol), ("2W*Cin1", wo * cin1),
                   ("2W*C1", wo * c1), ("2W*C2", wo * c2)])

    # NCHW -> lane-dense rows (N, H, W*Cin); the GEMM-dtype cast fuses into the transpose.
    x_rows = jnp.transpose(x_nchw, (0, 2, 3, 1)).reshape(n, hi, wi * cin).astype(gemm_dtype)

    # --- self.up : ConvTranspose2d(in, out, 2, 2) + bias + pixel shuffle (one GEMM) ---
    bb_u = _pick_batch_block(n, hi)
    cost_up = pl.CostEstimate(
        flops=2 * n * hi * (wi * cin) * twol,
        transcendentals=0,
        bytes_accessed=(x_rows.dtype.itemsize
                        * (n * hi * wi * cin + wi * cin * twol + n * hi * twol)
                        + 4 * twol))
    up_rows = pl.pallas_call(
        _upconv_ps_kernel,
        out_shape=jax.ShapeDtypeStruct((n, hi, twol), gemm_dtype),
        grid=(n // bb_u,),
        in_specs=[pl.BlockSpec((bb_u, hi, wi * cin), lambda i: (i, 0, 0)),
                  pl.BlockSpec((wi * cin, twol), lambda i: (0, 0)),
                  pl.BlockSpec((1, twol), lambda i: (0, 0))],
        out_specs=pl.BlockSpec((bb_u, hi, twol), lambda i: (i, 0, 0)),
        compiler_params=pltpu.CompilerParams(
            dimension_semantics=("parallel",), vmem_limit_bytes=_VMEM_LIMIT_BYTES),
        cost_estimate=cost_up,
    )(x_rows, upmat, up_bias)

    # --- center_crop(bridge, up spatial) + channel concat ------------------------------
    if cb == 0:
        # 0-channel bridge: concat is a no-op; (N,H,(s,w,t,co)) == (N,2H,2W*Co) rows.
        xcat_rows = up_rows.reshape(n, ho, wo * cin1)
    else:
        up = up_rows.astype(jnp.float32).reshape(n, hi, 2, wi, 2, co).reshape(n, ho, wo, co)
        bridge = jnp.transpose(bridge_nchw, (0, 2, 3, 1)).astype(jnp.float32)
        dy = (bridge.shape[1] - ho) // 2
        dx = (bridge.shape[2] - wo) // 2
        xcat = jnp.concatenate([up, bridge[:, dy:dy + ho, dx:dx + wo, :]], axis=-1)
        xcat_rows = xcat.reshape(n, ho, wo * cin1).astype(gemm_dtype)

    # --- UNetResBlock: conv1 -> BN1 -> ReLU -> conv2 -> BN2 ; + Identity ; ReLU --------
    cnt = n * ho * wo
    h1_rows, s1, q1 = _conv3x3_bn_stats(xcat_rows, rhs1, b1_t, out_dtype=gemm_dtype)
    scale1, shift1 = _bn_scale_shift(s1, q1, prep["g1"], prep["be1"], cnt, wo, c1)

    h2_rows, s2, q2 = _conv3x3_bn_stats(
        h1_rows, rhs2, b2_t,
        scale_t=jnp.tile(scale1, wo).reshape(1, wo * c1),
        shift_t=jnp.tile(shift1, wo).reshape(1, wo * c1),
        out_dtype=jnp.float32)
    scale2, shift2 = _bn_scale_shift(s2, q2, prep["g2"], prep["be2"], cnt, wo, c2)

    # center_crop(residual, h2 spatial) is the identity here (padding=1 convs).
    bb_f = _pick_batch_block(n, ho)
    out_rows = pl.pallas_call(
        _bn_add_relu_kernel,
        out_shape=jax.ShapeDtypeStruct((n, ho, wo * c2), jnp.float32),
        grid=(n // bb_f,),
        in_specs=[pl.BlockSpec((bb_f, ho, wo * c2), lambda i: (i, 0, 0)),
                  pl.BlockSpec((bb_f, ho, wo * cin1), lambda i: (i, 0, 0)),
                  pl.BlockSpec((1, wo * c2), lambda i: (0, 0)),
                  pl.BlockSpec((1, wo * c2), lambda i: (0, 0))],
        out_specs=pl.BlockSpec((bb_f, ho, wo * c2), lambda i: (i, 0, 0)),
        compiler_params=pltpu.CompilerParams(
            dimension_semantics=("parallel",), vmem_limit_bytes=_VMEM_LIMIT_BYTES),
    )(h2_rows, xcat_rows,
      jnp.tile(scale2, wo).reshape(1, wo * c2),
      jnp.tile(shift2, wo).reshape(1, wo * c2))

    out = out_rows.reshape(n, ho, wo, c2)
    return jnp.transpose(out, (0, 3, 1, 2))              # back to NCHW
    # TODO(synk): the debug `print(x.shape, residual.shape)` inside UNetResBlock.forward
    # is a host-side side effect and is intentionally omitted, as is the BN running-stat
    # buffer update (training-mode batch statistics only).


# ---------------------------------------------------------------------------
# Pure-JAX f32 reference (sanity check for the Pallas path)
# ---------------------------------------------------------------------------
def reference_forward(x_nchw, bridge_nchw, params):
    hp = jax.lax.Precision.HIGHEST
    x = jnp.transpose(x_nchw, (0, 2, 3, 1)).astype(jnp.float32)
    n, h, w, ci = x.shape
    wt, bt = params["up_w"], params["up_b"]
    co = wt.shape[1]
    up = jnp.einsum("nhwi,iokl->nhkwlo", x, wt, precision=hp).reshape(n, 2 * h, 2 * w, co) + bt
    bridge = jnp.transpose(bridge_nchw, (0, 2, 3, 1)).astype(jnp.float32)
    dy = (bridge.shape[1] - 2 * h) // 2
    dx = (bridge.shape[2] - 2 * w) // 2
    xcat = jnp.concatenate([up, bridge[:, dy:dy + 2 * h, dx:dx + 2 * w, :]], axis=-1)

    def conv(xin, wk, bk):
        nn_, hh, ww, _ = xin.shape
        xp = jnp.pad(xin, ((0, 0), (1, 1), (1, 1), (0, 0)))
        out = jnp.zeros((nn_, hh, ww, wk.shape[-1]), jnp.float32) + bk
        for kh in range(3):
            for kw in range(3):
                out = out + jnp.einsum("nhwi,io->nhwo",
                                       xp[:, kh:kh + hh, kw:kw + ww, :], wk[kh, kw],
                                       precision=hp)
        return out

    def bn(xin, g, be):
        m = jnp.mean(xin, axis=(0, 1, 2))
        v = jnp.mean((xin - m) ** 2, axis=(0, 1, 2))
        return (xin - m) * jax.lax.rsqrt(v + BN_EPS) * g + be

    res = xcat
    a1 = jnp.maximum(bn(conv(xcat, params["w1"], params["b1"]), params["g1"], params["be1"]), 0.0)
    h2 = bn(conv(a1, params["w2"], params["b2"]), params["g2"], params["be2"])
    out = jnp.maximum(h2 + res, 0.0)
    return jnp.transpose(out, (0, 3, 1, 2))


if __name__ == "__main__":
    key = jax.random.PRNGKey(0)
    C = 8                      # in_channels == out_channels (see shape note at top)
    N, H, W = 2, 16, 16
    ks = jax.random.split(key, 12)

    params = {
        "up_w": 0.1 * jax.random.normal(ks[0], (C, C, 2, 2), jnp.float32),   # ConvTranspose2d
        "up_b": 0.1 * jax.random.normal(ks[1], (C,), jnp.float32),
        "w1":   0.1 * jax.random.normal(ks[2], (3, 3, C, C), jnp.float32),   # (kh, kw, cin, cout)
        "b1":   0.1 * jax.random.normal(ks[3], (C,), jnp.float32),
        "g1":   1.0 + 0.1 * jax.random.normal(ks[4], (C,), jnp.float32),
        "be1":  0.1 * jax.random.normal(ks[5], (C,), jnp.float32),
        "w2":   0.1 * jax.random.normal(ks[6], (3, 3, C, C), jnp.float32),
        "b2":   0.1 * jax.random.normal(ks[7], (C,), jnp.float32),
        "g2":   1.0 + 0.1 * jax.random.normal(ks[8], (C,), jnp.float32),
        "be2":  0.1 * jax.random.normal(ks[9], (C,), jnp.float32),
    }

    x = jax.random.normal(ks[10], (N, C, H, W), jnp.float32)            # NCHW, like PyTorch
    bridge = jax.random.normal(ks[11], (N, 0, 36, 36), jnp.float32)     # 0-channel skip

    prep = prepare_unet_up_block(params, H, W)     # one-time init-time weight restructuring
    fwd = jax.jit(unet_up_block_forward)
    out = jax.block_until_ready(fwd(x, bridge, prep))

    ref = reference_forward(x, bridge, params)
    err = float(jnp.max(jnp.abs(out - ref)))
    assert out.shape == (N, C, 2 * H, 2 * W), out.shape
    # bf16 MXU operands through two convs + two batch-norm normalizations typically give
    # a few 1e-2 max-abs error vs the f32 reference; f32 operands reproduce it to <1e-2.
    tol = 1e-2 if jnp.dtype(GEMM_DTYPE) == jnp.dtype(jnp.float32) else 1e-1
    assert err < tol, f"max abs error {err}"
    print("KERNEL_OK")
</pallas_src>

<mosaic_0001>
module attributes {stable_mosaic.version = 11 : i64} {
  func.func @_upconv_ps_kernel(%arg0: i32, %arg1: memref<2x16x128xbf16, #tpu.memory_space<vmem>>, %arg2: memref<128x512xbf16, #tpu.memory_space<vmem>>, %arg3: memref<1x512xf32, #tpu.memory_space<vmem>>, %arg4: memref<2x16x512xbf16, #tpu.memory_space<vmem>>) attributes {dimension_semantics = [#tpu.dimension_semantics<parallel>], iteration_bounds = array<i64: 1>, scalar_prefetch = 0 : i64, scratch_operands = 0 : i64, tpu.core_type = #tpu.core_type<tc>, window_params = [{transform_indices = @transform_0, window_bounds = array<i64: 2, 16, 128>}, {pipeline_mode = #tpu.pipeline_mode<synchronous>, transform_indices = @transform_1, window_bounds = array<i64: 128, 512>}, {pipeline_mode = #tpu.pipeline_mode<synchronous>, transform_indices = @transform_2, window_bounds = array<i64: 1, 512>}, {transform_indices = @transform_3, window_bounds = array<i64: 2, 16, 512>}]} {
    %c0 = arith.constant 0 : index
    %c0_0 = arith.constant 0 : index
    %c0_1 = arith.constant 0 : index
    %0 = vector.load %arg1[%c0, %c0_0, %c0_1] : memref<2x16x128xbf16, #tpu.memory_space<vmem>>, vector<2x16x128xbf16>
    %1 = vector.shape_cast %0 : vector<2x16x128xbf16> to vector<32x128xbf16>
    %c0_2 = arith.constant 0 : index
    %c0_3 = arith.constant 0 : index
    %2 = vector.load %arg2[%c0_2, %c0_3] : memref<128x512xbf16, #tpu.memory_space<vmem>>, vector<128x512xbf16>
    %cst = arith.constant dense<0.000000e+00> : vector<32x512xf32>
    %3 = tpu.matmul %1, %2, %cst {dimension_numbers = #tpu.dot_dimension_numbers<[1], [0], [0], [1], [0, 0, 1, 1], [], []>} : vector<32x128xbf16>, vector<128x512xbf16>, vector<32x512xf32> -> vector<32x512xf32>
    %c0_4 = arith.constant 0 : index
    %c0_5 = arith.constant 0 : index
    %4 = vector.load %arg3[%c0_4, %c0_5] : memref<1x512xf32, #tpu.memory_space<vmem>>, vector<1x512xf32>
    %5 = vector.broadcast %4 : vector<1x512xf32> to vector<32x512xf32>
    %6 = arith.addf %3, %5 : vector<32x512xf32>
    %7 = vector.shape_cast %6 : vector<32x512xf32> to vector<2x16x512xf32>
    %8 = arith.truncf %7 : vector<2x16x512xf32> to vector<2x16x512xbf16>
    %c0_6 = arith.constant 0 : index
    %c0_7 = arith.constant 0 : index
    %c0_8 = arith.constant 0 : index
    %9 = vector.load %arg4[%c0_6, %c0_7, %c0_8] : memref<2x16x512xbf16, #tpu.memory_space<vmem>>, vector<2x16x512xbf16>
    tpu.vector_store %arg4[%c0_6, %c0_7, %c0_8], %8 {strides = array<i32>} : memref<2x16x512xbf16, #tpu.memory_space<vmem>>, vector<2x16x512xbf16>,
    return
  }
  func.func @transform_0(%arg0: i32) -> (i32, i32, i32) {
    %c0_i32 = arith.constant 0 : i32
    %c0_i32_0 = arith.constant 0 : i32
    %c0_i32_1 = arith.constant 0 : i32
    return %arg0, %c0_i32, %c0_i32_0 : i32, i32, i32
  }
  func.func @transform_1(%arg0: i32) -> (i32, i32) {
    %c0_i32 = arith.constant 0 : i32
    %c0_i32_0 = arith.constant 0 : i32
    %c0_i32_1 = arith.constant 0 : i32
    return %c0_i32, %c0_i32_0 : i32, i32
  }
  func.func @transform_2(%arg0: i32) -> (i32, i32) {
    %c0_i32 = arith.constant 0 : i32
    %c0_i32_0 = arith.constant 0 : i32
    %c0_i32_1 = arith.constant 0 : i32
    return %c0_i32, %c0_i32_0 : i32, i32
  }
  func.func @transform_3(%arg0: i32) -> (i32, i32, i32) {
    %c0_i32 = arith.constant 0 : i32
    %c0_i32_0 = arith.constant 0 : i32
    %c0_i32_1 = arith.constant 0 : i32
    return %arg0, %c0_i32, %c0_i32_0 : i32, i32, i32
  }
}

module attributes {stable_mosaic.version = 11 : i64} {
  func.func @_conv3x3_stats_kernel(%arg0: i32, %arg1: memref<2x32x256xbf16, #tpu.memory_space<vmem>>, %arg2: memref<3x256x256xbf16, #tpu.memory_space<vmem>>, %arg3: memref<1x256xf32, #tpu.memory_space<vmem>>, %arg4: memref<2x32x256xbf16, #tpu.memory_space<vmem>>, %arg5: memref<1x1x256xf32, #tpu.memory_space<vmem>>, %arg6: memref<1x1x256xf32, #tpu.memory_space<vmem>>) attributes {dimension_semantics = [#tpu.dimension_semantics<parallel>], iteration_bounds = array<i64: 1>, scalar_prefetch = 0 : i64, scratch_operands = 0 : i64, tpu.core_type = #tpu.core_type<tc>, window_params = [{transform_indices = @transform_0, window_bounds = array<i64: 2, 32, 256>}, {pipeline_mode = #tpu.pipeline_mode<synchronous>, transform_indices = @transform_1, window_bounds = array<i64: 3, 256, 256>}, {pipeline_mode = #tpu.pipeline_mode<synchronous>, transform_indices = @transform_2, window_bounds = array<i64: 1, 256>}, {transform_indices = @transform_3, window_bounds = array<i64: 2, 32, 256>}, {transform_indices = @transform_4, window_bounds = array<i64: 1, 1, 256>}, {transform_indices = @transform_5, window_bounds = array<i64: 1, 1, 256>}]} {
    %c0 = arith.constant 0 : index
    %c0_0 = arith.constant 0 : index
    %c0_1 = arith.constant 0 : index
    %0 = vector.load %arg1[%c0, %c0_0, %c0_1] : memref<2x32x256xbf16, #tpu.memory_space<vmem>>, vector<2x32x256xbf16>
    %1 = vector.shape_cast %0 : vector<2x32x256xbf16> to vector<64x256xbf16>
    %c0_2 = arith.constant 0 : index
    %c0_3 = arith.constant 0 : index
    %c0_4 = arith.constant 0 : index
    %2 = vector.load %arg2[%c0_2, %c0_3, %c0_4] : memref<3x256x256xbf16, #tpu.memory_space<vmem>>, vector<1x256x256xbf16>
    %3 = vector.shape_cast %2 : vector<1x256x256xbf16> to vector<256x256xbf16>
    %cst = arith.constant dense<0.000000e+00> : vector<64x256xf32>
    %4 = tpu.matmul %1, %3, %cst {dimension_numbers = #tpu.dot_dimension_numbers<[1], [0], [0], [1], [0, 0, 1, 1], [], []>} : vector<64x256xbf16>, vector<256x256xbf16>, vector<64x256xf32> -> vector<64x256xf32>
    %c1 = arith.constant 1 : index
    %c0_5 = arith.constant 0 : index
    %c0_6 = arith.constant 0 : index
    %5 = vector.load %arg2[%c1, %c0_5, %c0_6] : memref<3x256x256xbf16, #tpu.memory_space<vmem>>, vector<1x256x256xbf16>
    %6 = vector.shape_cast %5 : vector<1x256x256xbf16> to vector<256x256xbf16>
    %cst_7 = arith.constant dense<0.000000e+00> : vector<64x256xf32>
    %7 = tpu.matmul %1, %6, %cst_7 {dimension_numbers = #tpu.dot_dimension_numbers<[1], [0], [0], [1], [0, 0, 1, 1], [], []>} : vector<64x256xbf16>, vector<256x256xbf16>, vector<64x256xf32> -> vector<64x256xf32>
    %c2 = arith.constant 2 : index
    %c0_8 = arith.constant 0 : index
    %c0_9 = arith.constant 0 : index
    %8 = vector.load %arg2[%c2, %c0_8, %c0_9] : memref<3x256x256xbf16, #tpu.memory_space<vmem>>, vector<1x256x256xbf16>
    %9 = vector.shape_cast %8 : vector<1x256x256xbf16> to vector<256x256xbf16>
    %cst_10 = arith.constant dense<0.000000e+00> : vector<64x256xf32>
    %10 = tpu.matmul %1, %9, %cst_10 {dimension_numbers = #tpu.dot_dimension_numbers<[1], [0], [0], [1], [0, 0, 1, 1], [], []>} : vector<64x256xbf16>, vector<256x256xbf16>, vector<64x256xf32> -> vector<64x256xf32>
    %11 = tpu.iota {dimensions = array<i32: 0>} : vector<64x256xi32>
    %c32_i32 = arith.constant 32 : i32
    %c0_i32 = arith.constant 0 : i32
    %12 = arith.cmpi eq, %c32_i32, %c0_i32 : i32
    %c1_i32 = arith.constant 1 : i32
    %13 = arith.select %12, %c1_i32, %c32_i32 : i32
    %14 = vector.broadcast %13 : i32 to vector<64x256xi32>
    %15 = arith.remsi %11, %14 : vector<64x256xi32>
    %c0_i32_11 = arith.constant 0 : i32
    %16 = vector.broadcast %c0_i32_11 : i32 to vector<64x256xi32>
    %17 = arith.cmpi ne, %15, %16 : vector<64x256xi32>
    %c0_i32_12 = arith.constant 0 : i32
    %18 = vector.broadcast %c0_i32_12 : i32 to vector<64x256xi32>
    %19 = arith.cmpi slt, %15, %18 : vector<64x256xi32>
    %c0_i32_13 = arith.constant 0 : i32
    %20 = arith.cmpi slt, %13, %c0_i32_13 : i32
    %21 = vector.broadcast %20 : i1 to vector<64x256xi1>
    %22 = vector.broadcast %21 : vector<64x256xi1> to vector<64x256xi1>
    %23 = arith.xori %19, %22 : vector<64x256xi1>
    %24 = arith.andi %23, %17 : vector<64x256xi1>
    %25 = vector.broadcast %13 : i32 to vector<64x256xi32>
    %26 = arith.addi %15, %25 : vector<64x256xi32>
    %27 = arith.select %24, %26, %15 : vector<64x256xi1>, vector<64x256xi32>
    %c0_14 = arith.constant 0 : index
    %c0_15 = arith.constant 0 : index
    %28 = vector.load %arg3[%c0_14, %c0_15] : memref<1x256xf32, #tpu.memory_space<vmem>>, vector<1x256xf32>
    %29 = vector.broadcast %28 : vector<1x256xf32> to vector<64x256xf32>
    %30 = arith.addf %7, %29 : vector<64x256xf32>
    %c0_i32_16 = arith.constant 0 : i32
    %31 = vector.broadcast %c0_i32_16 : i32 to vector<64x256xi32>
    %32 = arith.cmpi eq, %27, %31 : vector<64x256xi32>
    %c1_i32_17 = arith.constant 1 : i32
    %33 = tpu.dynamic_rotate %4 by %c1_i32_17 dim 0 : vector<64x256xf32>, i32 -> vector<64x256xf32>
    %cst_18 = arith.constant 0.000000e+00 : f32
    %34 = vector.broadcast %cst_18 : f32 to vector<64x256xf32>
    %35 = arith.select %32, %34, %33 : vector<64x256xi1>, vector<64x256xf32>
    %36 = arith.addf %30, %35 : vector<64x256xf32>
    %c31_i32 = arith.constant 31 : i32
    %37 = vector.broadcast %c31_i32 : i32 to vector<64x256xi32>
    %38 = arith.cmpi eq, %27, %37 : vector<64x256xi32>
    %c63_i32 = arith.constant 63 : i32
    %39 = tpu.dynamic_rotate %10 by %c63_i32 dim 0 : vector<64x256xf32>, i32 -> vector<64x256xf32>
    %cst_19 = arith.constant 0.000000e+00 : f32
    %40 = vector.broadcast %cst_19 : f32 to vector<64x256xf32>
    %41 = arith.select %38, %40, %39 : vector<64x256xi1>, vector<64x256xf32>
    %42 = arith.addf %36, %41 : vector<64x256xf32>
    %43 = vector.shape_cast %42 : vector<64x256xf32> to vector<2x32x256xf32>
    %44 = arith.truncf %43 : vector<2x32x256xf32> to vector<2x32x256xbf16>
    %c0_20 = arith.constant 0 : index
    %c0_21 = arith.constant 0 : index
    %c0_22 = arith.constant 0 : index
    %45 = vector.load %arg4[%c0_20, %c0_21, %c0_22] : memref<2x32x256xbf16, #tpu.memory_space<vmem>>, vector<2x32x256xbf16>
    tpu.vector_store %arg4[%c0_20, %c0_21, %c0_22], %44 {strides = array<i32>} : memref<2x32x256xbf16, #tpu.memory_space<vmem>>, vector<2x32x256xbf16>,
    %cst_23 = arith.constant dense<0.000000e+00> : vector<256xf32>
    %46 = vector.multi_reduction <add>, %42, %cst_23 [0] : vector<64x256xf32> to vector<256xf32>
    %47 = vector.shape_cast %46 : vector<256xf32> to vector<1x256xf32>
    %c0_24 = arith.constant 0 : index
    %c0_25 = arith.constant 0 : index
    %c0_26 = arith.constant 0 : index
    %48 = vector.load %arg5[%c0_24, %c0_25, %c0_26] : memref<1x1x256xf32, #tpu.memory_space<vmem>>, vector<1x1x256xf32>
    %49 = vector.shape_cast %48 : vector<1x1x256xf32> to vector<1x256xf32>
    %50 = vector.shape_cast %47 : vector<1x256xf32> to vector<1x1x256xf32>
    tpu.vector_store %arg5[%c0_24, %c0_25, %c0_26], %50 {strides = array<i32>} : memref<1x1x256xf32, #tpu.memory_space<vmem>>, vector<1x1x256xf32>,
    %51 = arith.mulf %42, %42 : vector<64x256xf32>
    %cst_27 = arith.constant dense<0.000000e+00> : vector<256xf32>
    %52 = vector.multi_reduction <add>, %51, %cst_27 [0] : vector<64x256xf32> to vector<256xf32>
    %53 = vector.shape_cast %52 : vector<256xf32> to vector<1x256xf32>
    %c0_28 = arith.constant 0 : index
    %c0_29 = arith.constant 0 : index
    %c0_30 = arith.constant 0 : index
    %54 = vector.load %arg6[%c0_28, %c0_29, %c0_30] : memref<1x1x256xf32, #tpu.memory_space<vmem>>, vector<1x1x256xf32>
    %55 = vector.shape_cast %54 : vector<1x1x256xf32> to vector<1x256xf32>
    %56 = vector.shape_cast %53 : vector<1x256xf32> to vector<1x1x256xf32>
    tpu.vector_store %arg6[%c0_28, %c0_29, %c0_30], %56 {strides = array<i32>} : memref<1x1x256xf32, #tpu.memory_space<vmem>>, vector<1x1x256xf32>,
    return
  }
  func.func @transform_0(%arg0: i32) -> (i32, i32, i32) {
    %c0_i32 = arith.constant 0 : i32
    %c0_i32_0 = arith.constant 0 : i32
    %c0_i32_1 = arith.constant 0 : i32
    return %arg0, %c0_i32, %c0_i32_0 : i32, i32, i32
  }
  func.func @transform_1(%arg0: i32) -> (i32, i32, i32) {
    %c0_i32 = arith.constant 0 : i32
    %c0_i32_0 = arith.constant 0 : i32
    %c0_i32_1 = arith.constant 0 : i32
    %c0_i32_2 = arith.constant 0 : i32
    return %c0_i32, %c0_i32_0, %c0_i32_1 : i32, i32, i32
  }
  func.func @transform_2(%arg0: i32) -> (i32, i32) {
    %c0_i32 = arith.constant 0 : i32
    %c0_i32_0 = arith.constant 0 : i32
    %c0_i32_1 = arith.constant 0 : i32
    return %c0_i32, %c0_i32_0 : i32, i32
  }
  func.func @transform_3(%arg0: i32) -> (i32, i32, i32) {
    %c0_i32 = arith.constant 0 : i32
    %c0_i32_0 = arith.constant 0 : i32
    %c0_i32_1 = arith.constant 0 : i32
    return %arg0, %c0_i32, %c0_i32_0 : i32, i32, i32
  }
  func.func @transform_4(%arg0: i32) -> (i32, i32, i32) {
    %c0_i32 = arith.constant 0 : i32
    %c0_i32_0 = arith.constant 0 : i32
    %c0_i32_1 = arith.constant 0 : i32
    return %arg0, %c0_i32, %c0_i32_0 : i32, i32, i32
  }
  func.func @transform_5(%arg0: i32) -> (i32, i32, i32) {
    %c0_i32 = arith.constant 0 : i32
    %c0_i32_0 = arith.constant 0 : i32
    %c0_i32_1 = arith.constant 0 : i32
    return %arg0, %c0_i32, %c0_i32_0 : i32, i32, i32
  }
}

module attributes {stable_mosaic.version = 11 : i64} {
  func.func @_bn_add_relu_kernel(%arg0: i32, %arg1: memref<2x32x256xf32, #tpu.memory_space<vmem>>, %arg2: memref<2x32x256xbf16, #tpu.memory_space<vmem>>, %arg3: memref<1x256xf32, #tpu.memory_space<vmem>>, %arg4: memref<1x256xf32, #tpu.memory_space<vmem>>, %arg5: memref<2x32x256xf32, #tpu.memory_space<vmem>>) attributes {dimension_semantics = [#tpu.dimension_semantics<parallel>], iteration_bounds = array<i64: 1>, scalar_prefetch = 0 : i64, scratch_operands = 0 : i64, tpu.core_type = #tpu.core_type<tc>, window_params = [{transform_indices = @transform_0, window_bounds = array<i64: 2, 32, 256>}, {transform_indices = @transform_1, window_bounds = array<i64: 2, 32, 256>}, {pipeline_mode = #tpu.pipeline_mode<synchronous>, transform_indices = @transform_2, window_bounds = array<i64: 1, 256>}, {pipeline_mode = #tpu.pipeline_mode<synchronous>, transform_indices = @transform_3, window_bounds = array<i64: 1, 256>}, {transform_indices = @transform_4, window_bounds = array<i64: 2, 32, 256>}]} {
    %c0 = arith.constant 0 : index
    %c0_0 = arith.constant 0 : index
    %c0_1 = arith.constant 0 : index
    %0 = vector.load %arg1[%c0, %c0_0, %c0_1] : memref<2x32x256xf32, #tpu.memory_space<vmem>>, vector<2x32x256xf32>
    %1 = vector.shape_cast %0 : vector<2x32x256xf32> to vector<64x256xf32>
    %c0_2 = arith.constant 0 : index
    %c0_3 = arith.constant 0 : index
    %c0_4 = arith.constant 0 : index
    %2 = vector.load %arg2[%c0_2, %c0_3, %c0_4] : memref<2x32x256xbf16, #tpu.memory_space<vmem>>, vector<2x32x256xbf16>
    %3 = vector.shape_cast %2 : vector<2x32x256xbf16> to vector<64x256xbf16>
    %4 = arith.extf %3 : vector<64x256xbf16> to vector<64x256xf32>
    %c0_5 = arith.constant 0 : index
    %c0_6 = arith.constant 0 : index
    %5 = vector.load %arg3[%c0_5, %c0_6] : memref<1x256xf32, #tpu.memory_space<vmem>>, vector<1x256xf32>
    %6 = vector.broadcast %5 : vector<1x256xf32> to vector<64x256xf32>
    %7 = arith.mulf %1, %6 : vector<64x256xf32>
    %c0_7 = arith.constant 0 : index
    %c0_8 = arith.constant 0 : index
    %8 = vector.load %arg4[%c0_7, %c0_8] : memref<1x256xf32, #tpu.memory_space<vmem>>, vector<1x256xf32>
    %9 = vector.broadcast %8 : vector<1x256xf32> to vector<64x256xf32>
    %10 = arith.addf %7, %9 : vector<64x256xf32>
    %11 = arith.addf %10, %4 : vector<64x256xf32>
    %cst = arith.constant 0.000000e+00 : f32
    %12 = vector.broadcast %cst : f32 to vector<64x256xf32>
    %13 = arith.maximumf %11, %12 : vector<64x256xf32>
    %14 = vector.shape_cast %13 : vector<64x256xf32> to vector<2x32x256xf32>
    %c0_9 = arith.constant 0 : index
    %c0_10 = arith.constant 0 : index
    %c0_11 = arith.constant 0 : index
    %15 = vector.load %arg5[%c0_9, %c0_10, %c0_11] : memref<2x32x256xf32, #tpu.memory_space<vmem>>, vector<2x32x256xf32>
    tpu.vector_store %arg5[%c0_9, %c0_10, %c0_11], %14 {strides = array<i32>} : memref<2x32x256xf32, #tpu.memory_space<vmem>>, vector<2x32x256xf32>,
    return
  }
  func.func @transform_0(%arg0: i32) -> (i32, i32, i32) {
    %c0_i32 = arith.constant 0 : i32
    %c0_i32_0 = arith.constant 0 : i32
    %c0_i32_1 = arith.constant 0 : i32
    return %arg0, %c0_i32, %c0_i32_0 : i32, i32, i32
  }
  func.func @transform_1(%arg0: i32) -> (i32, i32, i32) {
    %c0_i32 = arith.constant 0 : i32
    %c0_i32_0 = arith.constant 0 : i32
    %c0_i32_1 = arith.constant 0 : i32
    return %arg0, %c0_i32, %c0_i32_0 : i32, i32, i32
  }
  func.func @transform_2(%arg0: i32) -> (i32, i32) {
    %c0_i32 = arith.constant 0 : i32
    %c0_i32_0 = arith.constant 0 : i32
    %c0_i32_1 = arith.constant 0 : i32
    return %c0_i32, %c0_i32_0 : i32, i32
  }
  func.func @transform_3(%arg0: i32) -> (i32, i32) {
    %c0_i32 = arith.constant 0 : i32
    %c0_i32_0 = arith.constant 0 : i32
    %c0_i32_1 = arith.constant 0 : i32
    return %c0_i32, %c0_i32_0 : i32, i32
  }
  func.func @transform_4(%arg0: i32) -> (i32, i32, i32) {
    %c0_i32 = arith.constant 0 : i32
    %c0_i32_0 = arith.constant 0 : i32
    %c0_i32_1 = arith.constant 0 : i32
    return %arg0, %c0_i32, %c0_i32_0 : i32, i32, i32
  }
}

module attributes {stable_mosaic.version = 11 : i64} {
  func.func @_conv3x3_stats_kernel(%arg0: i32, %arg1: memref<2x32x256xbf16, #tpu.memory_space<vmem>>, %arg2: memref<3x256x256xbf16, #tpu.memory_space<vmem>>, %arg3: memref<1x256xf32, #tpu.memory_space<vmem>>, %arg4: memref<1x256xf32, #tpu.memory_space<vmem>>, %arg5: memref<1x256xf32, #tpu.memory_space<vmem>>, %arg6: memref<2x32x256xf32, #tpu.memory_space<vmem>>, %arg7: memref<1x1x256xf32, #tpu.memory_space<vmem>>, %arg8: memref<1x1x256xf32, #tpu.memory_space<vmem>>) attributes {dimension_semantics = [#tpu.dimension_semantics<parallel>], iteration_bounds = array<i64: 1>, scalar_prefetch = 0 : i64, scratch_operands = 0 : i64, tpu.core_type = #tpu.core_type<tc>, window_params = [{transform_indices = @transform_0, window_bounds = array<i64: 2, 32, 256>}, {pipeline_mode = #tpu.pipeline_mode<synchronous>, transform_indices = @transform_1, window_bounds = array<i64: 3, 256, 256>}, {pipeline_mode = #tpu.pipeline_mode<synchronous>, transform_indices = @transform_2, window_bounds = array<i64: 1, 256>}, {pipeline_mode = #tpu.pipeline_mode<synchronous>, transform_indices = @transform_3, window_bounds = array<i64: 1, 256>}, {pipeline_mode = #tpu.pipeline_mode<synchronous>, transform_indices = @transform_4, window_bounds = array<i64: 1, 256>}, {transform_indices = @transform_5, window_bounds = array<i64: 2, 32, 256>}, {transform_indices = @transform_6, window_bounds = array<i64: 1, 1, 256>}, {transform_indices = @transform_7, window_bounds = array<i64: 1, 1, 256>}]} {
    %c0 = arith.constant 0 : index
    %c0_0 = arith.constant 0 : index
    %c0_1 = arith.constant 0 : index
    %0 = vector.load %arg1[%c0, %c0_0, %c0_1] : memref<2x32x256xbf16, #tpu.memory_space<vmem>>, vector<2x32x256xbf16>
    %1 = vector.shape_cast %0 : vector<2x32x256xbf16> to vector<64x256xbf16>
    %2 = arith.extf %1 : vector<64x256xbf16> to vector<64x256xf32>
    %c0_2 = arith.constant 0 : index
    %c0_3 = arith.constant 0 : index
    %3 = vector.load %arg4[%c0_2, %c0_3] : memref<1x256xf32, #tpu.memory_space<vmem>>, vector<1x256xf32>
    %4 = vector.broadcast %3 : vector<1x256xf32> to vector<64x256xf32>
    %5 = arith.mulf %2, %4 : vector<64x256xf32>
    %c0_4 = arith.constant 0 : index
    %c0_5 = arith.constant 0 : index
    %6 = vector.load %arg5[%c0_4, %c0_5] : memref<1x256xf32, #tpu.memory_space<vmem>>, vector<1x256xf32>
    %7 = vector.broadcast %6 : vector<1x256xf32> to vector<64x256xf32>
    %8 = arith.addf %5, %7 : vector<64x256xf32>
    %cst = arith.constant 0.000000e+00 : f32
    %9 = vector.broadcast %cst : f32 to vector<64x256xf32>
    %10 = arith.maximumf %8, %9 : vector<64x256xf32>
    %11 = arith.truncf %10 : vector<64x256xf32> to vector<64x256xbf16>
    %c0_6 = arith.constant 0 : index
    %c0_7 = arith.constant 0 : index
    %c0_8 = arith.constant 0 : index
    %12 = vector.load %arg2[%c0_6, %c0_7, %c0_8] : memref<3x256x256xbf16, #tpu.memory_space<vmem>>, vector<1x256x256xbf16>
    %13 = vector.shape_cast %12 : vector<1x256x256xbf16> to vector<256x256xbf16>
    %cst_9 = arith.constant dense<0.000000e+00> : vector<64x256xf32>
    %14 = tpu.matmul %11, %13, %cst_9 {dimension_numbers = #tpu.dot_dimension_numbers<[1], [0], [0], [1], [0, 0, 1, 1], [], []>} : vector<64x256xbf16>, vector<256x256xbf16>, vector<64x256xf32> -> vector<64x256xf32>
    %c1 = arith.constant 1 : index
    %c0_10 = arith.constant 0 : index
    %c0_11 = arith.constant 0 : index
    %15 = vector.load %arg2[%c1, %c0_10, %c0_11] : memref<3x256x256xbf16, #tpu.memory_space<vmem>>, vector<1x256x256xbf16>
    %16 = vector.shape_cast %15 : vector<1x256x256xbf16> to vector<256x256xbf16>
    %cst_12 = arith.constant dense<0.000000e+00> : vector<64x256xf32>
    %17 = tpu.matmul %11, %16, %cst_12 {dimension_numbers = #tpu.dot_dimension_numbers<[1], [0], [0], [1], [0, 0, 1, 1], [], []>} : vector<64x256xbf16>, vector<256x256xbf16>, vector<64x256xf32> -> vector<64x256xf32>
    %c2 = arith.constant 2 : index
    %c0_13 = arith.constant 0 : index
    %c0_14 = arith.constant 0 : index
    %18 = vector.load %arg2[%c2, %c0_13, %c0_14] : memref<3x256x256xbf16, #tpu.memory_space<vmem>>, vector<1x256x256xbf16>
    %19 = vector.shape_cast %18 : vector<1x256x256xbf16> to vector<256x256xbf16>
    %cst_15 = arith.constant dense<0.000000e+00> : vector<64x256xf32>
    %20 = tpu.matmul %11, %19, %cst_15 {dimension_numbers = #tpu.dot_dimension_numbers<[1], [0], [0], [1], [0, 0, 1, 1], [], []>} : vector<64x256xbf16>, vector<256x256xbf16>, vector<64x256xf32> -> vector<64x256xf32>
    %21 = tpu.iota {dimensions = array<i32: 0>} : vector<64x256xi32>
    %c32_i32 = arith.constant 32 : i32
    %c0_i32 = arith.constant 0 : i32
    %22 = arith.cmpi eq, %c32_i32, %c0_i32 : i32
    %c1_i32 = arith.constant 1 : i32
    %23 = arith.select %22, %c1_i32, %c32_i32 : i32
    %24 = vector.broadcast %23 : i32 to vector<64x256xi32>
    %25 = arith.remsi %21, %24 : vector<64x256xi32>
    %c0_i32_16 = arith.constant 0 : i32
    %26 = vector.broadcast %c0_i32_16 : i32 to vector<64x256xi32>
    %27 = arith.cmpi ne, %25, %26 : vector<64x256xi32>
    %c0_i32_17 = arith.constant 0 : i32
    %28 = vector.broadcast %c0_i32_17 : i32 to vector<64x256xi32>
    %29 = arith.cmpi slt, %25, %28 : vector<64x256xi32>
    %c0_i32_18 = arith.constant 0 : i32
    %30 = arith.cmpi slt, %23, %c0_i32_18 : i32
    %31 = vector.broadcast %30 : i1 to vector<64x256xi1>
    %32 = vector.broadcast %31 : vector<64x256xi1> to vector<64x256xi1>
    %33 = arith.xori %29, %32 : vector<64x256xi1>
    %34 = arith.andi %33, %27 : vector<64x256xi1>
    %35 = vector.broadcast %23 : i32 to vector<64x256xi32>
    %36 = arith.addi %25, %35 : vector<64x256xi32>
    %37 = arith.select %34, %36, %25 : vector<64x256xi1>, vector<64x256xi32>
    %c0_19 = arith.constant 0 : index
    %c0_20 = arith.constant 0 : index
    %38 = vector.load %arg3[%c0_19, %c0_20] : memref<1x256xf32, #tpu.memory_space<vmem>>, vector<1x256xf32>
    %39 = vector.broadcast %38 : vector<1x256xf32> to vector<64x256xf32>
    %40 = arith.addf %17, %39 : vector<64x256xf32>
    %c0_i32_21 = arith.constant 0 : i32
    %41 = vector.broadcast %c0_i32_21 : i32 to vector<64x256xi32>
    %42 = arith.cmpi eq, %37, %41 : vector<64x256xi32>
    %c1_i32_22 = arith.constant 1 : i32
    %43 = tpu.dynamic_rotate %14 by %c1_i32_22 dim 0 : vector<64x256xf32>, i32 -> vector<64x256xf32>
    %cst_23 = arith.constant 0.000000e+00 : f32
    %44 = vector.broadcast %cst_23 : f32 to vector<64x256xf32>
    %45 = arith.select %42, %44, %43 : vector<64x256xi1>, vector<64x256xf32>
    %46 = arith.addf %40, %45 : vector<64x256xf32>
    %c31_i32 = arith.constant 31 : i32
    %47 = vector.broadcast %c31_i32 : i32 to vector<64x256xi32>
    %48 = arith.cmpi eq, %37, %47 : vector<64x256xi32>
    %c63_i32 = arith.constant 63 : i32
    %49 = tpu.dynamic_rotate %20 by %c63_i32 dim 0 : vector<64x256xf32>, i32 -> vector<64x256xf32>
    %cst_24 = arith.constant 0.000000e+00 : f32
    %50 = vector.broadcast %cst_24 : f32 to vector<64x256xf32>
    %51 = arith.select %48, %50, %49 : vector<64x256xi1>, vector<64x256xf32>
    %52 = arith.addf %46, %51 : vector<64x256xf32>
    %53 = vector.shape_cast %52 : vector<64x256xf32> to vector<2x32x256xf32>
    %c0_25 = arith.constant 0 : index
    %c0_26 = arith.constant 0 : index
    %c0_27 = arith.constant 0 : index
    %54 = vector.load %arg6[%c0_25, %c0_26, %c0_27] : memref<2x32x256xf32, #tpu.memory_space<vmem>>, vector<2x32x256xf32>
    tpu.vector_store %arg6[%c0_25, %c0_26, %c0_27], %53 {strides = array<i32>} : memref<2x32x256xf32, #tpu.memory_space<vmem>>, vector<2x32x256xf32>,
    %cst_28 = arith.constant dense<0.000000e+00> : vector<256xf32>
    %55 = vector.multi_reduction <add>, %52, %cst_28 [0] : vector<64x256xf32> to vector<256xf32>
    %56 = vector.shape_cast %55 : vector<256xf32> to vector<1x256xf32>
    %c0_29 = arith.constant 0 : index
    %c0_30 = arith.constant 0 : index
    %c0_31 = arith.constant 0 : index
    %57 = vector.load %arg7[%c0_29, %c0_30, %c0_31] : memref<1x1x256xf32, #tpu.memory_space<vmem>>, vector<1x1x256xf32>
    %58 = vector.shape_cast %57 : vector<1x1x256xf32> to vector<1x256xf32>
    %59 = vector.shape_cast %56 : vector<1x256xf32> to vector<1x1x256xf32>
    tpu.vector_store %arg7[%c0_29, %c0_30, %c0_31], %59 {strides = array<i32>} : memref<1x1x256xf32, #tpu.memory_space<vmem>>, vector<1x1x256xf32>,
    %60 = arith.mulf %52, %52 : vector<64x256xf32>
    %cst_32 = arith.constant dense<0.000000e+00> : vector<256xf32>
    %61 = vector.multi_reduction <add>, %60, %cst_32 [0] : vector<64x256xf32> to vector<256xf32>
    %62 = vector.shape_cast %61 : vector<256xf32> to vector<1x256xf32>
    %c0_33 = arith.constant 0 : index
    %c0_34 = arith.constant 0 : index
    %c0_35 = arith.constant 0 : index
    %63 = vector.load %arg8[%c0_33, %c0_34, %c0_35] : memref<1x1x256xf32, #tpu.memory_space<vmem>>, vector<1x1x256xf32>
    %64 = vector.shape_cast %63 : vector<1x1x256xf32> to vector<1x256xf32>
    %65 = vector.shape_cast %62 : vector<1x256xf32> to vector<1x1x256xf32>
    tpu.vector_store %arg8[%c0_33, %c0_34, %c0_35], %65 {strides = array<i32>} : memref<1x1x256xf32, #tpu.memory_space<vmem>>, vector<1x1x256xf32>,
    return
  }
  func.func @transform_0(%arg0: i32) -> (i32, i32, i32) {
    %c0_i32 = arith.constant 0 : i32
    %c0_i32_0 = arith.constant 0 : i32
    %c0_i32_1 = arith.constant 0 : i32
    return %arg0, %c0_i32, %c0_i32_0 : i32, i32, i32
  }
  func.func @transform_1(%arg0: i32) -> (i32, i32, i32) {
    %c0_i32 = arith.constant 0 : i32
    %c0_i32_0 = arith.constant 0 : i32
    %c0_i32_1 = arith.constant 0 : i32
    %c0_i32_2 = arith.constant 0 : i32
    return %c0_i32, %c0_i32_0, %c0_i32_1 : i32, i32, i32
  }
  func.func @transform_2(%arg0: i32) -> (i32, i32) {
    %c0_i32 = arith.constant 0 : i32
    %c0_i32_0 = arith.constant 0 : i32
    %c0_i32_1 = arith.constant 0 : i32
    return %c0_i32, %c0_i32_0 : i32, i32
  }
  func.func @transform_3(%arg0: i32) -> (i32, i32) {
    %c0_i32 = arith.constant 0 : i32
    %c0_i32_0 = arith.constant 0 : i32
    %c0_i32_1 = arith.constant 0 : i32
    return %c0_i32, %c0_i32_0 : i32, i32
  }
  func.func @transform_4(%arg0: i32) -> (i32, i32) {
    %c0_i32 = arith.constant 0 : i32
    %c0_i32_0 = arith.constant 0 : i32
    %c0_i32_1 = arith.constant 0 : i32
    return %c0_i32, %c0_i32_0 : i32, i32
  }
  func.func @transform_5(%arg0: i32) -> (i32, i32, i32) {
    %c0_i32 = arith.constant 0 : i32
    %c0_i32_0 = arith.constant 0 : i32
    %c0_i32_1 = arith.constant 0 : i32
    return %arg0, %c0_i32, %c0_i32_0 : i32, i32, i32
  }
  func.func @transform_6(%arg0: i32) -> (i32, i32, i32) {
    %c0_i32 = arith.constant 0 : i32
    %c0_i32_0 = arith.constant 0 : i32
    %c0_i32_1 = arith.constant 0 : i32
    return %arg0, %c0_i32, %c0_i32_0 : i32, i32, i32
  }
  func.func @transform_7(%arg0: i32) -> (i32, i32, i32) {
    %c0_i32 = arith.constant 0 : i32
    %c0_i32_0 = arith.constant 0 : i32
    %c0_i32_1 = arith.constant 0 : i32
    return %arg0, %c0_i32, %c0_i32_0 : i32, i32, i32
  }
}

</mosaic_0001>

<llo_original>
// kernel: tile.28
$region0: #{tile.28}
  #allocation0 [shape = 's32[1]{0}', space=sflag, size = 0x4, scoped, tag = 'scoped memory for tile.28']
  %s0 = inlined_call_operand.vmem [shape: f32[8], index: 0, kind: input, shape index: {}]
  %s1 = inlined_call_operand.vmem [shape: f32[32,8], index: 1, kind: output, shape index: {}]
  // Predicated region
  $region2: #{tile.28} parent=0 // pred_check
    _
  $region3: #{tile.28} parent=0 // pred_check_branch
    %3 = sbr.rel (0) target = $region5
  $region4: #{tile.28} parent=0 // pred_region
    _
  $region5: #{tile.28} parent=0 // pred_fallthru
    _
  %v4 = vld [vmem:[%s0] ss:$0 sm:$0xff]
  %5 = vst [vmem:[%s1] sm:$0xff] %v4
  %s6 = scalar_lea.vmem %s1, 8
  %7 = vst [vmem:[%s6] sm:$0xff] %v4
  %s8 = scalar_lea.vmem %s1, 16
  %9 = vst [vmem:[%s8] sm:$0xff] %v4
  %s10 = scalar_lea.vmem %s1, 24
  %11 = vst [vmem:[%s10] sm:$0xff] %v4

// kernel: tile.29
$region0: #{tile.29}
  %s0 = inlined_call_operand.vmem [shape: f32[32,8], index: 0, kind: input, shape index: {}]
  %s1 = inlined_call_operand.vmem [shape: f32[1,256], index: 1, kind: output, shape index: {}]
  $region1: #{tile.29} parent=0
    #allocation0 [shape = 'u8[8192]{0}', space=vmem, size = 0x2000, scoped, tag = 'scoped mem for output reshape']
    %s2 = smov 3
    %v3 = vld [vmem:[%s0] ss:$16 sm:%s2]
    %vm4 = vcmask 64512
    %5 = vst.msk [vmem:[#allocation0] ss:$8 sm:$0x3] %vm4, %v3
    %s6 = scalar_lea.vmem %s0, 15
    %s7 = smov 3
    %v8 = vld [vmem:[%s6] ss:$16 sm:%s7]
    %9 = vrot.lane.b32.xlu0 %v8, 120
    %v10 = vpop.permute.xlu0 %9
    %vm11 = vcmask 1048512
    %12 = vst.msk [vmem:[#allocation0] ss:$8 sm:$0x3] %vm11, %v10
    %s13 = scalar_lea.vmem %s0, 14
    %s14 = smov 3
    %v15 = vld [vmem:[%s13] ss:$16 sm:%s14]
    %16 = vrot.lane.b32.xlu0 %v15, 112
    %v17 = vpop.permute.xlu0 %16
    %vm18 = vcmask 982912
    %19 = vst.msk [vmem:[#allocation0] ss:$8 sm:$0x3] %vm18, %v17
    %s20 = scalar_lea.vmem %s0, 13
    %s21 = smov 3
    %v22 = vld [vmem:[%s20] ss:$16 sm:%s21]
    %23 = vrot.lane.b32.xlu0 %v22, 104
    %v24 = vpop.permute.xlu0 %23
    %vm25 = vcmask 917312
    %26 = vst.msk [vmem:[#allocation0] ss:$8 sm:$0x3] %vm25, %v24
    %s27 = scalar_lea.vmem %s0, 12
    %s28 = smov 3
    %v29 = vld [vmem:[%s27] ss:$16 sm:%s28]
    %30 = vrot.lane.b32.xlu0 %v29, 96
    %v31 = vpop.permute.xlu0 %30
    %vm32 = vcmask 851712
    %33 = vst.msk [vmem:[#allocation0] ss:$8 sm:$0x3] %vm32, %v31
    %s34 = scalar_lea.vmem %s0, 11
    %s35 = smov 3
    %v36 = vld [vmem:[%s34] ss:$16 sm:%s35]
    %37 = vrot.lane.b32.xlu0 %v36, 88
    %v38 = vpop.permute.xlu0 %37
    %vm39 = vcmask 786112
    %40 = vst.msk [vmem:[#allocation0] ss:$8 sm:$0x3] %vm39, %v38
    %s41 = scalar_lea.vmem %s0, 10
    %s42 = smov 3
    %v43 = vld [vmem:[%s41] ss:$16 sm:%s42]
    %44 = vrot.lane.b32.xlu0 %v43, 80
    %v45 = vpop.permute.xlu0 %44
    %vm46 = vcmask 720512
    %47 = vst.msk [vmem:[#allocation0] ss:$8 sm:$0x3] %vm46, %v45
    %s48 = scalar_lea.vmem %s0, 9
    %s49 = smov 3
    %v50 = vld [vmem:[%s48] ss:$16 sm:%s49]
    %51 = vrot.lane.b32.xlu0 %v50, 72
    %v52 = vpop.permute.xlu0 %51
    %vm53 = vcmask 654912
    %54 = vst.msk [vmem:[#allocation0] ss:$8 sm:$0x3] %vm53, %v52
    %s55 = scalar_lea.vmem %s0, 8
    %s56 = smov 3
    %v57 = vld [vmem:[%s55] ss:$16 sm:%s56]
    %58 = vrot.lane.b32.xlu0 %v57, 64
    %v59 = vpop.permute.xlu0 %58
    %vm60 = vcmask 589312
    %61 = vst.msk [vmem:[#allocation0] ss:$8 sm:$0x3] %vm60, %v59
    %s62 = scalar_lea.vmem %s0, 7
    %s63 = smov 3
    %v64 = vld [vmem:[%s62] ss:$16 sm:%s63]
    %65 = vrot.lane.b32.xlu0 %v64, 56
    %v66 = vpop.permute.xlu0 %65
    %vm67 = vcmask 523712
    %68 = vst.msk [vmem:[#allocation0] ss:$8 sm:$0x3] %vm67, %v66
    %s69 = scalar_lea.vmem %s0, 6
    %s70 = smov 3
    %v71 = vld [vmem:[%s69] ss:$16 sm:%s70]
    %72 = vrot.lane.b32.xlu0 %v71, 48
    %v73 = vpop.permute.xlu0 %72
    %vm74 = vcmask 458112
    %75 = vst.msk [vmem:[#allocation0] ss:$8 sm:$0x3] %vm74, %v73
    %s76 = scalar_lea.vmem %s0, 5
    %s77 = smov 3
    %v78 = vld [vmem:[%s76] ss:$16 sm:%s77]
    %79 = vrot.lane.b32.xlu0 %v78, 40
    %v80 = vpop.permute.xlu0 %79
    %vm81 = vcmask 392512
    %82 = vst.msk [vmem:[#allocation0] ss:$8 sm:$0x3] %vm81, %v80
    %s83 = scalar_lea.vmem %s0, 4
    %s84 = smov 3
    %v85 = vld [vmem:[%s83] ss:$16 sm:%s84]
    %86 = vrot.lane.b32.xlu0 %v85, 32
    %v87 = vpop.permute.xlu0 %86
    %vm88 = vcmask 326912
    %89 = vst.msk [vmem:[#allocation0] ss:$8 sm:$0x3] %vm88, %v87
    %s90 = scalar_lea.vmem %s0, 3
    %s91 = smov 3
    %v92 = vld [vmem:[%s90] ss:$16 sm:%s91]
    %93 = vrot.lane.b32.xlu0 %v92, 24
    %v94 = vpop.permute.xlu0 %93
    %vm95 = vcmask 261312
    %96 = vst.msk [vmem:[#allocation0] ss:$8 sm:$0x3] %vm95, %v94
    %s97 = scalar_lea.vmem %s0, 2
    %s98 = smov 3
    %v99 = vld [vmem:[%s97] ss:$16 sm:%s98]
    %100 = vrot.lane.b32.xlu0 %v99, 16
    %v101 = vpop.permute.xlu0 %100
    %vm102 = vcmask 195712
    %103 = vst.msk [vmem:[#allocation0] ss:$8 sm:$0x3] %vm102, %v101
    %s104 = scalar_lea.vmem %s0, 1
    %s105 = smov 3
    %v106 = vld [vmem:[%s104] ss:$16 sm:%s105]
    %107 = vrot.lane.b32.xlu0 %v106, 8
    %v108 = vpop.permute.xlu0 %107
    %vm109 = vcmask 130112
    %110 = vst.msk [vmem:[#allocation0] ss:$8 sm:$0x3] %vm109, %v108
    %s112 = sshllo.u32 0, 1
    %v114 = vld [vmem:[#allocation0] sm:%s112]
    %s115 = sshllo.u32 0, 1
    %116 = vst [vmem:[%s1] sm:%s115] %v114
    %s117 = scalar_lea.vmem [#allocation0], 8
    %v118 = vld [vmem:[%s117] sm:%s112]
    %s119 = sshllo.u32 0, 1
    %s120 = scalar_lea.vmem %s1, 1
    %121 = vst [vmem:[%s120] sm:%s119] %v118

// kernel: unet_up_block_forward.4
$region0: #{unet_up_block_forward.4}
  #allocation0 [shape = 'u32[]', space=smem, size = 0x4, offset = 0x4, fixed_abs, tag = 'smem constant byte address 0x4 - core index']
  #allocation1 [shape = 'u32[144,128]{1,0:T(1,128)}', space=vmem, size = 0x12000, scoped, tag = 'internal scratch']
  %s0 = inlined_call_operand.vmem [shape: bf16[2,16,128], index: 0, kind: input, shape index: {}]
  %s1 = inlined_call_operand.vmem [shape: bf16[128,512], index: 1, kind: input, shape index: {}]
  %s2 = inlined_call_operand.vmem [shape: f32[1,512], index: 2, kind: input, shape index: {}]
  %s3 = inlined_call_operand.vmem [shape: bf16[2,16,512], index: 3, kind: output, shape index: {}]
  %s4 = sld [smem:[#allocation0]]
  $region22: #{unet_up_block_forward.4} parent=0
    _
  %s6 = ssub.s32 1, %s4
  %s7 = scalar_select 0, %s6, %s4
  // Predicated region
  $region2: #{unet_up_block_forward.4} parent=0 // pred_check
    _
  $region3: #{unet_up_block_forward.4} parent=0 // pred_check_branch
    %9 = sbr.rel (0) target = $region5
  $region4: #{unet_up_block_forward.4} parent=0 // pred_region
    _
  $region5: #{unet_up_block_forward.4} parent=0 // pred_fallthru
    _
  // Predicated region
  $region6: #{unet_up_block_forward.4} parent=0 // pred_check
    _
  $region7: #{unet_up_block_forward.4} parent=0 // pred_check_branch
    %11 = sbr.rel (0) target = $region9
  $region8: #{unet_up_block_forward.4} parent=0 // pred_region
    _
  $region9: #{unet_up_block_forward.4} parent=0 // pred_fallthru
    _
  // Predicated region
  $region10: #{unet_up_block_forward.4} parent=0 // pred_check
    _
  $region11: #{unet_up_block_forward.4} parent=0 // pred_check_branch
    %13 = sbr.rel (0) target = $region13
  $region12: #{unet_up_block_forward.4} parent=0 // pred_region
    _
  $region13: #{unet_up_block_forward.4} parent=0 // pred_fallthru
    _
  %v15 = vld [vmem:[%s0] sm:$0xf]
  %v16 = vld [vmem:[%s0 + $0x4] sm:$0xf]
  %v17 = vld [vmem:[%s0 + $0x8] sm:$0xf]
  %v18 = vld [vmem:[%s0 + $0xc] sm:$0xf]
  %v19 = vld [vmem:[%s1] sm:$0xff]
  %v20 = vld [vmem:[%s1 + $0x8] sm:$0xff]
  %v21 = vld [vmem:[%s1 + $0x10] sm:$0xff]
  %v22 = vld [vmem:[%s1 + $0x18] sm:$0xff]
  %v23 = vld [vmem:[%s1 + $0x20] sm:$0xff]
  %v24 = vld [vmem:[%s1 + $0x28] sm:$0xff]
  %v25 = vld [vmem:[%s1 + $0x30] sm:$0xff]
  %v26 = vld [vmem:[%s1 + $0x38] sm:$0xff]
  %v27 = vld [vmem:[%s1 + $0x40] sm:$0xff]
  %v28 = vld [vmem:[%s1 + $0x48] sm:$0xff]
  %v29 = vld [vmem:[%s1 + $0x50] sm:$0xff]
  %v30 = vld [vmem:[%s1 + $0x58] sm:$0xff]
  %v31 = vld [vmem:[%s1 + $0x60] sm:$0xff]
  %v32 = vld [vmem:[%s1 + $0x68] sm:$0xff]
  %v33 = vld [vmem:[%s1 + $0x70] sm:$0xff]
  %v34 = vld [vmem:[%s1 + $0x78] sm:$0xff]
  %v35 = vld [vmem:[%s1 + $0x80] sm:$0xff]
  %v36 = vld [vmem:[%s1 + $0x88] sm:$0xff]
  %v37 = vld [vmem:[%s1 + $0x90] sm:$0xff]
  %v38 = vld [vmem:[%s1 + $0x98] sm:$0xff]
  %v39 = vld [vmem:[%s1 + $0xa0] sm:$0xff]
  %v40 = vld [vmem:[%s1 + $0xa8] sm:$0xff]
  %v41 = vld [vmem:[%s1 + $0xb0] sm:$0xff]
  %v42 = vld [vmem:[%s1 + $0xb8] sm:$0xff]
  %v43 = vld [vmem:[%s1 + $0xc0] sm:$0xff]
  %v44 = vld [vmem:[%s1 + $0xc8] sm:$0xff]
  %v45 = vld [vmem:[%s1 + $0xd0] sm:$0xff]
  %v46 = vld [vmem:[%s1 + $0xd8] sm:$0xff]
  %v47 = vld [vmem:[%s1 + $0xe0] sm:$0xff]
  %v48 = vld [vmem:[%s1 + $0xe8] sm:$0xff]
  %v49 = vld [vmem:[%s1 + $0xf0] sm:$0xff]
  %v50 = vld [vmem:[%s1 + $0xf8] sm:$0xff]
  %v51 = vld [vmem:[%s2] sm:$0xf]
  %v53 = vlaneseq
  %v54 = vshrl.u32 %v53, 7
  %v55 = vsub.s32 0, %v54
  %v56 = vrot.slane %v51, %v55
  %v57 = vlaneseq
  %v58 = vshrl.u32 %v57, 7
  %v59 = vsub.s32 1, %v58
  %v60 = vrot.slane %v51, %v59
  %v61 = vlaneseq
  %v62 = vshrl.u32 %v61, 7
  %v63 = vsub.s32 2, %v62
  %v64 = vrot.slane %v51, %v63
  %v65 = vlaneseq
  %v66 = vshrl.u32 %v65, 7
  %v67 = vsub.s32 3, %v66
  %v68 = vrot.slane %v51, %v67
  %v77 = vunpack.c.l.b16 %v15
  %v78 = vunpack.c.l.b16 %v16
  %v79 = vunpack.c.l.b16 %v17
  %v80 = vunpack.c.l.b16 %v18
  %v81 = vpack.c.b16 %v78, %v77
  %v82 = vpack.c.b16 %v80, %v79
  %v117 = vunpack.c.l.b16 %v19
  %v118 = vunpack.c.h.b16 %v19
  %v119 = vunpack.c.l.b16 %v20
  %v120 = vunpack.c.h.b16 %v20
  %v121 = vunpack.c.l.b16 %v21
  %v122 = vunpack.c.h.b16 %v21
  %v123 = vunpack.c.l.b16 %v22
  %v124 = vunpack.c.h.b16 %v22
  %v125 = vunpack.c.l.b16 %v23
  %v126 = vunpack.c.h.b16 %v23
  %v127 = vunpack.c.l.b16 %v24
  %v128 = vunpack.c.h.b16 %v24
  %v129 = vunpack.c.l.b16 %v25
  %v130 = vunpack.c.h.b16 %v25
  %v131 = vunpack.c.l.b16 %v26
  %v132 = vunpack.c.h.b16 %v26
  %v133 = vunpack.c.l.b16 %v27
  %v134 = vunpack.c.h.b16 %v27
  %v135 = vunpack.c.l.b16 %v28
  %v136 = vunpack.c.h.b16 %v28
  %v137 = vunpack.c.l.b16 %v29
  %v138 = vunpack.c.h.b16 %v29
  %v139 = vunpack.c.l.b16 %v30
  %v140 = vunpack.c.h.b16 %v30
  %v141 = vunpack.c.l.b16 %v31
  %v142 = vunpack.c.h.b16 %v31
  %v143 = vunpack.c.l.b16 %v32
  %v144 = vunpack.c.h.b16 %v32
  %v145 = vunpack.c.l.b16 %v33
  %v146 = vunpack.c.h.b16 %v33
  %v147 = vunpack.c.l.b16 %v34
  %v148 = vunpack.c.h.b16 %v34
  %v149 = vunpack.c.l.b16 %v35
  %v150 = vunpack.c.h.b16 %v35
  %v151 = vunpack.c.l.b16 %v36
  %v152 = vunpack.c.h.b16 %v36
  %v153 = vunpack.c.l.b16 %v37
  %v154 = vunpack.c.h.b16 %v37
  %v155 = vunpack.c.l.b16 %v38
  %v156 = vunpack.c.h.b16 %v38
  %v157 = vunpack.c.l.b16 %v39
  %v158 = vunpack.c.h.b16 %v39
  %v159 = vunpack.c.l.b16 %v40
  %v160 = vunpack.c.h.b16 %v40
  %v161 = vunpack.c.l.b16 %v41
  %v162 = vunpack.c.h.b16 %v41
  %v163 = vunpack.c.l.b16 %v42
  %v164 = vunpack.c.h.b16 %v42
  %v165 = vunpack.c.l.b16 %v43
  %v166 = vunpack.c.h.b16 %v43
  %v167 = vunpack.c.l.b16 %v44
  %v168 = vunpack.c.h.b16 %v44
  %v169 = vunpack.c.l.b16 %v45
  %v170 = vunpack.c.h.b16 %v45
  %v171 = vunpack.c.l.b16 %v46
  %v172 = vunpack.c.h.b16 %v46
  %v173 = vunpack.c.l.b16 %v47
  %v174 = vunpack.c.h.b16 %v47
  %v175 = vunpack.c.l.b16 %v48
  %v176 = vunpack.c.h.b16 %v48
  %v177 = vunpack.c.l.b16 %v49
  %v178 = vunpack.c.h.b16 %v49
  %v179 = vunpack.c.l.b16 %v50
  %v180 = vunpack.c.h.b16 %v50
  %v181 = vpack.c.b16 %v121, %v117
  %v182 = vpack.c.b16 %v122, %v118
  %v183 = vpack.c.b16 %v123, %v119
  %v184 = vpack.c.b16 %v124, %v120
  %v185 = vpack.c.b16 %v129, %v125
  %v186 = vpack.c.b16 %v130, %v126
  %v187 = vpack.c.b16 %v131, %v127
  %v188 = vpack.c.b16 %v132, %v128
  %v189 = vpack.c.b16 %v137, %v133
  %v190 = vpack.c.b16 %v138, %v134
  %v191 = vpack.c.b16 %v139, %v135
  %v192 = vpack.c.b16 %v140, %v136
  %v193 = vpack.c.b16 %v145, %v141
  %v194 = vpack.c.b16 %v146, %v142
  %v195 = vpack.c.b16 %v147, %v143
  %v196 = vpack.c.b16 %v148, %v144
  %v197 = vpack.c.b16 %v153, %v149
  %v198 = vpack.c.b16 %v154, %v150
  %v199 = vpack.c.b16 %v155, %v151
  %v200 = vpack.c.b16 %v156, %v152
  %v201 = vpack.c.b16 %v161, %v157
  %v202 = vpack.c.b16 %v162, %v158
  %v203 = vpack.c.b16 %v163, %v159
  %v204 = vpack.c.b16 %v164, %v160
  %v205 = vpack.c.b16 %v169, %v165
  %v206 = vpack.c.b16 %v170, %v166
  %v207 = vpack.c.b16 %v171, %v167
  %v208 = vpack.c.b16 %v172, %v168
  %v209 = vpack.c.b16 %v177, %v173
  %v210 = vpack.c.b16 %v178, %v174
  %v211 = vpack.c.b16 %v179, %v175
  %v212 = vpack.c.b16 %v180, %v176
  %245 = vmatprep.subr.bf16.mxu0 %v182
  %246 = vmatpush1.bf16.msra.mxu0 %v181
  %247 = vmatprep.subr.bf16.mxu0 %v186
  %248 = vmatpush1.bf16.msra.mxu0 %v185
  %249 = vmatprep.subr.bf16.mxu0 %v190
  %250 = vmatpush1.bf16.msra.mxu0 %v189
  %251 = vmatprep.subr.bf16.mxu0 %v194
  %252 = vmatpush1.bf16.msra.mxu0 %v193
  %253 = vmatprep.subr.bf16.mxu0 %v198
  %254 = vmatpush1.bf16.msra.mxu0 %v197
  %255 = vmatprep.subr.bf16.mxu0 %v202
  %256 = vmatpush1.bf16.msra.mxu0 %v201
  %257 = vmatprep.subr.bf16.mxu0 %v206
  %258 = vmatpush1.bf16.msra.mxu0 %v205
  %259 = vmatprep.subr.bf16.mxu0 %v210
  %260 = vmatpush1.bf16.msra.mxu0 %v209
  %261 = vmatprep.subr.bf16.mxu0 0
  %262 = vmatpush1.bf16.msra.mxu0 0
  %263 = vmatprep.subr.bf16.mxu0 0
  %264 = vmatpush1.bf16.msra.mxu0 0
  %265 = vmatprep.subr.bf16.mxu0 0
  %266 = vmatpush1.bf16.msra.mxu0 0
  %267 = vmatprep.subr.bf16.mxu0 0
  %268 = vmatpush1.bf16.msra.mxu0 0
  %269 = vmatprep.subr.bf16.mxu0 0
  %270 = vmatpush1.bf16.msra.mxu0 0
  %271 = vmatprep.subr.bf16.mxu0 0
  %272 = vmatpush1.bf16.msra.mxu0 0
  %273 = vmatprep.subr.bf16.mxu0 0
  %274 = vmatpush1.bf16.msra.mxu0 0
  %275 = vmatprep.subr.bf16.mxu0 0
  %276 = vmatpush1.bf16.msra.mxu0 0
  %277 = vmatprep.mubr.bf16.mxu0 0
  %278 = vmatmul.mubr.bf16.gmra.mrb[0].mxu0 %v81
  %v279 = vpop.f32.mrb[0].mxu0
  %v280 = vadd.f32 %v56, %v279
  %v281 = vpop.f32.mrb[0].mxu0
  %v282 = vadd.f32 %v60, %v281
  %v283 = vpop.f32.mrb[0].mxu0
  %v284 = vadd.f32 %v56, %v283
  %v285 = vpop.f32.mrb[0].mxu0
  %v286 = vadd.f32 %v60, %v285
  %287 = vmatprep.mubr.bf16.mxu0 0
  %288 = vmatmul.mubr.bf16.gmra.mrb[0].mxu0 %v82
  %v289 = vpop.f32.mrb[0].mxu0
  %v290 = vadd.f32 %v56, %v289
  %v291 = vpop.f32.mrb[0].mxu0
  %v292 = vadd.f32 %v60, %v291
  %v293 = vpop.f32.mrb[0].mxu0
  %v294 = vadd.f32 %v56, %v293
  %v295 = vpop.f32.mrb[0].mxu0
  %v296 = vadd.f32 %v60, %v295
  %297 = vdwg.mxu0
  %298 = vmatprep.subr.bf16.mxu0 %v184
  %299 = vmatpush1.bf16.msra.mxu0 %v183
  %300 = vmatprep.subr.bf16.mxu0 %v188
  %301 = vmatpush1.bf16.msra.mxu0 %v187
  %302 = vmatprep.subr.bf16.mxu0 %v192
  %303 = vmatpush1.bf16.msra.mxu0 %v191
  %304 = vmatprep.subr.bf16.mxu0 %v196
  %305 = vmatpush1.bf16.msra.mxu0 %v195
  %306 = vmatprep.subr.bf16.mxu0 %v200
  %307 = vmatpush1.bf16.msra.mxu0 %v199
  %308 = vmatprep.subr.bf16.mxu0 %v204
  %309 = vmatpush1.bf16.msra.mxu0 %v203
  %310 = vmatprep.subr.bf16.mxu0 %v208
  %311 = vmatpush1.bf16.msra.mxu0 %v207
  %312 = vmatprep.subr.bf16.mxu0 %v212
  %313 = vmatpush1.bf16.msra.mxu0 %v211
  %314 = vmatprep.subr.bf16.mxu0 0
  %315 = vmatpush1.bf16.msra.mxu0 0
  %316 = vmatprep.subr.bf16.mxu0 0
  %317 = vmatpush1.bf16.msra.mxu0 0
  %318 = vmatprep.subr.bf16.mxu0 0
  %319 = vmatpush1.bf16.msra.mxu0 0
  %320 = vmatprep.subr.bf16.mxu0 0
  %321 = vmatpush1.bf16.msra.mxu0 0
  %322 = vmatprep.subr.bf16.mxu0 0
  %323 = vmatpush1.bf16.msra.mxu0 0
  %324 = vmatprep.subr.bf16.mxu0 0
  %325 = vmatpush1.bf16.msra.mxu0 0
  %326 = vmatprep.subr.bf16.mxu0 0
  %327 = vmatpush1.bf16.msra.mxu0 0
  %328 = vmatprep.subr.bf16.mxu0 0
  %329 = vmatpush1.bf16.msra.mxu0 0
  %330 = vmatprep.mubr.bf16.mxu0 0
  %331 = vmatmul.mubr.bf16.gmra.mrb[0].mxu0 %v81
  %v332 = vpop.f32.mrb[0].mxu0
  %v333 = vadd.f32 %v64, %v332
  %v334 = vpop.f32.mrb[0].mxu0
  %v335 = vadd.f32 %v68, %v334
  %v336 = vpop.f32.mrb[0].mxu0
  %v337 = vadd.f32 %v64, %v336
  %v338 = vpop.f32.mrb[0].mxu0
  %v339 = vadd.f32 %v68, %v338
  %340 = vmatprep.mubr.bf16.mxu0 0
  %341 = vmatmul.mubr.bf16.gmra.mrb[0].mxu0 %v82
  %v342 = vpop.f32.mrb[0].mxu0
  %v343 = vadd.f32 %v64, %v342
  %v344 = vpop.f32.mrb[0].mxu0
  %v345 = vadd.f32 %v68, %v344
  %v346 = vpop.f32.mrb[0].mxu0
  %v347 = vadd.f32 %v64, %v346
  %v348 = vpop.f32.mrb[0].mxu0
  %v349 = vadd.f32 %v68, %v348
  %350 = vdwg.mxu0
  %v351 = vpack.c.bf16 %v284, %v280
  %v352 = vpack.c.bf16 %v286, %v282
  %v353 = vpack.c.bf16 %v337, %v333
  %v354 = vpack.c.bf16 %v339, %v335
  %v355 = vpack.c.bf16 %v294, %v290
  %v356 = vpack.c.bf16 %v296, %v292
  %v357 = vpack.c.bf16 %v347, %v343
  %v358 = vpack.c.bf16 %v349, %v345
  %v367 = vunpack.c.l.b16 %v351
  %v368 = vunpack.c.l.b16 %v352
  %v369 = vunpack.c.l.b16 %v353
  %v370 = vunpack.c.l.b16 %v354
  %v371 = vunpack.c.h.b16 %v351
  %v372 = vunpack.c.h.b16 %v352
  %v373 = vunpack.c.h.b16 %v353
  %v374 = vunpack.c.h.b16 %v354
  %v375 = vunpack.c.l.b16 %v355
  %v376 = vunpack.c.l.b16 %v356
  %v377 = vunpack.c.l.b16 %v357
  %v378 = vunpack.c.l.b16 %v358
  %v379 = vunpack.c.h.b16 %v355
  %v380 = vunpack.c.h.b16 %v356
  %v381 = vunpack.c.h.b16 %v357
  %v382 = vunpack.c.h.b16 %v358
  %v383 = vpack.c.b16 %v368, %v367
  %v384 = vpack.c.b16 %v370, %v369
  %v385 = vpack.c.b16 %v372, %v371
  %v386 = vpack.c.b16 %v374, %v373
  %v387 = vpack.c.b16 %v376, %v375
  %v388 = vpack.c.b16 %v378, %v377
  %v389 = vpack.c.b16 %v380, %v379
  %v390 = vpack.c.b16 %v382, %v381
  %399 = vst [vmem:[%s3] sm:$0xff] %v383
  %400 = vst [vmem:[%s3 + $0x8] sm:$0xff] %v384
  %401 = vst [vmem:[%s3 + $0x10] sm:$0xff] %v385
  %402 = vst [vmem:[%s3 + $0x18] sm:$0xff] %v386
  %403 = vst [vmem:[%s3 + $0x20] sm:$0xff] %v387
  %404 = vst [vmem:[%s3 + $0x28] sm:$0xff] %v388
  %405 = vst [vmem:[%s3 + $0x30] sm:$0xff] %v389
  %406 = vst [vmem:[%s3 + $0x38] sm:$0xff] %v390
  // Predicated region
  $region14: #{unet_up_block_forward.4} parent=0 // pred_check
    _
  $region15: #{unet_up_block_forward.4} parent=0 // pred_check_branch
    %408 = sbr.rel (0) target = $region17
  $region16: #{unet_up_block_forward.4} parent=0 // pred_region
    _
  $region17: #{unet_up_block_forward.4} parent=0 // pred_fallthru
    _
  // Predicated region
  $region18: #{unet_up_block_forward.4} parent=0 // pred_check
    _
  $region19: #{unet_up_block_forward.4} parent=0 // pred_check_branch
    %410 = sbr.rel (0) target = $region21
  $region20: #{unet_up_block_forward.4} parent=0 // pred_region
    _
  $region21: #{unet_up_block_forward.4} parent=0 // pred_fallthru
    _

// kernel: unet_up_block_forward.7
$region0: #{unet_up_block_forward.7}
  #allocation0 [shape = 'u32[]', space=smem, size = 0x4, offset = 0x4, fixed_abs, tag = 'smem constant byte address 0x4 - core index']
  #allocation1 [shape = 'u32[144,128]{1,0:T(1,128)}', space=vmem, size = 0x12000, scoped, tag = 'internal scratch']
  %s0 = inlined_call_operand.vmem [shape: f32[2,32,256], index: 0, kind: input, shape index: {}]
  %s1 = inlined_call_operand.vmem [shape: bf16[2,32,256], index: 1, kind: input, shape index: {}]
  %s2 = inlined_call_operand.vmem [shape: f32[1,256], index: 2, kind: input, shape index: {}]
  %s3 = inlined_call_operand.vmem [shape: f32[1,256], index: 3, kind: input, shape index: {}]
  %s4 = inlined_call_operand.vmem [shape: f32[2,32,256], index: 4, kind: output, shape index: {}]
  %s5 = sld [smem:[#allocation0]]
  $region26: #{unet_up_block_forward.7} parent=0
    _
  %s7 = ssub.s32 1, %s5
  %s8 = scalar_select 0, %s7, %s5
  // Predicated region
  $region2: #{unet_up_block_forward.7} parent=0 // pred_check
    _
  $region3: #{unet_up_block_forward.7} parent=0 // pred_check_branch
    %10 = sbr.rel (0) target = $region5
  $region4: #{unet_up_block_forward.7} parent=0 // pred_region
    _
  $region5: #{unet_up_block_forward.7} parent=0 // pred_fallthru
    _
  // Predicated region
  $region6: #{unet_up_block_forward.7} parent=0 // pred_check
    _
  $region7: #{unet_up_block_forward.7} parent=0 // pred_check_branch
    %12 = sbr.rel (0) target = $region9
  $region8: #{unet_up_block_forward.7} parent=0 // pred_region
    _
  $region9: #{unet_up_block_forward.7} parent=0 // pred_fallthru
    _
  // Predicated region
  $region10: #{unet_up_block_forward.7} parent=0 // pred_check
    _
  $region11: #{unet_up_block_forward.7} parent=0 // pred_check_branch
    %14 = sbr.rel (0) target = $region13
  $region12: #{unet_up_block_forward.7} parent=0 // pred_region
    _
  $region13: #{unet_up_block_forward.7} parent=0 // pred_fallthru
    _
  // Predicated region
  $region14: #{unet_up_block_forward.7} parent=0 // pred_check
    _
  $region15: #{unet_up_block_forward.7} parent=0 // pred_check_branch
    %16 = sbr.rel (0) target = $region17
  $region16: #{unet_up_block_forward.7} parent=0 // pred_region
    _
  $region17: #{unet_up_block_forward.7} parent=0 // pred_fallthru
    _
  %v17 = vld [vmem:[%s0] sm:$0xff]
  %v18 = vld [vmem:[%s0 + $0x8] sm:$0xff]
  %v19 = vld [vmem:[%s0 + $0x10] sm:$0xff]
  %v20 = vld [vmem:[%s0 + $0x18] sm:$0xff]
  %v21 = vld [vmem:[%s0 + $0x20] sm:$0xff]
  %v22 = vld [vmem:[%s0 + $0x28] sm:$0xff]
  %v23 = vld [vmem:[%s0 + $0x30] sm:$0xff]
  %v24 = vld [vmem:[%s0 + $0x38] sm:$0xff]
  %v25 = vld [vmem:[%s0 + $0x40] sm:$0xff]
  %v26 = vld [vmem:[%s0 + $0x48] sm:$0xff]
  %v27 = vld [vmem:[%s0 + $0x50] sm:$0xff]
  %v28 = vld [vmem:[%s0 + $0x58] sm:$0xff]
  %v29 = vld [vmem:[%s0 + $0x60] sm:$0xff]
  %v30 = vld [vmem:[%s0 + $0x68] sm:$0xff]
  %v31 = vld [vmem:[%s0 + $0x70] sm:$0xff]
  %v32 = vld [vmem:[%s0 + $0x78] sm:$0xff]
  %v33 = vld [vmem:[%s1] sm:$0xff]
  %v34 = vld [vmem:[%s1 + $0x8] sm:$0xff]
  %v35 = vld [vmem:[%s1 + $0x10] sm:$0xff]
  %v36 = vld [vmem:[%s1 + $0x18] sm:$0xff]
  %v37 = vld [vmem:[%s1 + $0x20] sm:$0xff]
  %v38 = vld [vmem:[%s1 + $0x28] sm:$0xff]
  %v39 = vld [vmem:[%s1 + $0x30] sm:$0xff]
  %v40 = vld [vmem:[%s1 + $0x38] sm:$0xff]
  %v41 = vunpack.c.l.bf16 %v33
  %v42 = vunpack.c.h.bf16 %v33
  %v43 = vunpack.c.l.bf16 %v34
  %v44 = vunpack.c.h.bf16 %v34
  %v45 = vunpack.c.l.bf16 %v35
  %v46 = vunpack.c.h.bf16 %v35
  %v47 = vunpack.c.l.bf16 %v36
  %v48 = vunpack.c.h.bf16 %v36
  %v49 = vunpack.c.l.bf16 %v37
  %v50 = vunpack.c.h.bf16 %v37
  %v51 = vunpack.c.l.bf16 %v38
  %v52 = vunpack.c.h.bf16 %v38
  %v53 = vunpack.c.l.bf16 %v39
  %v54 = vunpack.c.h.bf16 %v39
  %v55 = vunpack.c.l.bf16 %v40
  %v56 = vunpack.c.h.bf16 %v40
  %v57 = vld [vmem:[%s2] sm:$0x3]
  %v59 = vlaneseq
  %v60 = vshrl.u32 %v59, 7
  %v61 = vsub.s32 0, %v60
  %v62 = vrot.slane %v57, %v61
  %v63 = vlaneseq
  %v64 = vshrl.u32 %v63, 7
  %v65 = vsub.s32 1, %v64
  %v66 = vrot.slane %v57, %v65
  %v69 = vmul.f32 %v17, %v62
  %v70 = vmul.f32 %v18, %v66
  %v71 = vmul.f32 %v19, %v62
  %v72 = vmul.f32 %v20, %v66
  %v73 = vmul.f32 %v21, %v62
  %v74 = vmul.f32 %v22, %v66
  %v75 = vmul.f32 %v23, %v62
  %v76 = vmul.f32 %v24, %v66
  %v77 = vmul.f32 %v25, %v62
  %v78 = vmul.f32 %v26, %v66
  %v79 = vmul.f32 %v27, %v62
  %v80 = vmul.f32 %v28, %v66
  %v81 = vmul.f32 %v29, %v62
  %v82 = vmul.f32 %v30, %v66
  %v83 = vmul.f32 %v31, %v62
  %v84 = vmul.f32 %v32, %v66
  %v85 = vld [vmem:[%s3] sm:$0x3]
  %v87 = vlaneseq
  %v88 = vshrl.u32 %v87, 7
  %v89 = vsub.s32 0, %v88
  %v90 = vrot.slane %v85, %v89
  %v91 = vlaneseq
  %v92 = vshrl.u32 %v91, 7
  %v93 = vsub.s32 1, %v92
  %v94 = vrot.slane %v85, %v93
  %v97 = vadd.f32 %v69, %v90
  %v98 = vadd.f32 %v70, %v94
  %v99 = vadd.f32 %v71, %v90
  %v100 = vadd.f32 %v72, %v94
  %v101 = vadd.f32 %v73, %v90
  %v102 = vadd.f32 %v74, %v94
  %v103 = vadd.f32 %v75, %v90
  %v104 = vadd.f32 %v76, %v94
  %v105 = vadd.f32 %v77, %v90
  %v106 = vadd.f32 %v78, %v94
  %v107 = vadd.f32 %v79, %v90
  %v108 = vadd.f32 %v80, %v94
  %v109 = vadd.f32 %v81, %v90
  %v110 = vadd.f32 %v82, %v94
  %v111 = vadd.f32 %v83, %v90
  %v112 = vadd.f32 %v84, %v94
  %v113 = vadd.f32 %v97, %v41
  %v114 = vadd.f32 %v98, %v42
  %v115 = vadd.f32 %v99, %v43
  %v116 = vadd.f32 %v100, %v44
  %v117 = vadd.f32 %v101, %v45
  %v118 = vadd.f32 %v102, %v46
  %v119 = vadd.f32 %v103, %v47
  %v120 = vadd.f32 %v104, %v48
  %v121 = vadd.f32 %v105, %v49
  %v122 = vadd.f32 %v106, %v50
  %v123 = vadd.f32 %v107, %v51
  %v124 = vadd.f32 %v108, %v52
  %v125 = vadd.f32 %v109, %v53
  %v126 = vadd.f32 %v110, %v54
  %v127 = vadd.f32 %v111, %v55
  %v128 = vadd.f32 %v112, %v56
  %v129 = vmax.f32 %v113, 0.0
  %v130 = vmax.f32 %v114, 0.0
  %v131 = vmax.f32 %v115, 0.0
  %v132 = vmax.f32 %v116, 0.0
  %v133 = vmax.f32 %v117, 0.0
  %v134 = vmax.f32 %v118, 0.0
  %v135 = vmax.f32 %v119, 0.0
  %v136 = vmax.f32 %v120, 0.0
  %v137 = vmax.f32 %v121, 0.0
  %v138 = vmax.f32 %v122, 0.0
  %v139 = vmax.f32 %v123, 0.0
  %v140 = vmax.f32 %v124, 0.0
  %v141 = vmax.f32 %v125, 0.0
  %v142 = vmax.f32 %v126, 0.0
  %v143 = vmax.f32 %v127, 0.0
  %v144 = vmax.f32 %v128, 0.0
  %145 = vst [vmem:[%s4] sm:$0xff] %v129
  %146 = vst [vmem:[%s4 + $0x8] sm:$0xff] %v130
  %147 = vst [vmem:[%s4 + $0x10] sm:$0xff] %v131
  %148 = vst [vmem:[%s4 + $0x18] sm:$0xff] %v132
  %149 = vst [vmem:[%s4 + $0x20] sm:$0xff] %v133
  %150 = vst [vmem:[%s4 + $0x28] sm:$0xff] %v134
  %151 = vst [vmem:[%s4 + $0x30] sm:$0xff] %v135
  %152 = vst [vmem:[%s4 + $0x38] sm:$0xff] %v136
  %153 = vst [vmem:[%s4 + $0x40] sm:$0xff] %v137
  %154 = vst [vmem:[%s4 + $0x48] sm:$0xff] %v138
  %155 = vst [vmem:[%s4 + $0x50] sm:$0xff] %v139
  %156 = vst [vmem:[%s4 + $0x58] sm:$0xff] %v140
  %157 = vst [vmem:[%s4 + $0x60] sm:$0xff] %v141
  %158 = vst [vmem:[%s4 + $0x68] sm:$0xff] %v142
  %159 = vst [vmem:[%s4 + $0x70] sm:$0xff] %v143
  %160 = vst [vmem:[%s4 + $0x78] sm:$0xff] %v144
  // Predicated region
  $region18: #{unet_up_block_forward.7} parent=0 // pred_check
    _
  $region19: #{unet_up_block_forward.7} parent=0 // pred_check_branch
    %162 = sbr.rel (0) target = $region21
  $region20: #{unet_up_block_forward.7} parent=0 // pred_region
    _
  $region21: #{unet_up_block_forward.7} parent=0 // pred_fallthru
    _
  // Predicated region
  $region22: #{unet_up_block_forward.7} parent=0 // pred_check
    _
  $region23: #{unet_up_block_forward.7} parent=0 // pred_check_branch
    %164 = sbr.rel (0) target = $region25
  $region24: #{unet_up_block_forward.7} parent=0 // pred_region
    _
  $region25: #{unet_up_block_forward.7} parent=0 // pred_fallthru
    _

// kernel: unet_up_block_forward.5
$region0: #{unet_up_block_forward.5}
  #allocation0 [shape = 'u32[]', space=smem, size = 0x4, offset = 0x4, fixed_abs, tag = 'smem constant byte address 0x4 - core index']
  #allocation1 [shape = 'u32[144,128]{1,0:T(1,128)}', space=vmem, size = 0x12000, scoped, tag = 'internal scratch']
  %s0 = inlined_call_operand.vmem [shape: bf16[2,32,256], index: 0, kind: input, shape index: {}]
  %s1 = inlined_call_operand.vmem [shape: bf16[3,256,256], index: 1, kind: input, shape index: {}]
  %s2 = inlined_call_operand.vmem [shape: f32[1,256], index: 2, kind: input, shape index: {}]
  %s3 = inlined_call_operand.vmem [shape: bf16[2,32,256], index: 3, kind: output, shape index: {0}]
  %s4 = inlined_call_operand.vmem [shape: f32[1,1,256], index: 4, kind: output, shape index: {1}]
  %s5 = inlined_call_operand.vmem [shape: f32[1,1,256], index: 5, kind: output, shape index: {2}]
  %6 = xla_tuple %s3, %s4, %s5
  %s7 = sld [smem:[#allocation0]]
  $region38: #{unet_up_block_forward.5} parent=0
    _
  %s9 = ssub.s32 1, %s7
  %s10 = scalar_select 0, %s9, %s7
  // Predicated region
  $region2: #{unet_up_block_forward.5} parent=0 // pred_check
    _
  $region3: #{unet_up_block_forward.5} parent=0 // pred_check_branch
    %12 = sbr.rel (0) target = $region5
  $region4: #{unet_up_block_forward.5} parent=0 // pred_region
    _
  $region5: #{unet_up_block_forward.5} parent=0 // pred_fallthru
    _
  // Predicated region
  $region6: #{unet_up_block_forward.5} parent=0 // pred_check
    _
  $region7: #{unet_up_block_forward.5} parent=0 // pred_check_branch
    %14 = sbr.rel (0) target = $region9
  $region8: #{unet_up_block_forward.5} parent=0 // pred_region
    _
  $region9: #{unet_up_block_forward.5} parent=0 // pred_fallthru
    _
  // Predicated region
  $region10: #{unet_up_block_forward.5} parent=0 // pred_check
    _
  $region11: #{unet_up_block_forward.5} parent=0 // pred_check_branch
    %16 = sbr.rel (0) target = $region13
  $region12: #{unet_up_block_forward.5} parent=0 // pred_region
    _
  $region13: #{unet_up_block_forward.5} parent=0 // pred_fallthru
    _
  %v17 = vld [vmem:[%s0] sm:$0xff]
  %v18 = vld [vmem:[%s0 + $0x8] sm:$0xff]
  %v19 = vld [vmem:[%s0 + $0x10] sm:$0xff]
  %v20 = vld [vmem:[%s0 + $0x18] sm:$0xff]
  %v21 = vld [vmem:[%s0 + $0x20] sm:$0xff]
  %v22 = vld [vmem:[%s0 + $0x28] sm:$0xff]
  %v23 = vld [vmem:[%s0 + $0x30] sm:$0xff]
  %v24 = vld [vmem:[%s0 + $0x38] sm:$0xff]
  %v25 = vld [vmem:[%s1] sm:$0xff]
  %v26 = vld [vmem:[%s1 + $0x8] sm:$0xff]
  %v27 = vld [vmem:[%s1 + $0x10] sm:$0xff]
  %v28 = vld [vmem:[%s1 + $0x18] sm:$0xff]
  %v29 = vld [vmem:[%s1 + $0x20] sm:$0xff]
  %v30 = vld [vmem:[%s1 + $0x28] sm:$0xff]
  %v31 = vld [vmem:[%s1 + $0x30] sm:$0xff]
  %v32 = vld [vmem:[%s1 + $0x38] sm:$0xff]
  %v33 = vld [vmem:[%s1 + $0x40] sm:$0xff]
  %v34 = vld [vmem:[%s1 + $0x48] sm:$0xff]
  %v35 = vld [vmem:[%s1 + $0x50] sm:$0xff]
  %v36 = vld [vmem:[%s1 + $0x58] sm:$0xff]
  %v37 = vld [vmem:[%s1 + $0x60] sm:$0xff]
  %v38 = vld [vmem:[%s1 + $0x68] sm:$0xff]
  %v39 = vld [vmem:[%s1 + $0x70] sm:$0xff]
  %v40 = vld [vmem:[%s1 + $0x78] sm:$0xff]
  %v41 = vld [vmem:[%s1 + $0x80] sm:$0xff]
  %v42 = vld [vmem:[%s1 + $0x88] sm:$0xff]
  %v43 = vld [vmem:[%s1 + $0x90] sm:$0xff]
  %v44 = vld [vmem:[%s1 + $0x98] sm:$0xff]
  %v45 = vld [vmem:[%s1 + $0xa0] sm:$0xff]
  %v46 = vld [vmem:[%s1 + $0xa8] sm:$0xff]
  %v47 = vld [vmem:[%s1 + $0xb0] sm:$0xff]
  %v48 = vld [vmem:[%s1 + $0xb8] sm:$0xff]
  %v49 = vld [vmem:[%s1 + $0xc0] sm:$0xff]
  %v50 = vld [vmem:[%s1 + $0xc8] sm:$0xff]
  %v51 = vld [vmem:[%s1 + $0xd0] sm:$0xff]
  %v52 = vld [vmem:[%s1 + $0xd8] sm:$0xff]
  %v53 = vld [vmem:[%s1 + $0xe0] sm:$0xff]
  %v54 = vld [vmem:[%s1 + $0xe8] sm:$0xff]
  %v55 = vld [vmem:[%s1 + $0xf0] sm:$0xff]
  %v56 = vld [vmem:[%s1 + $0xf8] sm:$0xff]
  %v65 = vunpack.c.l.b16 %v17
  %v66 = vunpack.c.h.b16 %v17
  %v67 = vunpack.c.l.b16 %v18
  %v68 = vunpack.c.h.b16 %v18
  %v69 = vunpack.c.l.b16 %v19
  %v70 = vunpack.c.h.b16 %v19
  %v71 = vunpack.c.l.b16 %v20
  %v72 = vunpack.c.h.b16 %v20
  %v73 = vunpack.c.l.b16 %v21
  %v74 = vunpack.c.h.b16 %v21
  %v75 = vunpack.c.l.b16 %v22
  %v76 = vunpack.c.h.b16 %v22
  %v77 = vunpack.c.l.b16 %v23
  %v78 = vunpack.c.h.b16 %v23
  %v79 = vunpack.c.l.b16 %v24
  %v80 = vunpack.c.h.b16 %v24
  %v81 = vpack.c.b16 %v67, %v65
  %v82 = vpack.c.b16 %v68, %v66
  %v83 = vpack.c.b16 %v71, %v69
  %v84 = vpack.c.b16 %v72, %v70
  %v85 = vpack.c.b16 %v75, %v73
  %v86 = vpack.c.b16 %v76, %v74
  %v87 = vpack.c.b16 %v79, %v77
  %v88 = vpack.c.b16 %v80, %v78
  %v129 = vunpack.c.l.b16 %v25
  %v130 = vunpack.c.h.b16 %v25
  %v131 = vunpack.c.l.b16 %v26
  %v132 = vunpack.c.h.b16 %v26
  %v133 = vunpack.c.l.b16 %v27
  %v134 = vunpack.c.h.b16 %v27
  %v135 = vunpack.c.l.b16 %v28
  %v136 = vunpack.c.h.b16 %v28
  %v137 = vunpack.c.l.b16 %v29
  %v138 = vunpack.c.h.b16 %v29
  %v139 = vunpack.c.l.b16 %v30
  %v140 = vunpack.c.h.b16 %v30
  %v141 = vunpack.c.l.b16 %v31
  %v142 = vunpack.c.h.b16 %v31
  %v143 = vunpack.c.l.b16 %v32
  %v144 = vunpack.c.h.b16 %v32
  %v145 = vunpack.c.l.b16 %v33
  %v146 = vunpack.c.h.b16 %v33
  %v147 = vunpack.c.l.b16 %v34
  %v148 = vunpack.c.h.b16 %v34
  %v149 = vunpack.c.l.b16 %v35
  %v150 = vunpack.c.h.b16 %v35
  %v151 = vunpack.c.l.b16 %v36
  %v152 = vunpack.c.h.b16 %v36
  %v153 = vunpack.c.l.b16 %v37
  %v154 = vunpack.c.h.b16 %v37
  %v155 = vunpack.c.l.b16 %v38
  %v156 = vunpack.c.h.b16 %v38
  %v157 = vunpack.c.l.b16 %v39
  %v158 = vunpack.c.h.b16 %v39
  %v159 = vunpack.c.l.b16 %v40
  %v160 = vunpack.c.h.b16 %v40
  %v161 = vunpack.c.l.b16 %v41
  %v162 = vunpack.c.h.b16 %v41
  %v163 = vunpack.c.l.b16 %v42
  %v164 = vunpack.c.h.b16 %v42
  %v165 = vunpack.c.l.b16 %v43
  %v166 = vunpack.c.h.b16 %v43
  %v167 = vunpack.c.l.b16 %v44
  %v168 = vunpack.c.h.b16 %v44
  %v169 = vunpack.c.l.b16 %v45
  %v170 = vunpack.c.h.b16 %v45
  %v171 = vunpack.c.l.b16 %v46
  %v172 = vunpack.c.h.b16 %v46
  %v173 = vunpack.c.l.b16 %v47
  %v174 = vunpack.c.h.b16 %v47
  %v175 = vunpack.c.l.b16 %v48
  %v176 = vunpack.c.h.b16 %v48
  %v177 = vunpack.c.l.b16 %v49
  %v178 = vunpack.c.h.b16 %v49
  %v179 = vunpack.c.l.b16 %v50
  %v180 = vunpack.c.h.b16 %v50
  %v181 = vunpack.c.l.b16 %v51
  %v182 = vunpack.c.h.b16 %v51
  %v183 = vunpack.c.l.b16 %v52
  %v184 = vunpack.c.h.b16 %v52
  %v185 = vunpack.c.l.b16 %v53
  %v186 = vunpack.c.h.b16 %v53
  %v187 = vunpack.c.l.b16 %v54
  %v188 = vunpack.c.h.b16 %v54
  %v189 = vunpack.c.l.b16 %v55
  %v190 = vunpack.c.h.b16 %v55
  %v191 = vunpack.c.l.b16 %v56
  %v192 = vunpack.c.h.b16 %v56
  %v193 = vpack.c.b16 %v131, %v129
  %v194 = vpack.c.b16 %v132, %v130
  %v195 = vpack.c.b16 %v135, %v133
  %v196 = vpack.c.b16 %v136, %v134
  %v197 = vpack.c.b16 %v139, %v137
  %v198 = vpack.c.b16 %v140, %v138
  %v199 = vpack.c.b16 %v143, %v141
  %v200 = vpack.c.b16 %v144, %v142
  %v201 = vpack.c.b16 %v147, %v145
  %v202 = vpack.c.b16 %v148, %v146
  %v203 = vpack.c.b16 %v151, %v149
  %v204 = vpack.c.b16 %v152, %v150
  %v205 = vpack.c.b16 %v155, %v153
  %v206 = vpack.c.b16 %v156, %v154
  %v207 = vpack.c.b16 %v159, %v157
  %v208 = vpack.c.b16 %v160, %v158
  %v209 = vpack.c.b16 %v163, %v161
  %v210 = vpack.c.b16 %v164, %v162
  %v211 = vpack.c.b16 %v167, %v165
  %v212 = vpack.c.b16 %v168, %v166
  %v213 = vpack.c.b16 %v171, %v169
  %v214 = vpack.c.b16 %v172, %v170
  %v215 = vpack.c.b16 %v175, %v173
  %v216 = vpack.c.b16 %v176, %v174
  %v217 = vpack.c.b16 %v179, %v177
  %v218 = vpack.c.b16 %v180, %v178
  %v219 = vpack.c.b16 %v183, %v181
  %v220 = vpack.c.b16 %v184, %v182
  %v221 = vpack.c.b16 %v187, %v185
  %v222 = vpack.c.b16 %v188, %v186
  %v223 = vpack.c.b16 %v191, %v189
  %v224 = vpack.c.b16 %v192, %v190
  %257 = vmatprep.subr.bf16.mxu0 %v194
  %258 = vmatpush1.bf16.msra.mxu0 %v193
  %259 = vmatprep.subr.bf16.mxu0 %v196
  %260 = vmatpush1.bf16.msra.mxu0 %v195
  %261 = vmatprep.subr.bf16.mxu0 %v198
  %262 = vmatpush1.bf16.msra.mxu0 %v197
  %263 = vmatprep.subr.bf16.mxu0 %v200
  %264 = vmatpush1.bf16.msra.mxu0 %v199
  %265 = vmatprep.subr.bf16.mxu0 %v202
  %266 = vmatpush1.bf16.msra.mxu0 %v201
  %267 = vmatprep.subr.bf16.mxu0 %v204
  %268 = vmatpush1.bf16.msra.mxu0 %v203
  %269 = vmatprep.subr.bf16.mxu0 %v206
  %270 = vmatpush1.bf16.msra.mxu0 %v205
  %271 = vmatprep.subr.bf16.mxu0 %v208
  %272 = vmatpush1.bf16.msra.mxu0 %v207
  %273 = vmatprep.subr.bf16.mxu0 %v210
  %274 = vmatpush1.bf16.msra.mxu0 %v209
  %275 = vmatprep.subr.bf16.mxu0 %v212
  %276 = vmatpush1.bf16.msra.mxu0 %v211
  %277 = vmatprep.subr.bf16.mxu0 %v214
  %278 = vmatpush1.bf16.msra.mxu0 %v213
  %279 = vmatprep.subr.bf16.mxu0 %v216
  %280 = vmatpush1.bf16.msra.mxu0 %v215
  %281 = vmatprep.subr.bf16.mxu0 %v218
  %282 = vmatpush1.bf16.msra.mxu0 %v217
  %283 = vmatprep.subr.bf16.mxu0 %v220
  %284 = vmatpush1.bf16.msra.mxu0 %v219
  %285 = vmatprep.subr.bf16.mxu0 %v222
  %286 = vmatpush1.bf16.msra.mxu0 %v221
  %287 = vmatprep.subr.bf16.mxu0 %v224
  %288 = vmatpush1.bf16.msra.mxu0 %v223
  %289 = vmatprep.mubr.bf16.mxu0 %v82
  %290 = vmatmul.mubr.bf16.gmra.mrb[0].mxu0 %v81
  %v291 = vpop.f32.mrb[0].mxu0
  %v292 = vadd.f32 0.0, %v291
  %v293 = vpop.f32.mrb[0].mxu0
  %v294 = vadd.f32 0.0, %v293
  %v295 = vpop.f32.mrb[0].mxu0
  %v296 = vadd.f32 0.0, %v295
  %v297 = vpop.f32.mrb[0].mxu0
  %v298 = vadd.f32 0.0, %v297
  %299 = vmatprep.mubr.bf16.mxu0 %v84
  %300 = vmatmul.mubr.bf16.gmra.mrb[0].mxu0 %v83
  %v301 = vpop.f32.mrb[0].mxu0
  %v302 = vadd.f32 0.0, %v301
  %v303 = vpop.f32.mrb[0].mxu0
  %v304 = vadd.f32 0.0, %v303
  %v305 = vpop.f32.mrb[0].mxu0
  %v306 = vadd.f32 0.0, %v305
  %v307 = vpop.f32.mrb[0].mxu0
  %v308 = vadd.f32 0.0, %v307
  %309 = vmatprep.mubr.bf16.mxu0 %v86
  %310 = vmatmul.mubr.bf16.gmra.mrb[0].mxu0 %v85
  %v311 = vpop.f32.mrb[0].mxu0
  %v312 = vadd.f32 0.0, %v311
  %v313 = vpop.f32.mrb[0].mxu0
  %v314 = vadd.f32 0.0, %v313
  %v315 = vpop.f32.mrb[0].mxu0
  %v316 = vadd.f32 0.0, %v315
  %v317 = vpop.f32.mrb[0].mxu0
  %v318 = vadd.f32 0.0, %v317
  %319 = vmatprep.mubr.bf16.mxu0 %v88
  %320 = vmatmul.mubr.bf16.gmra.mrb[0].mxu0 %v87
  %v321 = vpop.f32.mrb[0].mxu0
  %v322 = vadd.f32 0.0, %v321
  %v323 = vpop.f32.mrb[0].mxu0
  %v324 = vadd.f32 0.0, %v323
  %v325 = vpop.f32.mrb[0].mxu0
  %v326 = vadd.f32 0.0, %v325
  %v327 = vpop.f32.mrb[0].mxu0
  %v328 = vadd.f32 0.0, %v327
  %329 = vdwg.mxu0
  %s330 = scalar_lea.vmem %s1, 256
  %v331 = vld [vmem:[%s330] sm:$0xff]
  %v332 = vld [vmem:[%s330 + $0x8] sm:$0xff]
  %v333 = vld [vmem:[%s330 + $0x10] sm:$0xff]
  %v334 = vld [vmem:[%s330 + $0x18] sm:$0xff]
  %v335 = vld [vmem:[%s330 + $0x20] sm:$0xff]
  %v336 = vld [vmem:[%s330 + $0x28] sm:$0xff]
  %v337 = vld [vmem:[%s330 + $0x30] sm:$0xff]
  %v338 = vld [vmem:[%s330 + $0x38] sm:$0xff]
  %v339 = vld [vmem:[%s330 + $0x40] sm:$0xff]
  %v340 = vld [vmem:[%s330 + $0x48] sm:$0xff]
  %v341 = vld [vmem:[%s330 + $0x50] sm:$0xff]
  %v342 = vld [vmem:[%s330 + $0x58] sm:$0xff]
  %v343 = vld [vmem:[%s330 + $0x60] sm:$0xff]
  %v344 = vld [vmem:[%s330 + $0x68] sm:$0xff]
  %v345 = vld [vmem:[%s330 + $0x70] sm:$0xff]
  %v346 = vld [vmem:[%s330 + $0x78] sm:$0xff]
  %v347 = vld [vmem:[%s330 + $0x80] sm:$0xff]
  %v348 = vld [vmem:[%s330 + $0x88] sm:$0xff]
  %v349 = vld [vmem:[%s330 + $0x90] sm:$0xff]
  %v350 = vld [vmem:[%s330 + $0x98] sm:$0xff]
  %v351 = vld [vmem:[%s330 + $0xa0] sm:$0xff]
  %v352 = vld [vmem:[%s330 + $0xa8] sm:$0xff]
  %v353 = vld [vmem:[%s330 + $0xb0] sm:$0xff]
  %v354 = vld [vmem:[%s330 + $0xb8] sm:$0xff]
  %v355 = vld [vmem:[%s330 + $0xc0] sm:$0xff]
  %v356 = vld [vmem:[%s330 + $0xc8] sm:$0xff]
  %v357 = vld [vmem:[%s330 + $0xd0] sm:$0xff]
  %v358 = vld [vmem:[%s330 + $0xd8] sm:$0xff]
  %v359 = vld [vmem:[%s330 + $0xe0] sm:$0xff]
  %v360 = vld [vmem:[%s330 + $0xe8] sm:$0xff]
  %v361 = vld [vmem:[%s330 + $0xf0] sm:$0xff]
  %v362 = vld [vmem:[%s330 + $0xf8] sm:$0xff]
  %s363 = scalar_lea.vmem %s1, 512
  %v364 = vld [vmem:[%s363] sm:$0xff]
  %v365 = vld [vmem:[%s363 + $0x8] sm:$0xff]
  %v366 = vld [vmem:[%s363 + $0x10] sm:$0xff]
  %v367 = vld [vmem:[%s363 + $0x18] sm:$0xff]
  %v368 = vld [vmem:[%s363 + $0x20] sm:$0xff]
  %v369 = vld [vmem:[%s363 + $0x28] sm:$0xff]
  %v370 = vld [vmem:[%s363 + $0x30] sm:$0xff]
  %v371 = vld [vmem:[%s363 + $0x38] sm:$0xff]
  %v372 = vld [vmem:[%s363 + $0x40] sm:$0xff]
  %v373 = vld [vmem:[%s363 + $0x48] sm:$0xff]
  %v374 = vld [vmem:[%s363 + $0x50] sm:$0xff]
  %v375 = vld [vmem:[%s363 + $0x58] sm:$0xff]
  %v376 = vld [vmem:[%s363 + $0x60] sm:$0xff]
  %v377 = vld [vmem:[%s363 + $0x68] sm:$0xff]
  %v378 = vld [vmem:[%s363 + $0x70] sm:$0xff]
  %v379 = vld [vmem:[%s363 + $0x78] sm:$0xff]
  %v380 = vld [vmem:[%s363 + $0x80] sm:$0xff]
  %v381 = vld [vmem:[%s363 + $0x88] sm:$0xff]
  %v382 = vld [vmem:[%s363 + $0x90] sm:$0xff]
  %v383 = vld [vmem:[%s363 + $0x98] sm:$0xff]
  %v384 = vld [vmem:[%s363 + $0xa0] sm:$0xff]
  %v385 = vld [vmem:[%s363 + $0xa8] sm:$0xff]
  %v386 = vld [vmem:[%s363 + $0xb0] sm:$0xff]
  %v387 = vld [vmem:[%s363 + $0xb8] sm:$0xff]
  %v388 = vld [vmem:[%s363 + $0xc0] sm:$0xff]
  %v389 = vld [vmem:[%s363 + $0xc8] sm:$0xff]
  %v390 = vld [vmem:[%s363 + $0xd0] sm:$0xff]
  %v391 = vld [vmem:[%s363 + $0xd8] sm:$0xff]
  %v392 = vld [vmem:[%s363 + $0xe0] sm:$0xff]
  %v393 = vld [vmem:[%s363 + $0xe8] sm:$0xff]
  %v394 = vld [vmem:[%s363 + $0xf0] sm:$0xff]
  %v395 = vld [vmem:[%s363 + $0xf8] sm:$0xff]
  %v428 = vunpack.c.l.b16 %v364
  %v429 = vunpack.c.h.b16 %v364
  %v430 = vunpack.c.l.b16 %v365
  %v431 = vunpack.c.h.b16 %v365
  %v432 = vunpack.c.l.b16 %v366
  %v433 = vunpack.c.h.b16 %v366
  %v434 = vunpack.c.l.b16 %v367
  %v435 = vunpack.c.h.b16 %v367
  %v436 = vunpack.c.l.b16 %v368
  %v437 = vunpack.c.h.b16 %v368
  %v438 = vunpack.c.l.b16 %v369
  %v439 = vunpack.c.h.b16 %v369
  %v440 = vunpack.c.l.b16 %v370
  %v441 = vunpack.c.h.b16 %v370
  %v442 = vunpack.c.l.b16 %v371
  %v443 = vunpack.c.h.b16 %v371
  %v444 = vunpack.c.l.b16 %v372
  %v445 = vunpack.c.h.b16 %v372
  %v446 = vunpack.c.l.b16 %v373
  %v447 = vunpack.c.h.b16 %v373
  %v448 = vunpack.c.l.b16 %v374
  %v449 = vunpack.c.h.b16 %v374
  %v450 = vunpack.c.l.b16 %v375
  %v451 = vunpack.c.h.b16 %v375
  %v452 = vunpack.c.l.b16 %v376
  %v453 = vunpack.c.h.b16 %v376
  %v454 = vunpack.c.l.b16 %v377
  %v455 = vunpack.c.h.b16 %v377
  %v456 = vunpack.c.l.b16 %v378
  %v457 = vunpack.c.h.b16 %v378
  %v458 = vunpack.c.l.b16 %v379
  %v459 = vunpack.c.h.b16 %v379
  %v460 = vunpack.c.l.b16 %v380
  %v461 = vunpack.c.h.b16 %v380
  %v462 = vunpack.c.l.b16 %v381
  %v463 = vunpack.c.h.b16 %v381
  %v464 = vunpack.c.l.b16 %v382
  %v465 = vunpack.c.h.b16 %v382
  %v466 = vunpack.c.l.b16 %v383
  %v467 = vunpack.c.h.b16 %v383
  %v468 = vunpack.c.l.b16 %v384
  %v469 = vunpack.c.h.b16 %v384
  %v470 = vunpack.c.l.b16 %v385
  %v471 = vunpack.c.h.b16 %v385
  %v472 = vunpack.c.l.b16 %v386
  %v473 = vunpack.c.h.b16 %v386
  %v474 = vunpack.c.l.b16 %v387
  %v475 = vunpack.c.h.b16 %v387
  %v476 = vunpack.c.l.b16 %v388
  %v477 = vunpack.c.h.b16 %v388
  %v478 = vunpack.c.l.b16 %v389
  %v479 = vunpack.c.h.b16 %v389
  %v480 = vunpack.c.l.b16 %v390
  %v481 = vunpack.c.h.b16 %v390
  %v482 = vunpack.c.l.b16 %v391
  %v483 = vunpack.c.h.b16 %v391
  %v484 = vunpack.c.l.b16 %v392
  %v485 = vunpack.c.h.b16 %v392
  %v486 = vunpack.c.l.b16 %v393
  %v487 = vunpack.c.h.b16 %v393
  %v488 = vunpack.c.l.b16 %v394
  %v489 = vunpack.c.h.b16 %v394
  %v490 = vunpack.c.l.b16 %v395
  %v491 = vunpack.c.h.b16 %v395
  %v492 = vpack.c.b16 %v430, %v428
  %v493 = vpack.c.b16 %v431, %v429
  %v494 = vpack.c.b16 %v434, %v432
  %v495 = vpack.c.b16 %v435, %v433
  %v496 = vpack.c.b16 %v438, %v436
  %v497 = vpack.c.b16 %v439, %v437
  %v498 = vpack.c.b16 %v442, %v440
  %v499 = vpack.c.b16 %v443, %v441
  %v500 = vpack.c.b16 %v446, %v444
  %v501 = vpack.c.b16 %v447, %v445
  %v502 = vpack.c.b16 %v450, %v448
  %v503 = vpack.c.b16 %v451, %v449
  %v504 = vpack.c.b16 %v454, %v452
  %v505 = vpack.c.b16 %v455, %v453
  %v506 = vpack.c.b16 %v458, %v456
  %v507 = vpack.c.b16 %v459, %v457
  %v508 = vpack.c.b16 %v462, %v460
  %v509 = vpack.c.b16 %v463, %v461
  %v510 = vpack.c.b16 %v466, %v464
  %v511 = vpack.c.b16 %v467, %v465
  %v512 = vpack.c.b16 %v470, %v468
  %v513 = vpack.c.b16 %v471, %v469
  %v514 = vpack.c.b16 %v474, %v472
  %v515 = vpack.c.b16 %v475, %v473
  %v516 = vpack.c.b16 %v478, %v476
  %v517 = vpack.c.b16 %v479, %v477
  %v518 = vpack.c.b16 %v482, %v480
  %v519 = vpack.c.b16 %v483, %v481
  %v520 = vpack.c.b16 %v486, %v484
  %v521 = vpack.c.b16 %v487, %v485
  %v522 = vpack.c.b16 %v490, %v488
  %v523 = vpack.c.b16 %v491, %v489
  %556 = vmatprep.subr.bf16.mxu0 %v493
  %557 = vmatpush1.bf16.msra.mxu0 %v492
  %558 = vmatprep.subr.bf16.mxu0 %v495
  %559 = vmatpush1.bf16.msra.mxu0 %v494
  %560 = vmatprep.subr.bf16.mxu0 %v497
  %561 = vmatpush1.bf16.msra.mxu0 %v496
  %562 = vmatprep.subr.bf16.mxu0 %v499
  %563 = vmatpush1.bf16.msra.mxu0 %v498
  %564 = vmatprep.subr.bf16.mxu0 %v501
  %565 = vmatpush1.bf16.msra.mxu0 %v500
  %566 = vmatprep.subr.bf16.mxu0 %v503
  %567 = vmatpush1.bf16.msra.mxu0 %v502
  %568 = vmatprep.subr.bf16.mxu0 %v505
  %569 = vmatpush1.bf16.msra.mxu0 %v504
  %570 = vmatprep.subr.bf16.mxu0 %v507
  %571 = vmatpush1.bf16.msra.mxu0 %v506
  %572 = vmatprep.subr.bf16.mxu0 %v509
  %573 = vmatpush1.bf16.msra.mxu0 %v508
  %574 = vmatprep.subr.bf16.mxu0 %v511
  %575 = vmatpush1.bf16.msra.mxu0 %v510
  %576 = vmatprep.subr.bf16.mxu0 %v513
  %577 = vmatpush1.bf16.msra.mxu0 %v512
  %578 = vmatprep.subr.bf16.mxu0 %v515
  %579 = vmatpush1.bf16.msra.mxu0 %v514
  %580 = vmatprep.subr.bf16.mxu0 %v517
  %581 = vmatpush1.bf16.msra.mxu0 %v516
  %582 = vmatprep.subr.bf16.mxu0 %v519
  %583 = vmatpush1.bf16.msra.mxu0 %v518
  %584 = vmatprep.subr.bf16.mxu0 %v521
  %585 = vmatpush1.bf16.msra.mxu0 %v520
  %586 = vmatprep.subr.bf16.mxu0 %v523
  %587 = vmatpush1.bf16.msra.mxu0 %v522
  %588 = vmatprep.mubr.bf16.mxu0 %v82
  %589 = vmatmul.mubr.bf16.gmra.mrb[0].mxu0 %v81
  %v590 = vpop.f32.mrb[0].mxu0
  %v591 = vadd.f32 0.0, %v590
  %v592 = vpop.f32.mrb[0].mxu0
  %v593 = vadd.f32 0.0, %v592
  %v594 = vpop.f32.mrb[0].mxu0
  %v595 = vadd.f32 0.0, %v594
  %v596 = vpop.f32.mrb[0].mxu0
  %v597 = vadd.f32 0.0, %v596
  %598 = vmatprep.mubr.bf16.mxu0 %v84
  %599 = vmatmul.mubr.bf16.gmra.mrb[0].mxu0 %v83
  %v600 = vpop.f32.mrb[0].mxu0
  %v601 = vadd.f32 0.0, %v600
  %v602 = vpop.f32.mrb[0].mxu0
  %v603 = vadd.f32 0.0, %v602
  %v604 = vpop.f32.mrb[0].mxu0
  %v605 = vadd.f32 0.0, %v604
  %v606 = vpop.f32.mrb[0].mxu0
  %v607 = vadd.f32 0.0, %v606
  %608 = vmatprep.mubr.bf16.mxu0 %v86
  %609 = vmatmul.mubr.bf16.gmra.mrb[0].mxu0 %v85
  %v610 = vpop.f32.mrb[0].mxu0
  %v611 = vadd.f32 0.0, %v610
  %v612 = vpop.f32.mrb[0].mxu0
  %v613 = vadd.f32 0.0, %v612
  %v614 = vpop.f32.mrb[0].mxu0
  %v615 = vadd.f32 0.0, %v614
  %v616 = vpop.f32.mrb[0].mxu0
  %v617 = vadd.f32 0.0, %v616
  %618 = vmatprep.mubr.bf16.mxu0 %v88
  %619 = vmatmul.mubr.bf16.gmra.mrb[0].mxu0 %v87
  %v620 = vpop.f32.mrb[0].mxu0
  %v621 = vadd.f32 0.0, %v620
  %v622 = vpop.f32.mrb[0].mxu0
  %v623 = vadd.f32 0.0, %v622
  %v624 = vpop.f32.mrb[0].mxu0
  %v625 = vadd.f32 0.0, %v624
  %v626 = vpop.f32.mrb[0].mxu0
  %v627 = vadd.f32 0.0, %v626
  %628 = vdwg.mxu0
  %v629 = vlaneseq
  %v630 = vshrl.u32 %v629, 7
  %v631 = vadd.s32 %v630, 8
  %v632 = vadd.s32 %v630, 16
  %v633 = vadd.s32 %v630, 24
  %v634 = vadd.s32 %v630, 32
  %v635 = vadd.s32 %v630, 40
  %v636 = vadd.s32 %v630, 48
  %v637 = vadd.s32 %v630, 56
  %vm638 = vcmp.lt.s32.totalorder %v630, 0
  %v639 = vsub.s32 0, %v630
  %v640 = vsel %vm638, %v639, %v630
  %v641 = vshrl.u32 %v640, 5
  %v642 = vand.u32 %v640, 31
  %v643 = vsub.s32 0, %v642
  %v644 = vsel %vm638, %v643, %v642
  %vm645 = vcmp.lt.s32.totalorder %v631, 0
  %v646 = vsub.s32 0, %v631
  %v647 = vsel %vm645, %v646, %v631
  %v648 = vshrl.u32 %v647, 5
  %v649 = vand.u32 %v647, 31
  %v650 = vsub.s32 0, %v649
  %v651 = vsel %vm645, %v650, %v649
  %vm652 = vcmp.lt.s32.totalorder %v632, 0
  %v653 = vsub.s32 0, %v632
  %v654 = vsel %vm652, %v653, %v632
  %v655 = vshrl.u32 %v654, 5
  %v656 = vand.u32 %v654, 31
  %v657 = vsub.s32 0, %v656
  %v658 = vsel %vm652, %v657, %v656
  %vm659 = vcmp.lt.s32.totalorder %v633, 0
  %v660 = vsub.s32 0, %v633
  %v661 = vsel %vm659, %v660, %v633
  %v662 = vshrl.u32 %v661, 5
  %v663 = vand.u32 %v661, 31
  %v664 = vsub.s32 0, %v663
  %v665 = vsel %vm659, %v664, %v663
  %vm666 = vcmp.lt.s32.totalorder %v634, 0
  %v667 = vsub.s32 0, %v634
  %v668 = vsel %vm666, %v667, %v634
  %v669 = vshrl.u32 %v668, 5
  %v670 = vand.u32 %v668, 31
  %v671 = vsub.s32 0, %v670
  %v672 = vsel %vm666, %v671, %v670
  %vm673 = vcmp.lt.s32.totalorder %v635, 0
  %v674 = vsub.s32 0, %v635
  %v675 = vsel %vm673, %v674, %v635
  %v676 = vshrl.u32 %v675, 5
  %v677 = vand.u32 %v675, 31
  %v678 = vsub.s32 0, %v677
  %v679 = vsel %vm673, %v678, %v677
  %vm680 = vcmp.lt.s32.totalorder %v636, 0
  %v681 = vsub.s32 0, %v636
  %v682 = vsel %vm680, %v681, %v636
  %v683 = vshrl.u32 %v682, 5
  %v684 = vand.u32 %v682, 31
  %v685 = vsub.s32 0, %v684
  %v686 = vsel %vm680, %v685, %v684
  %vm687 = vcmp.lt.s32.totalorder %v637, 0
  %v688 = vsub.s32 0, %v637
  %v689 = vsel %vm687, %v688, %v637
  %v690 = vshrl.u32 %v689, 5
  %v691 = vand.u32 %v689, 31
  %v692 = vsub.s32 0, %v691
  %v693 = vsel %vm687, %v692, %v691
  %vm694 = vcmp.ne.s32.totalorder %v644, 0
  %vm695 = vcmp.ne.s32.totalorder %v651, 0
  %vm696 = vcmp.ne.s32.totalorder %v658, 0
  %vm697 = vcmp.ne.s32.totalorder %v665, 0
  %vm698 = vcmp.ne.s32.totalorder %v672, 0
  %vm699 = vcmp.ne.s32.totalorder %v679, 0
  %vm700 = vcmp.ne.s32.totalorder %v686, 0
  %vm701 = vcmp.ne.s32.totalorder %v693, 0
  %vm702 = vcmp.lt.s32.totalorder %v644, 0
  %vm703 = vcmp.lt.s32.totalorder %v651, 0
  %vm704 = vcmp.lt.s32.totalorder %v658, 0
  %vm705 = vcmp.lt.s32.totalorder %v665, 0
  %vm706 = vcmp.lt.s32.totalorder %v672, 0
  %vm707 = vcmp.lt.s32.totalorder %v679, 0
  %vm708 = vcmp.lt.s32.totalorder %v686, 0
  %vm709 = vcmp.lt.s32.totalorder %v693, 0
  %vm710 = vmand %vm702, %vm694
  %vm711 = vmand %vm703, %vm695
  %vm712 = vmand %vm704, %vm696
  %vm713 = vmand %vm705, %vm697
  %vm714 = vmand %vm706, %vm698
  %vm715 = vmand %vm707, %vm699
  %vm716 = vmand %vm708, %vm700
  %vm717 = vmand %vm709, %vm701
  %v718 = vadd.s32 %v644, 32
  %v719 = vadd.s32 %v651, 32
  %v720 = vadd.s32 %v658, 32
  %v721 = vadd.s32 %v665, 32
  %v722 = vadd.s32 %v672, 32
  %v723 = vadd.s32 %v679, 32
  %v724 = vadd.s32 %v686, 32
  %v725 = vadd.s32 %v693, 32
  %v726 = vsel %vm710, %v718, %v644
  %v727 = vsel %vm711, %v719, %v651
  %v728 = vsel %vm712, %v720, %v658
  %v729 = vsel %vm713, %v721, %v665
  %v730 = vsel %vm714, %v722, %v672
  %v731 = vsel %vm715, %v723, %v679
  %v732 = vsel %vm716, %v724, %v686
  %v733 = vsel %vm717, %v725, %v693
  %v734 = vld [vmem:[%s2] sm:$0x3]
  %v736 = vlaneseq
  %v737 = vshrl.u32 %v736, 7
  %v738 = vsub.s32 0, %v737
  %v739 = vrot.slane %v734, %v738
  %v740 = vlaneseq
  %v741 = vshrl.u32 %v740, 7
  %v742 = vsub.s32 1, %v741
  %v743 = vrot.slane %v734, %v742
  %v778 = vunpack.c.l.b16 %v331
  %v779 = vunpack.c.h.b16 %v331
  %v780 = vunpack.c.l.b16 %v332
  %v781 = vunpack.c.h.b16 %v332
  %v782 = vunpack.c.l.b16 %v333
  %v783 = vunpack.c.h.b16 %v333
  %v784 = vunpack.c.l.b16 %v334
  %v785 = vunpack.c.h.b16 %v334
  %v786 = vunpack.c.l.b16 %v335
  %v787 = vunpack.c.h.b16 %v335
  %v788 = vunpack.c.l.b16 %v336
  %v789 = vunpack.c.h.b16 %v336
  %v790 = vunpack.c.l.b16 %v337
  %v791 = vunpack.c.h.b16 %v337
  %v792 = vunpack.c.l.b16 %v338
  %v793 = vunpack.c.h.b16 %v338
  %v794 = vunpack.c.l.b16 %v339
  %v795 = vunpack.c.h.b16 %v339
  %v796 = vunpack.c.l.b16 %v340
  %v797 = vunpack.c.h.b16 %v340
  %v798 = vunpack.c.l.b16 %v341
  %v799 = vunpack.c.h.b16 %v341
  %v800 = vunpack.c.l.b16 %v342
  %v801 = vunpack.c.h.b16 %v342
  %v802 = vunpack.c.l.b16 %v343
  %v803 = vunpack.c.h.b16 %v343
  %v804 = vunpack.c.l.b16 %v344
  %v805 = vunpack.c.h.b16 %v344
  %v806 = vunpack.c.l.b16 %v345
  %v807 = vunpack.c.h.b16 %v345
  %v808 = vunpack.c.l.b16 %v346
  %v809 = vunpack.c.h.b16 %v346
  %v810 = vunpack.c.l.b16 %v347
  %v811 = vunpack.c.h.b16 %v347
  %v812 = vunpack.c.l.b16 %v348
  %v813 = vunpack.c.h.b16 %v348
  %v814 = vunpack.c.l.b16 %v349
  %v815 = vunpack.c.h.b16 %v349
  %v816 = vunpack.c.l.b16 %v350
  %v817 = vunpack.c.h.b16 %v350
  %v818 = vunpack.c.l.b16 %v351
  %v819 = vunpack.c.h.b16 %v351
  %v820 = vunpack.c.l.b16 %v352
  %v821 = vunpack.c.h.b16 %v352
  %v822 = vunpack.c.l.b16 %v353
  %v823 = vunpack.c.h.b16 %v353
  %v824 = vunpack.c.l.b16 %v354
  %v825 = vunpack.c.h.b16 %v354
  %v826 = vunpack.c.l.b16 %v355
  %v827 = vunpack.c.h.b16 %v355
  %v828 = vunpack.c.l.b16 %v356
  %v829 = vunpack.c.h.b16 %v356
  %v830 = vunpack.c.l.b16 %v357
  %v831 = vunpack.c.h.b16 %v357
  %v832 = vunpack.c.l.b16 %v358
  %v833 = vunpack.c.h.b16 %v358
  %v834 = vunpack.c.l.b16 %v359
  %v835 = vunpack.c.h.b16 %v359
  %v836 = vunpack.c.l.b16 %v360
  %v837 = vunpack.c.h.b16 %v360
  %v838 = vunpack.c.l.b16 %v361
  %v839 = vunpack.c.h.b16 %v361
  %v840 = vunpack.c.l.b16 %v362
  %v841 = vunpack.c.h.b16 %v362
  %v842 = vpack.c.b16 %v780, %v778
  %v843 = vpack.c.b16 %v781, %v779
  %v844 = vpack.c.b16 %v784, %v782
  %v845 = vpack.c.b16 %v785, %v783
  %v846 = vpack.c.b16 %v788, %v786
  %v847 = vpack.c.b16 %v789, %v787
  %v848 = vpack.c.b16 %v792, %v790
  %v849 = vpack.c.b16 %v793, %v791
  %v850 = vpack.c.b16 %v796, %v794
  %v851 = vpack.c.b16 %v797, %v795
  %v852 = vpack.c.b16 %v800, %v798
  %v853 = vpack.c.b16 %v801, %v799
  %v854 = vpack.c.b16 %v804, %v802
  %v855 = vpack.c.b16 %v805, %v803
  %v856 = vpack.c.b16 %v808, %v806
  %v857 = vpack.c.b16 %v809, %v807
  %v858 = vpack.c.b16 %v812, %v810
  %v859 = vpack.c.b16 %v813, %v811
  %v860 = vpack.c.b16 %v816, %v814
  %v861 = vpack.c.b16 %v817, %v815
  %v862 = vpack.c.b16 %v820, %v818
  %v863 = vpack.c.b16 %v821, %v819
  %v864 = vpack.c.b16 %v824, %v822
  %v865 = vpack.c.b16 %v825, %v823
  %v866 = vpack.c.b16 %v828, %v826
  %v867 = vpack.c.b16 %v829, %v827
  %v868 = vpack.c.b16 %v832, %v830
  %v869 = vpack.c.b16 %v833, %v831
  %v870 = vpack.c.b16 %v836, %v834
  %v871 = vpack.c.b16 %v837, %v835
  %v872 = vpack.c.b16 %v840, %v838
  %v873 = vpack.c.b16 %v841, %v839
  %906 = vmatprep.subr.bf16.mxu0 %v843
  %907 = vmatpush1.bf16.msra.mxu0 %v842
  %908 = vmatprep.subr.bf16.mxu0 %v845
  %909 = vmatpush1.bf16.msra.mxu0 %v844
  %910 = vmatprep.subr.bf16.mxu0 %v847
  %911 = vmatpush1.bf16.msra.mxu0 %v846
  %912 = vmatprep.subr.bf16.mxu0 %v849
  %913 = vmatpush1.bf16.msra.mxu0 %v848
  %914 = vmatprep.subr.bf16.mxu0 %v851
  %915 = vmatpush1.bf16.msra.mxu0 %v850
  %916 = vmatprep.subr.bf16.mxu0 %v853
  %917 = vmatpush1.bf16.msra.mxu0 %v852
  %918 = vmatprep.subr.bf16.mxu0 %v855
  %919 = vmatpush1.bf16.msra.mxu0 %v854
  %920 = vmatprep.subr.bf16.mxu0 %v857
  %921 = vmatpush1.bf16.msra.mxu0 %v856
  %922 = vmatprep.subr.bf16.mxu0 %v859
  %923 = vmatpush1.bf16.msra.mxu0 %v858
  %924 = vmatprep.subr.bf16.mxu0 %v861
  %925 = vmatpush1.bf16.msra.mxu0 %v860
  %926 = vmatprep.subr.bf16.mxu0 %v863
  %927 = vmatpush1.bf16.msra.mxu0 %v862
  %928 = vmatprep.subr.bf16.mxu0 %v865
  %929 = vmatpush1.bf16.msra.mxu0 %v864
  %930 = vmatprep.subr.bf16.mxu0 %v867
  %931 = vmatpush1.bf16.msra.mxu0 %v866
  %932 = vmatprep.subr.bf16.mxu0 %v869
  %933 = vmatpush1.bf16.msra.mxu0 %v868
  %934 = vmatprep.subr.bf16.mxu0 %v871
  %935 = vmatpush1.bf16.msra.mxu0 %v870
  %936 = vmatprep.subr.bf16.mxu0 %v873
  %937 = vmatpush1.bf16.msra.mxu0 %v872
  %938 = vmatprep.mubr.bf16.mxu0 %v82
  %939 = vmatmul.mubr.bf16.gmra.mrb[0].mxu0 %v81
  %v940 = vpop.f32.mrb[0].mxu0
  %v941 = vadd.f32 %v739, %v940
  %v942 = vpop.f32.mrb[0].mxu0
  %v943 = vadd.f32 %v743, %v942
  %v944 = vpop.f32.mrb[0].mxu0
  %v945 = vadd.f32 %v739, %v944
  %v946 = vpop.f32.mrb[0].mxu0
  %v947 = vadd.f32 %v743, %v946
  %948 = vmatprep.mubr.bf16.mxu0 %v84
  %949 = vmatmul.mubr.bf16.gmra.mrb[0].mxu0 %v83
  %v950 = vpop.f32.mrb[0].mxu0
  %v951 = vadd.f32 %v739, %v950
  %v952 = vpop.f32.mrb[0].mxu0
  %v953 = vadd.f32 %v743, %v952
  %v954 = vpop.f32.mrb[0].mxu0
  %v955 = vadd.f32 %v739, %v954
  %v956 = vpop.f32.mrb[0].mxu0
  %v957 = vadd.f32 %v743, %v956
  %958 = vmatprep.mubr.bf16.mxu0 %v86
  %959 = vmatmul.mubr.bf16.gmra.mrb[0].mxu0 %v85
  %v960 = vpop.f32.mrb[0].mxu0
  %v961 = vadd.f32 %v739, %v960
  %v962 = vpop.f32.mrb[0].mxu0
  %v963 = vadd.f32 %v743, %v962
  %v964 = vpop.f32.mrb[0].mxu0
  %v965 = vadd.f32 %v739, %v964
  %v966 = vpop.f32.mrb[0].mxu0
  %v967 = vadd.f32 %v743, %v966
  %968 = vmatprep.mubr.bf16.mxu0 %v88
  %969 = vmatmul.mubr.bf16.gmra.mrb[0].mxu0 %v87
  %v970 = vpop.f32.mrb[0].mxu0
  %v971 = vadd.f32 %v739, %v970
  %v972 = vpop.f32.mrb[0].mxu0
  %v973 = vadd.f32 %v743, %v972
  %v974 = vpop.f32.mrb[0].mxu0
  %v975 = vadd.f32 %v739, %v974
  %v976 = vpop.f32.mrb[0].mxu0
  %v977 = vadd.f32 %v743, %v976
  %978 = vdwg.mxu0
  %vm979 = vcmp.eq.s32.totalorder %v726, 0
  %vm980 = vcmp.eq.s32.totalorder %v727, 0
  %vm981 = vcmp.eq.s32.totalorder %v728, 0
  %vm982 = vcmp.eq.s32.totalorder %v729, 0
  %vm983 = vcmp.eq.s32.totalorder %v730, 0
  %vm984 = vcmp.eq.s32.totalorder %v731, 0
  %vm985 = vcmp.eq.s32.totalorder %v732, 0
  %vm986 = vcmp.eq.s32.totalorder %v733, 0
  %v987 = vrot.slane %v292, 7
  %v988 = vrot.slane %v294, 7
  %v989 = vrot.slane %v296, 7
  %v990 = vrot.slane %v298, 7
  %v991 = vrot.slane %v302, 7
  %v992 = vrot.slane %v304, 7
  %v993 = vrot.slane %v306, 7
  %v994 = vrot.slane %v308, 7
  %v995 = vrot.slane %v312, 7
  %v996 = vrot.slane %v314, 7
  %v997 = vrot.slane %v316, 7
  %v998 = vrot.slane %v318, 7
  %v999 = vrot.slane %v322, 7
  %v1000 = vrot.slane %v324, 7
  %v1001 = vrot.slane %v326, 7
  %v1002 = vrot.slane %v328, 7
  %vm1003 = vcmp.lt.s32.totalorder %v630, 1
  %v1004 = vsel %vm1003, %v999, %v1001
  %v1005 = vsel %vm1003, %v1000, %v1002
  %v1006 = vsel %vm1003, %v997, %v999
  %v1007 = vsel %vm1003, %v998, %v1000
  %v1008 = vsel %vm1003, %v995, %v997
  %v1009 = vsel %vm1003, %v996, %v998
  %v1010 = vsel %vm1003, %v993, %v995
  %v1011 = vsel %vm1003, %v994, %v996
  %v1012 = vsel %vm1003, %v991, %v993
  %v1013 = vsel %vm1003, %v992, %v994
  %v1014 = vsel %vm1003, %v989, %v991
  %v1015 = vsel %vm1003, %v990, %v992
  %v1016 = vsel %vm1003, %v987, %v989
  %v1017 = vsel %vm1003, %v988, %v990
  %v1018 = vsel %vm1003, %v1001, %v987
  %v1019 = vsel %vm1003, %v1002, %v988
  %v1020 = vsel %vm979, 0.0, %v1018
  %v1021 = vsel %vm979, 0.0, %v1019
  %v1022 = vsel %vm980, 0.0, %v1016
  %v1023 = vsel %vm980, 0.0, %v1017
  %v1024 = vsel %vm981, 0.0, %v1014
  %v1025 = vsel %vm981, 0.0, %v1015
  %v1026 = vsel %vm982, 0.0, %v1012
  %v1027 = vsel %vm982, 0.0, %v1013
  %v1028 = vsel %vm983, 0.0, %v1010
  %v1029 = vsel %vm983, 0.0, %v1011
  %v1030 = vsel %vm984, 0.0, %v1008
  %v1031 = vsel %vm984, 0.0, %v1009
  %v1032 = vsel %vm985, 0.0, %v1006
  %v1033 = vsel %vm985, 0.0, %v1007
  %v1034 = vsel %vm986, 0.0, %v1004
  %v1035 = vsel %vm986, 0.0, %v1005
  %v1036 = vadd.f32 %v941, %v1020
  %v1037 = vadd.f32 %v943, %v1021
  %v1038 = vadd.f32 %v945, %v1022
  %v1039 = vadd.f32 %v947, %v1023
  %v1040 = vadd.f32 %v951, %v1024
  %v1041 = vadd.f32 %v953, %v1025
  %v1042 = vadd.f32 %v955, %v1026
  %v1043 = vadd.f32 %v957, %v1027
  %v1044 = vadd.f32 %v961, %v1028
  %v1045 = vadd.f32 %v963, %v1029
  %v1046 = vadd.f32 %v965, %v1030
  %v1047 = vadd.f32 %v967, %v1031
  %v1048 = vadd.f32 %v971, %v1032
  %v1049 = vadd.f32 %v973, %v1033
  %v1050 = vadd.f32 %v975, %v1034
  %v1051 = vadd.f32 %v977, %v1035
  %vm1052 = vcmp.eq.s32.totalorder %v726, 31
  %vm1053 = vcmp.eq.s32.totalorder %v727, 31
  %vm1054 = vcmp.eq.s32.totalorder %v728, 31
  %vm1055 = vcmp.eq.s32.totalorder %v729, 31
  %vm1056 = vcmp.eq.s32.totalorder %v730, 31
  %vm1057 = vcmp.eq.s32.totalorder %v731, 31
  %vm1058 = vcmp.eq.s32.totalorder %v732, 31
  %vm1059 = vcmp.eq.s32.totalorder %v733, 31
  %v1060 = vrot.slane %v591, 1
  %v1061 = vrot.slane %v593, 1
  %v1062 = vrot.slane %v595, 1
  %v1063 = vrot.slane %v597, 1
  %v1064 = vrot.slane %v601, 1
  %v1065 = vrot.slane %v603, 1
  %v1066 = vrot.slane %v605, 1
  %v1067 = vrot.slane %v607, 1
  %v1068 = vrot.slane %v611, 1
  %v1069 = vrot.slane %v613, 1
  %v1070 = vrot.slane %v615, 1
  %v1071 = vrot.slane %v617, 1
  %v1072 = vrot.slane %v621, 1
  %v1073 = vrot.slane %v623, 1
  %v1074 = vrot.slane %v625, 1
  %v1075 = vrot.slane %v627, 1
  %vm1076 = vcmp.lt.s32.totalorder %v630, 7
  %v1077 = vsel %vm1076, %v1072, %v1074
  %v1078 = vsel %vm1076, %v1073, %v1075
  %v1079 = vsel %vm1076, %v1070, %v1072
  %v1080 = vsel %vm1076, %v1071, %v1073
  %v1081 = vsel %vm1076, %v1068, %v1070
  %v1082 = vsel %vm1076, %v1069, %v1071
  %v1083 = vsel %vm1076, %v1066, %v1068
  %v1084 = vsel %vm1076, %v1067, %v1069
  %v1085 = vsel %vm1076, %v1064, %v1066
  %v1086 = vsel %vm1076, %v1065, %v1067
  %v1087 = vsel %vm1076, %v1062, %v1064
  %v1088 = vsel %vm1076, %v1063, %v1065
  %v1089 = vsel %vm1076, %v1060, %v1062
  %v1090 = vsel %vm1076, %v1061, %v1063
  %v1091 = vsel %vm1076, %v1074, %v1060
  %v1092 = vsel %vm1076, %v1075, %v1061
  %v1093 = vsel %vm1052, 0.0, %v1089
  %v1094 = vsel %vm1052, 0.0, %v1090
  %v1095 = vsel %vm1053, 0.0, %v1087
  %v1096 = vsel %vm1053, 0.0, %v1088
  %v1097 = vsel %vm1054, 0.0, %v1085
  %v1098 = vsel %vm1054, 0.0, %v1086
  %v1099 = vsel %vm1055, 0.0, %v1083
  %v1100 = vsel %vm1055, 0.0, %v1084
  %v1101 = vsel %vm1056, 0.0, %v1081
  %v1102 = vsel %vm1056, 0.0, %v1082
  %v1103 = vsel %vm1057, 0.0, %v1079
  %v1104 = vsel %vm1057, 0.0, %v1080
  %v1105 = vsel %vm1058, 0.0, %v1077
  %v1106 = vsel %vm1058, 0.0, %v1078
  %v1107 = vsel %vm1059, 0.0, %v1091
  %v1108 = vsel %vm1059, 0.0, %v1092
  %v1109 = vadd.f32 %v1036, %v1093
  %v1110 = vadd.f32 %v1037, %v1094
  %v1111 = vadd.f32 %v1038, %v1095
  %v1112 = vadd.f32 %v1039, %v1096
  %v1113 = vadd.f32 %v1040, %v1097
  %v1114 = vadd.f32 %v1041, %v1098
  %v1115 = vadd.f32 %v1042, %v1099
  %v1116 = vadd.f32 %v1043, %v1100
  %v1117 = vadd.f32 %v1044, %v1101
  %v1118 = vadd.f32 %v1045, %v1102
  %v1119 = vadd.f32 %v1046, %v1103
  %v1120 = vadd.f32 %v1047, %v1104
  %v1121 = vadd.f32 %v1048, %v1105
  %v1122 = vadd.f32 %v1049, %v1106
  %v1123 = vadd.f32 %v1050, %v1107
  %v1124 = vadd.f32 %v1051, %v1108
  %v1125 = vpack.c.bf16 %v1111, %v1109
  %v1126 = vpack.c.bf16 %v1112, %v1110
  %v1127 = vpack.c.bf16 %v1115, %v1113
  %v1128 = vpack.c.bf16 %v1116, %v1114
  %v1129 = vpack.c.bf16 %v1119, %v1117
  %v1130 = vpack.c.bf16 %v1120, %v1118
  %v1131 = vpack.c.bf16 %v1123, %v1121
  %v1132 = vpack.c.bf16 %v1124, %v1122
  %v1141 = vunpack.c.l.b16 %v1125
  %v1142 = vunpack.c.l.b16 %v1126
  %v1143 = vunpack.c.h.b16 %v1125
  %v1144 = vunpack.c.h.b16 %v1126
  %v1145 = vunpack.c.l.b16 %v1127
  %v1146 = vunpack.c.l.b16 %v1128
  %v1147 = vunpack.c.h.b16 %v1127
  %v1148 = vunpack.c.h.b16 %v1128
  %v1149 = vunpack.c.l.b16 %v1129
  %v1150 = vunpack.c.l.b16 %v1130
  %v1151 = vunpack.c.h.b16 %v1129
  %v1152 = vunpack.c.h.b16 %v1130
  %v1153 = vunpack.c.l.b16 %v1131
  %v1154 = vunpack.c.l.b16 %v1132
  %v1155 = vunpack.c.h.b16 %v1131
  %v1156 = vunpack.c.h.b16 %v1132
  %v1157 = vpack.c.b16 %v1142, %v1141
  %v1158 = vpack.c.b16 %v1144, %v1143
  %v1159 = vpack.c.b16 %v1146, %v1145
  %v1160 = vpack.c.b16 %v1148, %v1147
  %v1161 = vpack.c.b16 %v1150, %v1149
  %v1162 = vpack.c.b16 %v1152, %v1151
  %v1163 = vpack.c.b16 %v1154, %v1153
  %v1164 = vpack.c.b16 %v1156, %v1155
  %1173 = vst [vmem:[%s3] sm:$0xff] %v1157
  %1174 = vst [vmem:[%s3 + $0x8] sm:$0xff] %v1158
  %1175 = vst [vmem:[%s3 + $0x10] sm:$0xff] %v1159
  %1176 = vst [vmem:[%s3 + $0x18] sm:$0xff] %v1160
  %1177 = vst [vmem:[%s3 + $0x20] sm:$0xff] %v1161
  %1178 = vst [vmem:[%s3 + $0x28] sm:$0xff] %v1162
  %1179 = vst [vmem:[%s3 + $0x30] sm:$0xff] %v1163
  %1180 = vst [vmem:[%s3 + $0x38] sm:$0xff] %v1164
  %v1181 = vadd.f32 %v1109, %v1111
  %v1182 = vadd.f32 %v1181, %v1113
  %v1183 = vadd.f32 %v1182, %v1115
  %v1184 = vadd.f32 %v1183, %v1117
  %v1185 = vadd.f32 %v1184, %v1119
  %v1186 = vadd.f32 %v1185, %v1121
  %v1187 = vadd.f32 %v1186, %v1123
  %v1188 = vrot.slane %v1187, 4
  %v1189 = vadd.f32 %v1187, %v1188
  %v1190 = vrot.slane %v1189, 2
  %v1191 = vadd.f32 %v1189, %v1190
  %v1192 = vrot.slane %v1191, 1
  %v1193 = vadd.f32 %v1191, %v1192
  %v1194 = vadd.f32 %v1110, %v1112
  %v1195 = vadd.f32 %v1194, %v1114
  %v1196 = vadd.f32 %v1195, %v1116
  %v1197 = vadd.f32 %v1196, %v1118
  %v1198 = vadd.f32 %v1197, %v1120
  %v1199 = vadd.f32 %v1198, %v1122
  %v1200 = vadd.f32 %v1199, %v1124
  %v1201 = vrot.slane %v1200, 4
  %v1202 = vadd.f32 %v1200, %v1201
  %v1203 = vrot.slane %v1202, 2
  %v1204 = vadd.f32 %v1202, %v1203
  %v1205 = vrot.slane %v1204, 1
  %v1206 = vadd.f32 %v1204, %v1205
  %v1209 = vcombine.low %v1193, %v1206
  %v1211 = vunpack.c.l.s4 1966171168
  %v1212 = vunpack.c.0.s8 %v1211
  %v1213 = vlaneseq
  %v1214 = vshrl.u32 %v1213, 7
  %v1215 = vsub.s32 %v1212, %v1214
  %v1216 = vrot.slane %v1209, %v1215
  %v1218 = vunpack.c.l.s4 1966171168
  %v1219 = vunpack.c.0.s8 %v1218
  %v1220 = vlaneseq
  %v1221 = vshrl.u32 %v1220, 7
  %v1222 = vsub.s32 %v1219, %v1221
  %v1223 = vrot.slane %v1216, %v1222
  %v1225 = vlaneseq
  %vm1226 = vcmp.ge.s32.totalorder %v1225, 0
  %vm1227 = vcmp.lt.s32.totalorder %v1225, 256
  %vm1228 = vmand %vm1226, %vm1227
  %1229 = vst.msk [vmem:[%s4] sm:$0x3] %vm1228, %v1223
  %v1230 = vmul.f32 %v1109, %v1109
  %v1231 = vmul.f32 %v1110, %v1110
  %v1232 = vmul.f32 %v1111, %v1111
  %v1233 = vmul.f32 %v1112, %v1112
  %v1234 = vmul.f32 %v1113, %v1113
  %v1235 = vmul.f32 %v1114, %v1114
  %v1236 = vmul.f32 %v1115, %v1115
  %v1237 = vmul.f32 %v1116, %v1116
  %v1238 = vmul.f32 %v1117, %v1117
  %v1239 = vmul.f32 %v1118, %v1118
  %v1240 = vmul.f32 %v1119, %v1119
  %v1241 = vmul.f32 %v1120, %v1120
  %v1242 = vmul.f32 %v1121, %v1121
  %v1243 = vmul.f32 %v1122, %v1122
  %v1244 = vmul.f32 %v1123, %v1123
  %v1245 = vmul.f32 %v1124, %v1124
  %v1246 = vadd.f32 %v1230, %v1232
  %v1247 = vadd.f32 %v1246, %v1234
  %v1248 = vadd.f32 %v1247, %v1236
  %v1249 = vadd.f32 %v1248, %v1238
  %v1250 = vadd.f32 %v1249, %v1240
  %v1251 = vadd.f32 %v1250, %v1242
  %v1252 = vadd.f32 %v1251, %v1244
  %v1253 = vrot.slane %v1252, 4
  %v1254 = vadd.f32 %v1252, %v1253
  %v1255 = vrot.slane %v1254, 2
  %v1256 = vadd.f32 %v1254, %v1255
  %v1257 = vrot.slane %v1256, 1
  %v1258 = vadd.f32 %v1256, %v1257
  %v1259 = vadd.f32 %v1231, %v1233
  %v1260 = vadd.f32 %v1259, %v1235
  %v1261 = vadd.f32 %v1260, %v1237
  %v1262 = vadd.f32 %v1261, %v1239
  %v1263 = vadd.f32 %v1262, %v1241
  %v1264 = vadd.f32 %v1263, %v1243
  %v1265 = vadd.f32 %v1264, %v1245
  %v1266 = vrot.slane %v1265, 4
  %v1267 = vadd.f32 %v1265, %v1266
  %v1268 = vrot.slane %v1267, 2
  %v1269 = vadd.f32 %v1267, %v1268
  %v1270 = vrot.slane %v1269, 1
  %v1271 = vadd.f32 %v1269, %v1270
  %v1274 = vcombine.low %v1258, %v1271
  %v1276 = vunpack.c.l.s4 1966171168
  %v1277 = vunpack.c.0.s8 %v1276
  %v1278 = vlaneseq
  %v1279 = vshrl.u32 %v1278, 7
  %v1280 = vsub.s32 %v1277, %v1279
  %v1281 = vrot.slane %v1274, %v1280
  %v1283 = vunpack.c.l.s4 1966171168
  %v1284 = vunpack.c.0.s8 %v1283
  %v1285 = vlaneseq
  %v1286 = vshrl.u32 %v1285, 7
  %v1287 = vsub.s32 %v1284, %v1286
  %v1288 = vrot.slane %v1281, %v1287
  %1290 = vst.msk [vmem:[%s5] sm:$0x3] %vm1228, %v1288
  // Predicated region
  $region14: #{unet_up_block_forward.5} parent=0 // pred_check
    _
  $region15: #{unet_up_block_forward.5} parent=0 // pred_check_branch
    %1292 = sbr.rel (0) target = $region17
  $region16: #{unet_up_block_forward.5} parent=0 // pred_region
    _
  $region17: #{unet_up_block_forward.5} parent=0 // pred_fallthru
    _
  // Predicated region
  $region18: #{unet_up_block_forward.5} parent=0 // pred_check
    _
  $region19: #{unet_up_block_forward.5} parent=0 // pred_check_branch
    %1294 = sbr.rel (0) target = $region21
  $region20: #{unet_up_block_forward.5} parent=0 // pred_region
    _
  $region21: #{unet_up_block_forward.5} parent=0 // pred_fallthru
    _
  // Predicated region
  $region22: #{unet_up_block_forward.5} parent=0 // pred_check
    _
  $region23: #{unet_up_block_forward.5} parent=0 // pred_check_branch
    %1296 = sbr.rel (0) target = $region25
  $region24: #{unet_up_block_forward.5} parent=0 // pred_region
    _
  $region25: #{unet_up_block_forward.5} parent=0 // pred_fallthru
    _
  // Predicated region
  $region26: #{unet_up_block_forward.5} parent=0 // pred_check
    _
  $region27: #{unet_up_block_forward.5} parent=0 // pred_check_branch
    %1298 = sbr.rel (0) target = $region29
  $region28: #{unet_up_block_forward.5} parent=0 // pred_region
    _
  $region29: #{unet_up_block_forward.5} parent=0 // pred_fallthru
    _
  // Predicated region
  $region30: #{unet_up_block_forward.5} parent=0 // pred_check
    _
  $region31: #{unet_up_block_forward.5} parent=0 // pred_check_branch
    %1300 = sbr.rel (0) target = $region33
  $region32: #{unet_up_block_forward.5} parent=0 // pred_region
    _
  $region33: #{unet_up_block_forward.5} parent=0 // pred_fallthru
    _
  // Predicated region
  $region34: #{unet_up_block_forward.5} parent=0 // pred_check
    _
  $region35: #{unet_up_block_forward.5} parent=0 // pred_check_branch
    %1302 = sbr.rel (0) target = $region37
  $region36: #{unet_up_block_forward.5} parent=0 // pred_region
    _
  $region37: #{unet_up_block_forward.5} parent=0 // pred_fallthru
    _

// kernel: unet_up_block_forward.6
$region0: #{unet_up_block_forward.6}
  #allocation0 [shape = 'u32[]', space=smem, size = 0x4, offset = 0x4, fixed_abs, tag = 'smem constant byte address 0x4 - core index']
  #allocation1 [shape = 'u32[144,128]{1,0:T(1,128)}', space=vmem, size = 0x12000, scoped, tag = 'internal scratch']
  %s0 = inlined_call_operand.vmem [shape: bf16[2,32,256], index: 0, kind: input, shape index: {}]
  %s1 = inlined_call_operand.vmem [shape: bf16[3,256,256], index: 1, kind: input, shape index: {}]
  %s2 = inlined_call_operand.vmem [shape: f32[1,256], index: 2, kind: input, shape index: {}]
  %s3 = inlined_call_operand.vmem [shape: f32[1,256], index: 3, kind: input, shape index: {}]
  %s4 = inlined_call_operand.vmem [shape: f32[1,256], index: 4, kind: input, shape index: {}]
  %s5 = inlined_call_operand.vmem [shape: f32[2,32,256], index: 5, kind: output, shape index: {0}]
  %s6 = inlined_call_operand.vmem [shape: f32[1,1,256], index: 6, kind: output, shape index: {1}]
  %s7 = inlined_call_operand.vmem [shape: f32[1,1,256], index: 7, kind: output, shape index: {2}]
  %8 = xla_tuple %s5, %s6, %s7
  %s9 = sld [smem:[#allocation0]]
  $region46: #{unet_up_block_forward.6} parent=0
    _
  %s11 = ssub.s32 1, %s9
  %s12 = scalar_select 0, %s11, %s9
  // Predicated region
  $region2: #{unet_up_block_forward.6} parent=0 // pred_check
    _
  $region3: #{unet_up_block_forward.6} parent=0 // pred_check_branch
    %14 = sbr.rel (0) target = $region5
  $region4: #{unet_up_block_forward.6} parent=0 // pred_region
    _
  $region5: #{unet_up_block_forward.6} parent=0 // pred_fallthru
    _
  // Predicated region
  $region6: #{unet_up_block_forward.6} parent=0 // pred_check
    _
  $region7: #{unet_up_block_forward.6} parent=0 // pred_check_branch
    %16 = sbr.rel (0) target = $region9
  $region8: #{unet_up_block_forward.6} parent=0 // pred_region
    _
  $region9: #{unet_up_block_forward.6} parent=0 // pred_fallthru
    _
  // Predicated region
  $region10: #{unet_up_block_forward.6} parent=0 // pred_check
    _
  $region11: #{unet_up_block_forward.6} parent=0 // pred_check_branch
    %18 = sbr.rel (0) target = $region13
  $region12: #{unet_up_block_forward.6} parent=0 // pred_region
    _
  $region13: #{unet_up_block_forward.6} parent=0 // pred_fallthru
    _
  // Predicated region
  $region14: #{unet_up_block_forward.6} parent=0 // pred_check
    _
  $region15: #{unet_up_block_forward.6} parent=0 // pred_check_branch
    %20 = sbr.rel (0) target = $region17
  $region16: #{unet_up_block_forward.6} parent=0 // pred_region
    _
  $region17: #{unet_up_block_forward.6} parent=0 // pred_fallthru
    _
  // Predicated region
  $region18: #{unet_up_block_forward.6} parent=0 // pred_check
    _
  $region19: #{unet_up_block_forward.6} parent=0 // pred_check_branch
    %22 = sbr.rel (0) target = $region21
  $region20: #{unet_up_block_forward.6} parent=0 // pred_region
    _
  $region21: #{unet_up_block_forward.6} parent=0 // pred_fallthru
    _
  %v23 = vld [vmem:[%s0] sm:$0xff]
  %v24 = vld [vmem:[%s0 + $0x8] sm:$0xff]
  %v25 = vld [vmem:[%s0 + $0x10] sm:$0xff]
  %v26 = vld [vmem:[%s0 + $0x18] sm:$0xff]
  %v27 = vld [vmem:[%s0 + $0x20] sm:$0xff]
  %v28 = vld [vmem:[%s0 + $0x28] sm:$0xff]
  %v29 = vld [vmem:[%s0 + $0x30] sm:$0xff]
  %v30 = vld [vmem:[%s0 + $0x38] sm:$0xff]
  %v31 = vunpack.c.l.bf16 %v23
  %v32 = vunpack.c.h.bf16 %v23
  %v33 = vunpack.c.l.bf16 %v24
  %v34 = vunpack.c.h.bf16 %v24
  %v35 = vunpack.c.l.bf16 %v25
  %v36 = vunpack.c.h.bf16 %v25
  %v37 = vunpack.c.l.bf16 %v26
  %v38 = vunpack.c.h.bf16 %v26
  %v39 = vunpack.c.l.bf16 %v27
  %v40 = vunpack.c.h.bf16 %v27
  %v41 = vunpack.c.l.bf16 %v28
  %v42 = vunpack.c.h.bf16 %v28
  %v43 = vunpack.c.l.bf16 %v29
  %v44 = vunpack.c.h.bf16 %v29
  %v45 = vunpack.c.l.bf16 %v30
  %v46 = vunpack.c.h.bf16 %v30
  %v47 = vld [vmem:[%s3] sm:$0x3]
  %v49 = vlaneseq
  %v50 = vshrl.u32 %v49, 7
  %v51 = vsub.s32 0, %v50
  %v52 = vrot.slane %v47, %v51
  %v53 = vlaneseq
  %v54 = vshrl.u32 %v53, 7
  %v55 = vsub.s32 1, %v54
  %v56 = vrot.slane %v47, %v55
  %v59 = vmul.f32 %v31, %v52
  %v60 = vmul.f32 %v32, %v56
  %v61 = vmul.f32 %v33, %v52
  %v62 = vmul.f32 %v34, %v56
  %v63 = vmul.f32 %v35, %v52
  %v64 = vmul.f32 %v36, %v56
  %v65 = vmul.f32 %v37, %v52
  %v66 = vmul.f32 %v38, %v56
  %v67 = vmul.f32 %v39, %v52
  %v68 = vmul.f32 %v40, %v56
  %v69 = vmul.f32 %v41, %v52
  %v70 = vmul.f32 %v42, %v56
  %v71 = vmul.f32 %v43, %v52
  %v72 = vmul.f32 %v44, %v56
  %v73 = vmul.f32 %v45, %v52
  %v74 = vmul.f32 %v46, %v56
  %v75 = vld [vmem:[%s4] sm:$0x3]
  %v77 = vlaneseq
  %v78 = vshrl.u32 %v77, 7
  %v79 = vsub.s32 0, %v78
  %v80 = vrot.slane %v75, %v79
  %v81 = vlaneseq
  %v82 = vshrl.u32 %v81, 7
  %v83 = vsub.s32 1, %v82
  %v84 = vrot.slane %v75, %v83
  %v87 = vadd.f32 %v59, %v80
  %v88 = vadd.f32 %v60, %v84
  %v89 = vadd.f32 %v61, %v80
  %v90 = vadd.f32 %v62, %v84
  %v91 = vadd.f32 %v63, %v80
  %v92 = vadd.f32 %v64, %v84
  %v93 = vadd.f32 %v65, %v80
  %v94 = vadd.f32 %v66, %v84
  %v95 = vadd.f32 %v67, %v80
  %v96 = vadd.f32 %v68, %v84
  %v97 = vadd.f32 %v69, %v80
  %v98 = vadd.f32 %v70, %v84
  %v99 = vadd.f32 %v71, %v80
  %v100 = vadd.f32 %v72, %v84
  %v101 = vadd.f32 %v73, %v80
  %v102 = vadd.f32 %v74, %v84
  %v103 = vmax.f32 %v87, 0.0
  %v104 = vmax.f32 %v88, 0.0
  %v105 = vmax.f32 %v89, 0.0
  %v106 = vmax.f32 %v90, 0.0
  %v107 = vmax.f32 %v91, 0.0
  %v108 = vmax.f32 %v92, 0.0
  %v109 = vmax.f32 %v93, 0.0
  %v110 = vmax.f32 %v94, 0.0
  %v111 = vmax.f32 %v95, 0.0
  %v112 = vmax.f32 %v96, 0.0
  %v113 = vmax.f32 %v97, 0.0
  %v114 = vmax.f32 %v98, 0.0
  %v115 = vmax.f32 %v99, 0.0
  %v116 = vmax.f32 %v100, 0.0
  %v117 = vmax.f32 %v101, 0.0
  %v118 = vmax.f32 %v102, 0.0
  %v119 = vpack.c.bf16 %v105, %v103
  %v120 = vpack.c.bf16 %v106, %v104
  %v121 = vpack.c.bf16 %v109, %v107
  %v122 = vpack.c.bf16 %v110, %v108
  %v123 = vpack.c.bf16 %v113, %v111
  %v124 = vpack.c.bf16 %v114, %v112
  %v125 = vpack.c.bf16 %v117, %v115
  %v126 = vpack.c.bf16 %v118, %v116
  %v127 = vld [vmem:[%s1] sm:$0xff]
  %v128 = vld [vmem:[%s1 + $0x8] sm:$0xff]
  %v129 = vld [vmem:[%s1 + $0x10] sm:$0xff]
  %v130 = vld [vmem:[%s1 + $0x18] sm:$0xff]
  %v131 = vld [vmem:[%s1 + $0x20] sm:$0xff]
  %v132 = vld [vmem:[%s1 + $0x28] sm:$0xff]
  %v133 = vld [vmem:[%s1 + $0x30] sm:$0xff]
  %v134 = vld [vmem:[%s1 + $0x38] sm:$0xff]
  %v135 = vld [vmem:[%s1 + $0x40] sm:$0xff]
  %v136 = vld [vmem:[%s1 + $0x48] sm:$0xff]
  %v137 = vld [vmem:[%s1 + $0x50] sm:$0xff]
  %v138 = vld [vmem:[%s1 + $0x58] sm:$0xff]
  %v139 = vld [vmem:[%s1 + $0x60] sm:$0xff]
  %v140 = vld [vmem:[%s1 + $0x68] sm:$0xff]
  %v141 = vld [vmem:[%s1 + $0x70] sm:$0xff]
  %v142 = vld [vmem:[%s1 + $0x78] sm:$0xff]
  %v143 = vld [vmem:[%s1 + $0x80] sm:$0xff]
  %v144 = vld [vmem:[%s1 + $0x88] sm:$0xff]
  %v145 = vld [vmem:[%s1 + $0x90] sm:$0xff]
  %v146 = vld [vmem:[%s1 + $0x98] sm:$0xff]
  %v147 = vld [vmem:[%s1 + $0xa0] sm:$0xff]
  %v148 = vld [vmem:[%s1 + $0xa8] sm:$0xff]
  %v149 = vld [vmem:[%s1 + $0xb0] sm:$0xff]
  %v150 = vld [vmem:[%s1 + $0xb8] sm:$0xff]
  %v151 = vld [vmem:[%s1 + $0xc0] sm:$0xff]
  %v152 = vld [vmem:[%s1 + $0xc8] sm:$0xff]
  %v153 = vld [vmem:[%s1 + $0xd0] sm:$0xff]
  %v154 = vld [vmem:[%s1 + $0xd8] sm:$0xff]
  %v155 = vld [vmem:[%s1 + $0xe0] sm:$0xff]
  %v156 = vld [vmem:[%s1 + $0xe8] sm:$0xff]
  %v157 = vld [vmem:[%s1 + $0xf0] sm:$0xff]
  %v158 = vld [vmem:[%s1 + $0xf8] sm:$0xff]
  %v191 = vunpack.c.l.b16 %v127
  %v192 = vunpack.c.h.b16 %v127
  %v193 = vunpack.c.l.b16 %v128
  %v194 = vunpack.c.h.b16 %v128
  %v195 = vunpack.c.l.b16 %v129
  %v196 = vunpack.c.h.b16 %v129
  %v197 = vunpack.c.l.b16 %v130
  %v198 = vunpack.c.h.b16 %v130
  %v199 = vunpack.c.l.b16 %v131
  %v200 = vunpack.c.h.b16 %v131
  %v201 = vunpack.c.l.b16 %v132
  %v202 = vunpack.c.h.b16 %v132
  %v203 = vunpack.c.l.b16 %v133
  %v204 = vunpack.c.h.b16 %v133
  %v205 = vunpack.c.l.b16 %v134
  %v206 = vunpack.c.h.b16 %v134
  %v207 = vunpack.c.l.b16 %v135
  %v208 = vunpack.c.h.b16 %v135
  %v209 = vunpack.c.l.b16 %v136
  %v210 = vunpack.c.h.b16 %v136
  %v211 = vunpack.c.l.b16 %v137
  %v212 = vunpack.c.h.b16 %v137
  %v213 = vunpack.c.l.b16 %v138
  %v214 = vunpack.c.h.b16 %v138
  %v215 = vunpack.c.l.b16 %v139
  %v216 = vunpack.c.h.b16 %v139
  %v217 = vunpack.c.l.b16 %v140
  %v218 = vunpack.c.h.b16 %v140
  %v219 = vunpack.c.l.b16 %v141
  %v220 = vunpack.c.h.b16 %v141
  %v221 = vunpack.c.l.b16 %v142
  %v222 = vunpack.c.h.b16 %v142
  %v223 = vunpack.c.l.b16 %v143
  %v224 = vunpack.c.h.b16 %v143
  %v225 = vunpack.c.l.b16 %v144
  %v226 = vunpack.c.h.b16 %v144
  %v227 = vunpack.c.l.b16 %v145
  %v228 = vunpack.c.h.b16 %v145
  %v229 = vunpack.c.l.b16 %v146
  %v230 = vunpack.c.h.b16 %v146
  %v231 = vunpack.c.l.b16 %v147
  %v232 = vunpack.c.h.b16 %v147
  %v233 = vunpack.c.l.b16 %v148
  %v234 = vunpack.c.h.b16 %v148
  %v235 = vunpack.c.l.b16 %v149
  %v236 = vunpack.c.h.b16 %v149
  %v237 = vunpack.c.l.b16 %v150
  %v238 = vunpack.c.h.b16 %v150
  %v239 = vunpack.c.l.b16 %v151
  %v240 = vunpack.c.h.b16 %v151
  %v241 = vunpack.c.l.b16 %v152
  %v242 = vunpack.c.h.b16 %v152
  %v243 = vunpack.c.l.b16 %v153
  %v244 = vunpack.c.h.b16 %v153
  %v245 = vunpack.c.l.b16 %v154
  %v246 = vunpack.c.h.b16 %v154
  %v247 = vunpack.c.l.b16 %v155
  %v248 = vunpack.c.h.b16 %v155
  %v249 = vunpack.c.l.b16 %v156
  %v250 = vunpack.c.h.b16 %v156
  %v251 = vunpack.c.l.b16 %v157
  %v252 = vunpack.c.h.b16 %v157
  %v253 = vunpack.c.l.b16 %v158
  %v254 = vunpack.c.h.b16 %v158
  %v255 = vpack.c.b16 %v193, %v191
  %v256 = vpack.c.b16 %v194, %v192
  %v257 = vpack.c.b16 %v197, %v195
  %v258 = vpack.c.b16 %v198, %v196
  %v259 = vpack.c.b16 %v201, %v199
  %v260 = vpack.c.b16 %v202, %v200
  %v261 = vpack.c.b16 %v205, %v203
  %v262 = vpack.c.b16 %v206, %v204
  %v263 = vpack.c.b16 %v209, %v207
  %v264 = vpack.c.b16 %v210, %v208
  %v265 = vpack.c.b16 %v213, %v211
  %v266 = vpack.c.b16 %v214, %v212
  %v267 = vpack.c.b16 %v217, %v215
  %v268 = vpack.c.b16 %v218, %v216
  %v269 = vpack.c.b16 %v221, %v219
  %v270 = vpack.c.b16 %v222, %v220
  %v271 = vpack.c.b16 %v225, %v223
  %v272 = vpack.c.b16 %v226, %v224
  %v273 = vpack.c.b16 %v229, %v227
  %v274 = vpack.c.b16 %v230, %v228
  %v275 = vpack.c.b16 %v233, %v231
  %v276 = vpack.c.b16 %v234, %v232
  %v277 = vpack.c.b16 %v237, %v235
  %v278 = vpack.c.b16 %v238, %v236
  %v279 = vpack.c.b16 %v241, %v239
  %v280 = vpack.c.b16 %v242, %v240
  %v281 = vpack.c.b16 %v245, %v243
  %v282 = vpack.c.b16 %v246, %v244
  %v283 = vpack.c.b16 %v249, %v247
  %v284 = vpack.c.b16 %v250, %v248
  %v285 = vpack.c.b16 %v253, %v251
  %v286 = vpack.c.b16 %v254, %v252
  %319 = vmatprep.subr.bf16.mxu0 %v256
  %320 = vmatpush1.bf16.msra.mxu0 %v255
  %321 = vmatprep.subr.bf16.mxu0 %v258
  %322 = vmatpush1.bf16.msra.mxu0 %v257
  %323 = vmatprep.subr.bf16.mxu0 %v260
  %324 = vmatpush1.bf16.msra.mxu0 %v259
  %325 = vmatprep.subr.bf16.mxu0 %v262
  %326 = vmatpush1.bf16.msra.mxu0 %v261
  %327 = vmatprep.subr.bf16.mxu0 %v264
  %328 = vmatpush1.bf16.msra.mxu0 %v263
  %329 = vmatprep.subr.bf16.mxu0 %v266
  %330 = vmatpush1.bf16.msra.mxu0 %v265
  %331 = vmatprep.subr.bf16.mxu0 %v268
  %332 = vmatpush1.bf16.msra.mxu0 %v267
  %333 = vmatprep.subr.bf16.mxu0 %v270
  %334 = vmatpush1.bf16.msra.mxu0 %v269
  %335 = vmatprep.subr.bf16.mxu0 %v272
  %336 = vmatpush1.bf16.msra.mxu0 %v271
  %337 = vmatprep.subr.bf16.mxu0 %v274
  %338 = vmatpush1.bf16.msra.mxu0 %v273
  %339 = vmatprep.subr.bf16.mxu0 %v276
  %340 = vmatpush1.bf16.msra.mxu0 %v275
  %341 = vmatprep.subr.bf16.mxu0 %v278
  %342 = vmatpush1.bf16.msra.mxu0 %v277
  %343 = vmatprep.subr.bf16.mxu0 %v280
  %344 = vmatpush1.bf16.msra.mxu0 %v279
  %345 = vmatprep.subr.bf16.mxu0 %v282
  %346 = vmatpush1.bf16.msra.mxu0 %v281
  %347 = vmatprep.subr.bf16.mxu0 %v284
  %348 = vmatpush1.bf16.msra.mxu0 %v283
  %349 = vmatprep.subr.bf16.mxu0 %v286
  %350 = vmatpush1.bf16.msra.mxu0 %v285
  %351 = vmatprep.mubr.bf16.mxu0 %v120
  %352 = vmatmul.mubr.bf16.gmra.mrb[0].mxu0 %v119
  %v353 = vpop.f32.mrb[0].mxu0
  %v354 = vadd.f32 0.0, %v353
  %v355 = vpop.f32.mrb[0].mxu0
  %v356 = vadd.f32 0.0, %v355
  %v357 = vpop.f32.mrb[0].mxu0
  %v358 = vadd.f32 0.0, %v357
  %v359 = vpop.f32.mrb[0].mxu0
  %v360 = vadd.f32 0.0, %v359
  %361 = vmatprep.mubr.bf16.mxu0 %v122
  %362 = vmatmul.mubr.bf16.gmra.mrb[0].mxu0 %v121
  %v363 = vpop.f32.mrb[0].mxu0
  %v364 = vadd.f32 0.0, %v363
  %v365 = vpop.f32.mrb[0].mxu0
  %v366 = vadd.f32 0.0, %v365
  %v367 = vpop.f32.mrb[0].mxu0
  %v368 = vadd.f32 0.0, %v367
  %v369 = vpop.f32.mrb[0].mxu0
  %v370 = vadd.f32 0.0, %v369
  %371 = vmatprep.mubr.bf16.mxu0 %v124
  %372 = vmatmul.mubr.bf16.gmra.mrb[0].mxu0 %v123
  %v373 = vpop.f32.mrb[0].mxu0
  %v374 = vadd.f32 0.0, %v373
  %v375 = vpop.f32.mrb[0].mxu0
  %v376 = vadd.f32 0.0, %v375
  %v377 = vpop.f32.mrb[0].mxu0
  %v378 = vadd.f32 0.0, %v377
  %v379 = vpop.f32.mrb[0].mxu0
  %v380 = vadd.f32 0.0, %v379
  %381 = vmatprep.mubr.bf16.mxu0 %v126
  %382 = vmatmul.mubr.bf16.gmra.mrb[0].mxu0 %v125
  %v383 = vpop.f32.mrb[0].mxu0
  %v384 = vadd.f32 0.0, %v383
  %v385 = vpop.f32.mrb[0].mxu0
  %v386 = vadd.f32 0.0, %v385
  %v387 = vpop.f32.mrb[0].mxu0
  %v388 = vadd.f32 0.0, %v387
  %v389 = vpop.f32.mrb[0].mxu0
  %v390 = vadd.f32 0.0, %v389
  %391 = vdwg.mxu0
  %s392 = scalar_lea.vmem %s1, 256
  %v393 = vld [vmem:[%s392] sm:$0xff]
  %v394 = vld [vmem:[%s392 + $0x8] sm:$0xff]
  %v395 = vld [vmem:[%s392 + $0x10] sm:$0xff]
  %v396 = vld [vmem:[%s392 + $0x18] sm:$0xff]
  %v397 = vld [vmem:[%s392 + $0x20] sm:$0xff]
  %v398 = vld [vmem:[%s392 + $0x28] sm:$0xff]
  %v399 = vld [vmem:[%s392 + $0x30] sm:$0xff]
  %v400 = vld [vmem:[%s392 + $0x38] sm:$0xff]
  %v401 = vld [vmem:[%s392 + $0x40] sm:$0xff]
  %v402 = vld [vmem:[%s392 + $0x48] sm:$0xff]
  %v403 = vld [vmem:[%s392 + $0x50] sm:$0xff]
  %v404 = vld [vmem:[%s392 + $0x58] sm:$0xff]
  %v405 = vld [vmem:[%s392 + $0x60] sm:$0xff]
  %v406 = vld [vmem:[%s392 + $0x68] sm:$0xff]
  %v407 = vld [vmem:[%s392 + $0x70] sm:$0xff]
  %v408 = vld [vmem:[%s392 + $0x78] sm:$0xff]
  %v409 = vld [vmem:[%s392 + $0x80] sm:$0xff]
  %v410 = vld [vmem:[%s392 + $0x88] sm:$0xff]
  %v411 = vld [vmem:[%s392 + $0x90] sm:$0xff]
  %v412 = vld [vmem:[%s392 + $0x98] sm:$0xff]
  %v413 = vld [vmem:[%s392 + $0xa0] sm:$0xff]
  %v414 = vld [vmem:[%s392 + $0xa8] sm:$0xff]
  %v415 = vld [vmem:[%s392 + $0xb0] sm:$0xff]
  %v416 = vld [vmem:[%s392 + $0xb8] sm:$0xff]
  %v417 = vld [vmem:[%s392 + $0xc0] sm:$0xff]
  %v418 = vld [vmem:[%s392 + $0xc8] sm:$0xff]
  %v419 = vld [vmem:[%s392 + $0xd0] sm:$0xff]
  %v420 = vld [vmem:[%s392 + $0xd8] sm:$0xff]
  %v421 = vld [vmem:[%s392 + $0xe0] sm:$0xff]
  %v422 = vld [vmem:[%s392 + $0xe8] sm:$0xff]
  %v423 = vld [vmem:[%s392 + $0xf0] sm:$0xff]
  %v424 = vld [vmem:[%s392 + $0xf8] sm:$0xff]
  %s425 = scalar_lea.vmem %s1, 512
  %v426 = vld [vmem:[%s425] sm:$0xff]
  %v427 = vld [vmem:[%s425 + $0x8] sm:$0xff]
  %v428 = vld [vmem:[%s425 + $0x10] sm:$0xff]
  %v429 = vld [vmem:[%s425 + $0x18] sm:$0xff]
  %v430 = vld [vmem:[%s425 + $0x20] sm:$0xff]
  %v431 = vld [vmem:[%s425 + $0x28] sm:$0xff]
  %v432 = vld [vmem:[%s425 + $0x30] sm:$0xff]
  %v433 = vld [vmem:[%s425 + $0x38] sm:$0xff]
  %v434 = vld [vmem:[%s425 + $0x40] sm:$0xff]
  %v435 = vld [vmem:[%s425 + $0x48] sm:$0xff]
  %v436 = vld [vmem:[%s425 + $0x50] sm:$0xff]
  %v437 = vld [vmem:[%s425 + $0x58] sm:$0xff]
  %v438 = vld [vmem:[%s425 + $0x60] sm:$0xff]
  %v439 = vld [vmem:[%s425 + $0x68] sm:$0xff]
  %v440 = vld [vmem:[%s425 + $0x70] sm:$0xff]
  %v441 = vld [vmem:[%s425 + $0x78] sm:$0xff]
  %v442 = vld [vmem:[%s425 + $0x80] sm:$0xff]
  %v443 = vld [vmem:[%s425 + $0x88] sm:$0xff]
  %v444 = vld [vmem:[%s425 + $0x90] sm:$0xff]
  %v445 = vld [vmem:[%s425 + $0x98] sm:$0xff]
  %v446 = vld [vmem:[%s425 + $0xa0] sm:$0xff]
  %v447 = vld [vmem:[%s425 + $0xa8] sm:$0xff]
  %v448 = vld [vmem:[%s425 + $0xb0] sm:$0xff]
  %v449 = vld [vmem:[%s425 + $0xb8] sm:$0xff]
  %v450 = vld [vmem:[%s425 + $0xc0] sm:$0xff]
  %v451 = vld [vmem:[%s425 + $0xc8] sm:$0xff]
  %v452 = vld [vmem:[%s425 + $0xd0] sm:$0xff]
  %v453 = vld [vmem:[%s425 + $0xd8] sm:$0xff]
  %v454 = vld [vmem:[%s425 + $0xe0] sm:$0xff]
  %v455 = vld [vmem:[%s425 + $0xe8] sm:$0xff]
  %v456 = vld [vmem:[%s425 + $0xf0] sm:$0xff]
  %v457 = vld [vmem:[%s425 + $0xf8] sm:$0xff]
  %v490 = vunpack.c.l.b16 %v426
  %v491 = vunpack.c.h.b16 %v426
  %v492 = vunpack.c.l.b16 %v427
  %v493 = vunpack.c.h.b16 %v427
  %v494 = vunpack.c.l.b16 %v428
  %v495 = vunpack.c.h.b16 %v428
  %v496 = vunpack.c.l.b16 %v429
  %v497 = vunpack.c.h.b16 %v429
  %v498 = vunpack.c.l.b16 %v430
  %v499 = vunpack.c.h.b16 %v430
  %v500 = vunpack.c.l.b16 %v431
  %v501 = vunpack.c.h.b16 %v431
  %v502 = vunpack.c.l.b16 %v432
  %v503 = vunpack.c.h.b16 %v432
  %v504 = vunpack.c.l.b16 %v433
  %v505 = vunpack.c.h.b16 %v433
  %v506 = vunpack.c.l.b16 %v434
  %v507 = vunpack.c.h.b16 %v434
  %v508 = vunpack.c.l.b16 %v435
  %v509 = vunpack.c.h.b16 %v435
  %v510 = vunpack.c.l.b16 %v436
  %v511 = vunpack.c.h.b16 %v436
  %v512 = vunpack.c.l.b16 %v437
  %v513 = vunpack.c.h.b16 %v437
  %v514 = vunpack.c.l.b16 %v438
  %v515 = vunpack.c.h.b16 %v438
  %v516 = vunpack.c.l.b16 %v439
  %v517 = vunpack.c.h.b16 %v439
  %v518 = vunpack.c.l.b16 %v440
  %v519 = vunpack.c.h.b16 %v440
  %v520 = vunpack.c.l.b16 %v441
  %v521 = vunpack.c.h.b16 %v441
  %v522 = vunpack.c.l.b16 %v442
  %v523 = vunpack.c.h.b16 %v442
  %v524 = vunpack.c.l.b16 %v443
  %v525 = vunpack.c.h.b16 %v443
  %v526 = vunpack.c.l.b16 %v444
  %v527 = vunpack.c.h.b16 %v444
  %v528 = vunpack.c.l.b16 %v445
  %v529 = vunpack.c.h.b16 %v445
  %v530 = vunpack.c.l.b16 %v446
  %v531 = vunpack.c.h.b16 %v446
  %v532 = vunpack.c.l.b16 %v447
  %v533 = vunpack.c.h.b16 %v447
  %v534 = vunpack.c.l.b16 %v448
  %v535 = vunpack.c.h.b16 %v448
  %v536 = vunpack.c.l.b16 %v449
  %v537 = vunpack.c.h.b16 %v449
  %v538 = vunpack.c.l.b16 %v450
  %v539 = vunpack.c.h.b16 %v450
  %v540 = vunpack.c.l.b16 %v451
  %v541 = vunpack.c.h.b16 %v451
  %v542 = vunpack.c.l.b16 %v452
  %v543 = vunpack.c.h.b16 %v452
  %v544 = vunpack.c.l.b16 %v453
  %v545 = vunpack.c.h.b16 %v453
  %v546 = vunpack.c.l.b16 %v454
  %v547 = vunpack.c.h.b16 %v454
  %v548 = vunpack.c.l.b16 %v455
  %v549 = vunpack.c.h.b16 %v455
  %v550 = vunpack.c.l.b16 %v456
  %v551 = vunpack.c.h.b16 %v456
  %v552 = vunpack.c.l.b16 %v457
  %v553 = vunpack.c.h.b16 %v457
  %v554 = vpack.c.b16 %v492, %v490
  %v555 = vpack.c.b16 %v493, %v491
  %v556 = vpack.c.b16 %v496, %v494
  %v557 = vpack.c.b16 %v497, %v495
  %v558 = vpack.c.b16 %v500, %v498
  %v559 = vpack.c.b16 %v501, %v499
  %v560 = vpack.c.b16 %v504, %v502
  %v561 = vpack.c.b16 %v505, %v503
  %v562 = vpack.c.b16 %v508, %v506
  %v563 = vpack.c.b16 %v509, %v507
  %v564 = vpack.c.b16 %v512, %v510
  %v565 = vpack.c.b16 %v513, %v511
  %v566 = vpack.c.b16 %v516, %v514
  %v567 = vpack.c.b16 %v517, %v515
  %v568 = vpack.c.b16 %v520, %v518
  %v569 = vpack.c.b16 %v521, %v519
  %v570 = vpack.c.b16 %v524, %v522
  %v571 = vpack.c.b16 %v525, %v523
  %v572 = vpack.c.b16 %v528, %v526
  %v573 = vpack.c.b16 %v529, %v527
  %v574 = vpack.c.b16 %v532, %v530
  %v575 = vpack.c.b16 %v533, %v531
  %v576 = vpack.c.b16 %v536, %v534
  %v577 = vpack.c.b16 %v537, %v535
  %v578 = vpack.c.b16 %v540, %v538
  %v579 = vpack.c.b16 %v541, %v539
  %v580 = vpack.c.b16 %v544, %v542
  %v581 = vpack.c.b16 %v545, %v543
  %v582 = vpack.c.b16 %v548, %v546
  %v583 = vpack.c.b16 %v549, %v547
  %v584 = vpack.c.b16 %v552, %v550
  %v585 = vpack.c.b16 %v553, %v551
  %618 = vmatprep.subr.bf16.mxu0 %v555
  %619 = vmatpush1.bf16.msra.mxu0 %v554
  %620 = vmatprep.subr.bf16.mxu0 %v557
  %621 = vmatpush1.bf16.msra.mxu0 %v556
  %622 = vmatprep.subr.bf16.mxu0 %v559
  %623 = vmatpush1.bf16.msra.mxu0 %v558
  %624 = vmatprep.subr.bf16.mxu0 %v561
  %625 = vmatpush1.bf16.msra.mxu0 %v560
  %626 = vmatprep.subr.bf16.mxu0 %v563
  %627 = vmatpush1.bf16.msra.mxu0 %v562
  %628 = vmatprep.subr.bf16.mxu0 %v565
  %629 = vmatpush1.bf16.msra.mxu0 %v564
  %630 = vmatprep.subr.bf16.mxu0 %v567
  %631 = vmatpush1.bf16.msra.mxu0 %v566
  %632 = vmatprep.subr.bf16.mxu0 %v569
  %633 = vmatpush1.bf16.msra.mxu0 %v568
  %634 = vmatprep.subr.bf16.mxu0 %v571
  %635 = vmatpush1.bf16.msra.mxu0 %v570
  %636 = vmatprep.subr.bf16.mxu0 %v573
  %637 = vmatpush1.bf16.msra.mxu0 %v572
  %638 = vmatprep.subr.bf16.mxu0 %v575
  %639 = vmatpush1.bf16.msra.mxu0 %v574
  %640 = vmatprep.subr.bf16.mxu0 %v577
  %641 = vmatpush1.bf16.msra.mxu0 %v576
  %642 = vmatprep.subr.bf16.mxu0 %v579
  %643 = vmatpush1.bf16.msra.mxu0 %v578
  %644 = vmatprep.subr.bf16.mxu0 %v581
  %645 = vmatpush1.bf16.msra.mxu0 %v580
  %646 = vmatprep.subr.bf16.mxu0 %v583
  %647 = vmatpush1.bf16.msra.mxu0 %v582
  %648 = vmatprep.subr.bf16.mxu0 %v585
  %649 = vmatpush1.bf16.msra.mxu0 %v584
  %650 = vmatprep.mubr.bf16.mxu0 %v120
  %651 = vmatmul.mubr.bf16.gmra.mrb[0].mxu0 %v119
  %v652 = vpop.f32.mrb[0].mxu0
  %v653 = vadd.f32 0.0, %v652
  %v654 = vpop.f32.mrb[0].mxu0
  %v655 = vadd.f32 0.0, %v654
  %v656 = vpop.f32.mrb[0].mxu0
  %v657 = vadd.f32 0.0, %v656
  %v658 = vpop.f32.mrb[0].mxu0
  %v659 = vadd.f32 0.0, %v658
  %660 = vmatprep.mubr.bf16.mxu0 %v122
  %661 = vmatmul.mubr.bf16.gmra.mrb[0].mxu0 %v121
  %v662 = vpop.f32.mrb[0].mxu0
  %v663 = vadd.f32 0.0, %v662
  %v664 = vpop.f32.mrb[0].mxu0
  %v665 = vadd.f32 0.0, %v664
  %v666 = vpop.f32.mrb[0].mxu0
  %v667 = vadd.f32 0.0, %v666
  %v668 = vpop.f32.mrb[0].mxu0
  %v669 = vadd.f32 0.0, %v668
  %670 = vmatprep.mubr.bf16.mxu0 %v124
  %671 = vmatmul.mubr.bf16.gmra.mrb[0].mxu0 %v123
  %v672 = vpop.f32.mrb[0].mxu0
  %v673 = vadd.f32 0.0, %v672
  %v674 = vpop.f32.mrb[0].mxu0
  %v675 = vadd.f32 0.0, %v674
  %v676 = vpop.f32.mrb[0].mxu0
  %v677 = vadd.f32 0.0, %v676
  %v678 = vpop.f32.mrb[0].mxu0
  %v679 = vadd.f32 0.0, %v678
  %680 = vmatprep.mubr.bf16.mxu0 %v126
  %681 = vmatmul.mubr.bf16.gmra.mrb[0].mxu0 %v125
  %v682 = vpop.f32.mrb[0].mxu0
  %v683 = vadd.f32 0.0, %v682
  %v684 = vpop.f32.mrb[0].mxu0
  %v685 = vadd.f32 0.0, %v684
  %v686 = vpop.f32.mrb[0].mxu0
  %v687 = vadd.f32 0.0, %v686
  %v688 = vpop.f32.mrb[0].mxu0
  %v689 = vadd.f32 0.0, %v688
  %690 = vdwg.mxu0
  %v691 = vlaneseq
  %v692 = vshrl.u32 %v691, 7
  %v693 = vadd.s32 %v692, 8
  %v694 = vadd.s32 %v692, 16
  %v695 = vadd.s32 %v692, 24
  %v696 = vadd.s32 %v692, 32
  %v697 = vadd.s32 %v692, 40
  %v698 = vadd.s32 %v692, 48
  %v699 = vadd.s32 %v692, 56
  %vm700 = vcmp.lt.s32.totalorder %v692, 0
  %v701 = vsub.s32 0, %v692
  %v702 = vsel %vm700, %v701, %v692
  %v703 = vshrl.u32 %v702, 5
  %v704 = vand.u32 %v702, 31
  %v705 = vsub.s32 0, %v704
  %v706 = vsel %vm700, %v705, %v704
  %vm707 = vcmp.lt.s32.totalorder %v693, 0
  %v708 = vsub.s32 0, %v693
  %v709 = vsel %vm707, %v708, %v693
  %v710 = vshrl.u32 %v709, 5
  %v711 = vand.u32 %v709, 31
  %v712 = vsub.s32 0, %v711
  %v713 = vsel %vm707, %v712, %v711
  %vm714 = vcmp.lt.s32.totalorder %v694, 0
  %v715 = vsub.s32 0, %v694
  %v716 = vsel %vm714, %v715, %v694
  %v717 = vshrl.u32 %v716, 5
  %v718 = vand.u32 %v716, 31
  %v719 = vsub.s32 0, %v718
  %v720 = vsel %vm714, %v719, %v718
  %vm721 = vcmp.lt.s32.totalorder %v695, 0
  %v722 = vsub.s32 0, %v695
  %v723 = vsel %vm721, %v722, %v695
  %v724 = vshrl.u32 %v723, 5
  %v725 = vand.u32 %v723, 31
  %v726 = vsub.s32 0, %v725
  %v727 = vsel %vm721, %v726, %v725
  %vm728 = vcmp.lt.s32.totalorder %v696, 0
  %v729 = vsub.s32 0, %v696
  %v730 = vsel %vm728, %v729, %v696
  %v731 = vshrl.u32 %v730, 5
  %v732 = vand.u32 %v730, 31
  %v733 = vsub.s32 0, %v732
  %v734 = vsel %vm728, %v733, %v732
  %vm735 = vcmp.lt.s32.totalorder %v697, 0
  %v736 = vsub.s32 0, %v697
  %v737 = vsel %vm735, %v736, %v697
  %v738 = vshrl.u32 %v737, 5
  %v739 = vand.u32 %v737, 31
  %v740 = vsub.s32 0, %v739
  %v741 = vsel %vm735, %v740, %v739
  %vm742 = vcmp.lt.s32.totalorder %v698, 0
  %v743 = vsub.s32 0, %v698
  %v744 = vsel %vm742, %v743, %v698
  %v745 = vshrl.u32 %v744, 5
  %v746 = vand.u32 %v744, 31
  %v747 = vsub.s32 0, %v746
  %v748 = vsel %vm742, %v747, %v746
  %vm749 = vcmp.lt.s32.totalorder %v699, 0
  %v750 = vsub.s32 0, %v699
  %v751 = vsel %vm749, %v750, %v699
  %v752 = vshrl.u32 %v751, 5
  %v753 = vand.u32 %v751, 31
  %v754 = vsub.s32 0, %v753
  %v755 = vsel %vm749, %v754, %v753
  %vm756 = vcmp.ne.s32.totalorder %v706, 0
  %vm757 = vcmp.ne.s32.totalorder %v713, 0
  %vm758 = vcmp.ne.s32.totalorder %v720, 0
  %vm759 = vcmp.ne.s32.totalorder %v727, 0
  %vm760 = vcmp.ne.s32.totalorder %v734, 0
  %vm761 = vcmp.ne.s32.totalorder %v741, 0
  %vm762 = vcmp.ne.s32.totalorder %v748, 0
  %vm763 = vcmp.ne.s32.totalorder %v755, 0
  %vm764 = vcmp.lt.s32.totalorder %v706, 0
  %vm765 = vcmp.lt.s32.totalorder %v713, 0
  %vm766 = vcmp.lt.s32.totalorder %v720, 0
  %vm767 = vcmp.lt.s32.totalorder %v727, 0
  %vm768 = vcmp.lt.s32.totalorder %v734, 0
  %vm769 = vcmp.lt.s32.totalorder %v741, 0
  %vm770 = vcmp.lt.s32.totalorder %v748, 0
  %vm771 = vcmp.lt.s32.totalorder %v755, 0
  %vm772 = vmand %vm764, %vm756
  %vm773 = vmand %vm765, %vm757
  %vm774 = vmand %vm766, %vm758
  %vm775 = vmand %vm767, %vm759
  %vm776 = vmand %vm768, %vm760
  %vm777 = vmand %vm769, %vm761
  %vm778 = vmand %vm770, %vm762
  %vm779 = vmand %vm771, %vm763
  %v780 = vadd.s32 %v706, 32
  %v781 = vadd.s32 %v713, 32
  %v782 = vadd.s32 %v720, 32
  %v783 = vadd.s32 %v727, 32
  %v784 = vadd.s32 %v734, 32
  %v785 = vadd.s32 %v741, 32
  %v786 = vadd.s32 %v748, 32
  %v787 = vadd.s32 %v755, 32
  %v788 = vsel %vm772, %v780, %v706
  %v789 = vsel %vm773, %v781, %v713
  %v790 = vsel %vm774, %v782, %v720
  %v791 = vsel %vm775, %v783, %v727
  %v792 = vsel %vm776, %v784, %v734
  %v793 = vsel %vm777, %v785, %v741
  %v794 = vsel %vm778, %v786, %v748
  %v795 = vsel %vm779, %v787, %v755
  %v796 = vld [vmem:[%s2] sm:$0x3]
  %v798 = vlaneseq
  %v799 = vshrl.u32 %v798, 7
  %v800 = vsub.s32 0, %v799
  %v801 = vrot.slane %v796, %v800
  %v802 = vlaneseq
  %v803 = vshrl.u32 %v802, 7
  %v804 = vsub.s32 1, %v803
  %v805 = vrot.slane %v796, %v804
  %v840 = vunpack.c.l.b16 %v393
  %v841 = vunpack.c.h.b16 %v393
  %v842 = vunpack.c.l.b16 %v394
  %v843 = vunpack.c.h.b16 %v394
  %v844 = vunpack.c.l.b16 %v395
  %v845 = vunpack.c.h.b16 %v395
  %v846 = vunpack.c.l.b16 %v396
  %v847 = vunpack.c.h.b16 %v396
  %v848 = vunpack.c.l.b16 %v397
  %v849 = vunpack.c.h.b16 %v397
  %v850 = vunpack.c.l.b16 %v398
  %v851 = vunpack.c.h.b16 %v398
  %v852 = vunpack.c.l.b16 %v399
  %v853 = vunpack.c.h.b16 %v399
  %v854 = vunpack.c.l.b16 %v400
  %v855 = vunpack.c.h.b16 %v400
  %v856 = vunpack.c.l.b16 %v401
  %v857 = vunpack.c.h.b16 %v401
  %v858 = vunpack.c.l.b16 %v402
  %v859 = vunpack.c.h.b16 %v402
  %v860 = vunpack.c.l.b16 %v403
  %v861 = vunpack.c.h.b16 %v403
  %v862 = vunpack.c.l.b16 %v404
  %v863 = vunpack.c.h.b16 %v404
  %v864 = vunpack.c.l.b16 %v405
  %v865 = vunpack.c.h.b16 %v405
  %v866 = vunpack.c.l.b16 %v406
  %v867 = vunpack.c.h.b16 %v406
  %v868 = vunpack.c.l.b16 %v407
  %v869 = vunpack.c.h.b16 %v407
  %v870 = vunpack.c.l.b16 %v408
  %v871 = vunpack.c.h.b16 %v408
  %v872 = vunpack.c.l.b16 %v409
  %v873 = vunpack.c.h.b16 %v409
  %v874 = vunpack.c.l.b16 %v410
  %v875 = vunpack.c.h.b16 %v410
  %v876 = vunpack.c.l.b16 %v411
  %v877 = vunpack.c.h.b16 %v411
  %v878 = vunpack.c.l.b16 %v412
  %v879 = vunpack.c.h.b16 %v412
  %v880 = vunpack.c.l.b16 %v413
  %v881 = vunpack.c.h.b16 %v413
  %v882 = vunpack.c.l.b16 %v414
  %v883 = vunpack.c.h.b16 %v414
  %v884 = vunpack.c.l.b16 %v415
  %v885 = vunpack.c.h.b16 %v415
  %v886 = vunpack.c.l.b16 %v416
  %v887 = vunpack.c.h.b16 %v416
  %v888 = vunpack.c.l.b16 %v417
  %v889 = vunpack.c.h.b16 %v417
  %v890 = vunpack.c.l.b16 %v418
  %v891 = vunpack.c.h.b16 %v418
  %v892 = vunpack.c.l.b16 %v419
  %v893 = vunpack.c.h.b16 %v419
  %v894 = vunpack.c.l.b16 %v420
  %v895 = vunpack.c.h.b16 %v420
  %v896 = vunpack.c.l.b16 %v421
  %v897 = vunpack.c.h.b16 %v421
  %v898 = vunpack.c.l.b16 %v422
  %v899 = vunpack.c.h.b16 %v422
  %v900 = vunpack.c.l.b16 %v423
  %v901 = vunpack.c.h.b16 %v423
  %v902 = vunpack.c.l.b16 %v424
  %v903 = vunpack.c.h.b16 %v424
  %v904 = vpack.c.b16 %v842, %v840
  %v905 = vpack.c.b16 %v843, %v841
  %v906 = vpack.c.b16 %v846, %v844
  %v907 = vpack.c.b16 %v847, %v845
  %v908 = vpack.c.b16 %v850, %v848
  %v909 = vpack.c.b16 %v851, %v849
  %v910 = vpack.c.b16 %v854, %v852
  %v911 = vpack.c.b16 %v855, %v853
  %v912 = vpack.c.b16 %v858, %v856
  %v913 = vpack.c.b16 %v859, %v857
  %v914 = vpack.c.b16 %v862, %v860
  %v915 = vpack.c.b16 %v863, %v861
  %v916 = vpack.c.b16 %v866, %v864
  %v917 = vpack.c.b16 %v867, %v865
  %v918 = vpack.c.b16 %v870, %v868
  %v919 = vpack.c.b16 %v871, %v869
  %v920 = vpack.c.b16 %v874, %v872
  %v921 = vpack.c.b16 %v875, %v873
  %v922 = vpack.c.b16 %v878, %v876
  %v923 = vpack.c.b16 %v879, %v877
  %v924 = vpack.c.b16 %v882, %v880
  %v925 = vpack.c.b16 %v883, %v881
  %v926 = vpack.c.b16 %v886, %v884
  %v927 = vpack.c.b16 %v887, %v885
  %v928 = vpack.c.b16 %v890, %v888
  %v929 = vpack.c.b16 %v891, %v889
  %v930 = vpack.c.b16 %v894, %v892
  %v931 = vpack.c.b16 %v895, %v893
  %v932 = vpack.c.b16 %v898, %v896
  %v933 = vpack.c.b16 %v899, %v897
  %v934 = vpack.c.b16 %v902, %v900
  %v935 = vpack.c.b16 %v903, %v901
  %968 = vmatprep.subr.bf16.mxu0 %v905
  %969 = vmatpush1.bf16.msra.mxu0 %v904
  %970 = vmatprep.subr.bf16.mxu0 %v907
  %971 = vmatpush1.bf16.msra.mxu0 %v906
  %972 = vmatprep.subr.bf16.mxu0 %v909
  %973 = vmatpush1.bf16.msra.mxu0 %v908
  %974 = vmatprep.subr.bf16.mxu0 %v911
  %975 = vmatpush1.bf16.msra.mxu0 %v910
  %976 = vmatprep.subr.bf16.mxu0 %v913
  %977 = vmatpush1.bf16.msra.mxu0 %v912
  %978 = vmatprep.subr.bf16.mxu0 %v915
  %979 = vmatpush1.bf16.msra.mxu0 %v914
  %980 = vmatprep.subr.bf16.mxu0 %v917
  %981 = vmatpush1.bf16.msra.mxu0 %v916
  %982 = vmatprep.subr.bf16.mxu0 %v919
  %983 = vmatpush1.bf16.msra.mxu0 %v918
  %984 = vmatprep.subr.bf16.mxu0 %v921
  %985 = vmatpush1.bf16.msra.mxu0 %v920
  %986 = vmatprep.subr.bf16.mxu0 %v923
  %987 = vmatpush1.bf16.msra.mxu0 %v922
  %988 = vmatprep.subr.bf16.mxu0 %v925
  %989 = vmatpush1.bf16.msra.mxu0 %v924
  %990 = vmatprep.subr.bf16.mxu0 %v927
  %991 = vmatpush1.bf16.msra.mxu0 %v926
  %992 = vmatprep.subr.bf16.mxu0 %v929
  %993 = vmatpush1.bf16.msra.mxu0 %v928
  %994 = vmatprep.subr.bf16.mxu0 %v931
  %995 = vmatpush1.bf16.msra.mxu0 %v930
  %996 = vmatprep.subr.bf16.mxu0 %v933
  %997 = vmatpush1.bf16.msra.mxu0 %v932
  %998 = vmatprep.subr.bf16.mxu0 %v935
  %999 = vmatpush1.bf16.msra.mxu0 %v934
  %1000 = vmatprep.mubr.bf16.mxu0 %v120
  %1001 = vmatmul.mubr.bf16.gmra.mrb[0].mxu0 %v119
  %v1002 = vpop.f32.mrb[0].mxu0
  %v1003 = vadd.f32 %v801, %v1002
  %v1004 = vpop.f32.mrb[0].mxu0
  %v1005 = vadd.f32 %v805, %v1004
  %v1006 = vpop.f32.mrb[0].mxu0
  %v1007 = vadd.f32 %v801, %v1006
  %v1008 = vpop.f32.mrb[0].mxu0
  %v1009 = vadd.f32 %v805, %v1008
  %1010 = vmatprep.mubr.bf16.mxu0 %v122
  %1011 = vmatmul.mubr.bf16.gmra.mrb[0].mxu0 %v121
  %v1012 = vpop.f32.mrb[0].mxu0
  %v1013 = vadd.f32 %v801, %v1012
  %v1014 = vpop.f32.mrb[0].mxu0
  %v1015 = vadd.f32 %v805, %v1014
  %v1016 = vpop.f32.mrb[0].mxu0
  %v1017 = vadd.f32 %v801, %v1016
  %v1018 = vpop.f32.mrb[0].mxu0
  %v1019 = vadd.f32 %v805, %v1018
  %1020 = vmatprep.mubr.bf16.mxu0 %v124
  %1021 = vmatmul.mubr.bf16.gmra.mrb[0].mxu0 %v123
  %v1022 = vpop.f32.mrb[0].mxu0
  %v1023 = vadd.f32 %v801, %v1022
  %v1024 = vpop.f32.mrb[0].mxu0
  %v1025 = vadd.f32 %v805, %v1024
  %v1026 = vpop.f32.mrb[0].mxu0
  %v1027 = vadd.f32 %v801, %v1026
  %v1028 = vpop.f32.mrb[0].mxu0
  %v1029 = vadd.f32 %v805, %v1028
  %1030 = vmatprep.mubr.bf16.mxu0 %v126
  %1031 = vmatmul.mubr.bf16.gmra.mrb[0].mxu0 %v125
  %v1032 = vpop.f32.mrb[0].mxu0
  %v1033 = vadd.f32 %v801, %v1032
  %v1034 = vpop.f32.mrb[0].mxu0
  %v1035 = vadd.f32 %v805, %v1034
  %v1036 = vpop.f32.mrb[0].mxu0
  %v1037 = vadd.f32 %v801, %v1036
  %v1038 = vpop.f32.mrb[0].mxu0
  %v1039 = vadd.f32 %v805, %v1038
  %1040 = vdwg.mxu0
  %vm1041 = vcmp.eq.s32.totalorder %v788, 0
  %vm1042 = vcmp.eq.s32.totalorder %v789, 0
  %vm1043 = vcmp.eq.s32.totalorder %v790, 0
  %vm1044 = vcmp.eq.s32.totalorder %v791, 0
  %vm1045 = vcmp.eq.s32.totalorder %v792, 0
  %vm1046 = vcmp.eq.s32.totalorder %v793, 0
  %vm1047 = vcmp.eq.s32.totalorder %v794, 0
  %vm1048 = vcmp.eq.s32.totalorder %v795, 0
  %v1049 = vrot.slane %v354, 7
  %v1050 = vrot.slane %v356, 7
  %v1051 = vrot.slane %v358, 7
  %v1052 = vrot.slane %v360, 7
  %v1053 = vrot.slane %v364, 7
  %v1054 = vrot.slane %v366, 7
  %v1055 = vrot.slane %v368, 7
  %v1056 = vrot.slane %v370, 7
  %v1057 = vrot.slane %v374, 7
  %v1058 = vrot.slane %v376, 7
  %v1059 = vrot.slane %v378, 7
  %v1060 = vrot.slane %v380, 7
  %v1061 = vrot.slane %v384, 7
  %v1062 = vrot.slane %v386, 7
  %v1063 = vrot.slane %v388, 7
  %v1064 = vrot.slane %v390, 7
  %vm1065 = vcmp.lt.s32.totalorder %v692, 1
  %v1066 = vsel %vm1065, %v1061, %v1063
  %v1067 = vsel %vm1065, %v1062, %v1064
  %v1068 = vsel %vm1065, %v1059, %v1061
  %v1069 = vsel %vm1065, %v1060, %v1062
  %v1070 = vsel %vm1065, %v1057, %v1059
  %v1071 = vsel %vm1065, %v1058, %v1060
  %v1072 = vsel %vm1065, %v1055, %v1057
  %v1073 = vsel %vm1065, %v1056, %v1058
  %v1074 = vsel %vm1065, %v1053, %v1055
  %v1075 = vsel %vm1065, %v1054, %v1056
  %v1076 = vsel %vm1065, %v1051, %v1053
  %v1077 = vsel %vm1065, %v1052, %v1054
  %v1078 = vsel %vm1065, %v1049, %v1051
  %v1079 = vsel %vm1065, %v1050, %v1052
  %v1080 = vsel %vm1065, %v1063, %v1049
  %v1081 = vsel %vm1065, %v1064, %v1050
  %v1082 = vsel %vm1041, 0.0, %v1080
  %v1083 = vsel %vm1041, 0.0, %v1081
  %v1084 = vsel %vm1042, 0.0, %v1078
  %v1085 = vsel %vm1042, 0.0, %v1079
  %v1086 = vsel %vm1043, 0.0, %v1076
  %v1087 = vsel %vm1043, 0.0, %v1077
  %v1088 = vsel %vm1044, 0.0, %v1074
  %v1089 = vsel %vm1044, 0.0, %v1075
  %v1090 = vsel %vm1045, 0.0, %v1072
  %v1091 = vsel %vm1045, 0.0, %v1073
  %v1092 = vsel %vm1046, 0.0, %v1070
  %v1093 = vsel %vm1046, 0.0, %v1071
  %v1094 = vsel %vm1047, 0.0, %v1068
  %v1095 = vsel %vm1047, 0.0, %v1069
  %v1096 = vsel %vm1048, 0.0, %v1066
  %v1097 = vsel %vm1048, 0.0, %v1067
  %v1098 = vadd.f32 %v1003, %v1082
  %v1099 = vadd.f32 %v1005, %v1083
  %v1100 = vadd.f32 %v1007, %v1084
  %v1101 = vadd.f32 %v1009, %v1085
  %v1102 = vadd.f32 %v1013, %v1086
  %v1103 = vadd.f32 %v1015, %v1087
  %v1104 = vadd.f32 %v1017, %v1088
  %v1105 = vadd.f32 %v1019, %v1089
  %v1106 = vadd.f32 %v1023, %v1090
  %v1107 = vadd.f32 %v1025, %v1091
  %v1108 = vadd.f32 %v1027, %v1092
  %v1109 = vadd.f32 %v1029, %v1093
  %v1110 = vadd.f32 %v1033, %v1094
  %v1111 = vadd.f32 %v1035, %v1095
  %v1112 = vadd.f32 %v1037, %v1096
  %v1113 = vadd.f32 %v1039, %v1097
  %vm1114 = vcmp.eq.s32.totalorder %v788, 31
  %vm1115 = vcmp.eq.s32.totalorder %v789, 31
  %vm1116 = vcmp.eq.s32.totalorder %v790, 31
  %vm1117 = vcmp.eq.s32.totalorder %v791, 31
  %vm1118 = vcmp.eq.s32.totalorder %v792, 31
  %vm1119 = vcmp.eq.s32.totalorder %v793, 31
  %vm1120 = vcmp.eq.s32.totalorder %v794, 31
  %vm1121 = vcmp.eq.s32.totalorder %v795, 31
  %v1122 = vrot.slane %v653, 1
  %v1123 = vrot.slane %v655, 1
  %v1124 = vrot.slane %v657, 1
  %v1125 = vrot.slane %v659, 1
  %v1126 = vrot.slane %v663, 1
  %v1127 = vrot.slane %v665, 1
  %v1128 = vrot.slane %v667, 1
  %v1129 = vrot.slane %v669, 1
  %v1130 = vrot.slane %v673, 1
  %v1131 = vrot.slane %v675, 1
  %v1132 = vrot.slane %v677, 1
  %v1133 = vrot.slane %v679, 1
  %v1134 = vrot.slane %v683, 1
  %v1135 = vrot.slane %v685, 1
  %v1136 = vrot.slane %v687, 1
  %v1137 = vrot.slane %v689, 1
  %vm1138 = vcmp.lt.s32.totalorder %v692, 7
  %v1139 = vsel %vm1138, %v1134, %v1136
  %v1140 = vsel %vm1138, %v1135, %v1137
  %v1141 = vsel %vm1138, %v1132, %v1134
  %v1142 = vsel %vm1138, %v1133, %v1135
  %v1143 = vsel %vm1138, %v1130, %v1132
  %v1144 = vsel %vm1138, %v1131, %v1133
  %v1145 = vsel %vm1138, %v1128, %v1130
  %v1146 = vsel %vm1138, %v1129, %v1131
  %v1147 = vsel %vm1138, %v1126, %v1128
  %v1148 = vsel %vm1138, %v1127, %v1129
  %v1149 = vsel %vm1138, %v1124, %v1126
  %v1150 = vsel %vm1138, %v1125, %v1127
  %v1151 = vsel %vm1138, %v1122, %v1124
  %v1152 = vsel %vm1138, %v1123, %v1125
  %v1153 = vsel %vm1138, %v1136, %v1122
  %v1154 = vsel %vm1138, %v1137, %v1123
  %v1155 = vsel %vm1114, 0.0, %v1151
  %v1156 = vsel %vm1114, 0.0, %v1152
  %v1157 = vsel %vm1115, 0.0, %v1149
  %v1158 = vsel %vm1115, 0.0, %v1150
  %v1159 = vsel %vm1116, 0.0, %v1147
  %v1160 = vsel %vm1116, 0.0, %v1148
  %v1161 = vsel %vm1117, 0.0, %v1145
  %v1162 = vsel %vm1117, 0.0, %v1146
  %v1163 = vsel %vm1118, 0.0, %v1143
  %v1164 = vsel %vm1118, 0.0, %v1144
  %v1165 = vsel %vm1119, 0.0, %v1141
  %v1166 = vsel %vm1119, 0.0, %v1142
  %v1167 = vsel %vm1120, 0.0, %v1139
  %v1168 = vsel %vm1120, 0.0, %v1140
  %v1169 = vsel %vm1121, 0.0, %v1153
  %v1170 = vsel %vm1121, 0.0, %v1154
  %v1171 = vadd.f32 %v1098, %v1155
  %v1172 = vadd.f32 %v1099, %v1156
  %v1173 = vadd.f32 %v1100, %v1157
  %v1174 = vadd.f32 %v1101, %v1158
  %v1175 = vadd.f32 %v1102, %v1159
  %v1176 = vadd.f32 %v1103, %v1160
  %v1177 = vadd.f32 %v1104, %v1161
  %v1178 = vadd.f32 %v1105, %v1162
  %v1179 = vadd.f32 %v1106, %v1163
  %v1180 = vadd.f32 %v1107, %v1164
  %v1181 = vadd.f32 %v1108, %v1165
  %v1182 = vadd.f32 %v1109, %v1166
  %v1183 = vadd.f32 %v1110, %v1167
  %v1184 = vadd.f32 %v1111, %v1168
  %v1185 = vadd.f32 %v1112, %v1169
  %v1186 = vadd.f32 %v1113, %v1170
  %1187 = vst [vmem:[%s5] sm:$0xff] %v1171
  %1188 = vst [vmem:[%s5 + $0x8] sm:$0xff] %v1172
  %1189 = vst [vmem:[%s5 + $0x10] sm:$0xff] %v1173
  %1190 = vst [vmem:[%s5 + $0x18] sm:$0xff] %v1174
  %1191 = vst [vmem:[%s5 + $0x20] sm:$0xff] %v1175
  %1192 = vst [vmem:[%s5 + $0x28] sm:$0xff] %v1176
  %1193 = vst [vmem:[%s5 + $0x30] sm:$0xff] %v1177
  %1194 = vst [vmem:[%s5 + $0x38] sm:$0xff] %v1178
  %1195 = vst [vmem:[%s5 + $0x40] sm:$0xff] %v1179
  %1196 = vst [vmem:[%s5 + $0x48] sm:$0xff] %v1180
  %1197 = vst [vmem:[%s5 + $0x50] sm:$0xff] %v1181
  %1198 = vst [vmem:[%s5 + $0x58] sm:$0xff] %v1182
  %1199 = vst [vmem:[%s5 + $0x60] sm:$0xff] %v1183
  %1200 = vst [vmem:[%s5 + $0x68] sm:$0xff] %v1184
  %1201 = vst [vmem:[%s5 + $0x70] sm:$0xff] %v1185
  %1202 = vst [vmem:[%s5 + $0x78] sm:$0xff] %v1186
  %v1203 = vadd.f32 %v1171, %v1173
  %v1204 = vadd.f32 %v1203, %v1175
  %v1205 = vadd.f32 %v1204, %v1177
  %v1206 = vadd.f32 %v1205, %v1179
  %v1207 = vadd.f32 %v1206, %v1181
  %v1208 = vadd.f32 %v1207, %v1183
  %v1209 = vadd.f32 %v1208, %v1185
  %v1210 = vrot.slane %v1209, 4
  %v1211 = vadd.f32 %v1209, %v1210
  %v1212 = vrot.slane %v1211, 2
  %v1213 = vadd.f32 %v1211, %v1212
  %v1214 = vrot.slane %v1213, 1
  %v1215 = vadd.f32 %v1213, %v1214
  %v1216 = vadd.f32 %v1172, %v1174
  %v1217 = vadd.f32 %v1216, %v1176
  %v1218 = vadd.f32 %v1217, %v1178
  %v1219 = vadd.f32 %v1218, %v1180
  %v1220 = vadd.f32 %v1219, %v1182
  %v1221 = vadd.f32 %v1220, %v1184
  %v1222 = vadd.f32 %v1221, %v1186
  %v1223 = vrot.slane %v1222, 4
  %v1224 = vadd.f32 %v1222, %v1223
  %v1225 = vrot.slane %v1224, 2
  %v1226 = vadd.f32 %v1224, %v1225
  %v1227 = vrot.slane %v1226, 1
  %v1228 = vadd.f32 %v1226, %v1227
  %v1231 = vcombine.low %v1215, %v1228
  %v1233 = vunpack.c.l.s4 1966171168
  %v1234 = vunpack.c.0.s8 %v1233
  %v1235 = vlaneseq
  %v1236 = vshrl.u32 %v1235, 7
  %v1237 = vsub.s32 %v1234, %v1236
  %v1238 = vrot.slane %v1231, %v1237
  %v1240 = vunpack.c.l.s4 1966171168
  %v1241 = vunpack.c.0.s8 %v1240
  %v1242 = vlaneseq
  %v1243 = vshrl.u32 %v1242, 7
  %v1244 = vsub.s32 %v1241, %v1243
  %v1245 = vrot.slane %v1238, %v1244
  %v1247 = vlaneseq
  %vm1248 = vcmp.ge.s32.totalorder %v1247, 0
  %vm1249 = vcmp.lt.s32.totalorder %v1247, 256
  %vm1250 = vmand %vm1248, %vm1249
  %1251 = vst.msk [vmem:[%s6] sm:$0x3] %vm1250, %v1245
  %v1252 = vmul.f32 %v1171, %v1171
  %v1253 = vmul.f32 %v1172, %v1172
  %v1254 = vmul.f32 %v1173, %v1173
  %v1255 = vmul.f32 %v1174, %v1174
  %v1256 = vmul.f32 %v1175, %v1175
  %v1257 = vmul.f32 %v1176, %v1176
  %v1258 = vmul.f32 %v1177, %v1177
  %v1259 = vmul.f32 %v1178, %v1178
  %v1260 = vmul.f32 %v1179, %v1179
  %v1261 = vmul.f32 %v1180, %v1180
  %v1262 = vmul.f32 %v1181, %v1181
  %v1263 = vmul.f32 %v1182, %v1182
  %v1264 = vmul.f32 %v1183, %v1183
  %v1265 = vmul.f32 %v1184, %v1184
  %v1266 = vmul.f32 %v1185, %v1185
  %v1267 = vmul.f32 %v1186, %v1186
  %v1268 = vadd.f32 %v1252, %v1254
  %v1269 = vadd.f32 %v1268, %v1256
  %v1270 = vadd.f32 %v1269, %v1258
  %v1271 = vadd.f32 %v1270, %v1260
  %v1272 = vadd.f32 %v1271, %v1262
  %v1273 = vadd.f32 %v1272, %v1264
  %v1274 = vadd.f32 %v1273, %v1266
  %v1275 = vrot.slane %v1274, 4
  %v1276 = vadd.f32 %v1274, %v1275
  %v1277 = vrot.slane %v1276, 2
  %v1278 = vadd.f32 %v1276, %v1277
  %v1279 = vrot.slane %v1278, 1
  %v1280 = vadd.f32 %v1278, %v1279
  %v1281 = vadd.f32 %v1253, %v1255
  %v1282 = vadd.f32 %v1281, %v1257
  %v1283 = vadd.f32 %v1282, %v1259
  %v1284 = vadd.f32 %v1283, %v1261
  %v1285 = vadd.f32 %v1284, %v1263
  %v1286 = vadd.f32 %v1285, %v1265
  %v1287 = vadd.f32 %v1286, %v1267
  %v1288 = vrot.slane %v1287, 4
  %v1289 = vadd.f32 %v1287, %v1288
  %v1290 = vrot.slane %v1289, 2
  %v1291 = vadd.f32 %v1289, %v1290
  %v1292 = vrot.slane %v1291, 1
  %v1293 = vadd.f32 %v1291, %v1292
  %v1296 = vcombine.low %v1280, %v1293
  %v1298 = vunpack.c.l.s4 1966171168
  %v1299 = vunpack.c.0.s8 %v1298
  %v1300 = vlaneseq
  %v1301 = vshrl.u32 %v1300, 7
  %v1302 = vsub.s32 %v1299, %v1301
  %v1303 = vrot.slane %v1296, %v1302
  %v1305 = vunpack.c.l.s4 1966171168
  %v1306 = vunpack.c.0.s8 %v1305
  %v1307 = vlaneseq
  %v1308 = vshrl.u32 %v1307, 7
  %v1309 = vsub.s32 %v1306, %v1308
  %v1310 = vrot.slane %v1303, %v1309
  %1312 = vst.msk [vmem:[%s7] sm:$0x3] %vm1250, %v1310
  // Predicated region
  $region22: #{unet_up_block_forward.6} parent=0 // pred_check
    _
  $region23: #{unet_up_block_forward.6} parent=0 // pred_check_branch
    %1314 = sbr.rel (0) target = $region25
  $region24: #{unet_up_block_forward.6} parent=0 // pred_region
    _
  $region25: #{unet_up_block_forward.6} parent=0 // pred_fallthru
    _
  // Predicated region
  $region26: #{unet_up_block_forward.6} parent=0 // pred_check
    _
  $region27: #{unet_up_block_forward.6} parent=0 // pred_check_branch
    %1316 = sbr.rel (0) target = $region29
  $region28: #{unet_up_block_forward.6} parent=0 // pred_region
    _
  $region29: #{unet_up_block_forward.6} parent=0 // pred_fallthru
    _
  // Predicated region
  $region30: #{unet_up_block_forward.6} parent=0 // pred_check
    _
  $region31: #{unet_up_block_forward.6} parent=0 // pred_check_branch
    %1318 = sbr.rel (0) target = $region33
  $region32: #{unet_up_block_forward.6} parent=0 // pred_region
    _
  $region33: #{unet_up_block_forward.6} parent=0 // pred_fallthru
    _
  // Predicated region
  $region34: #{unet_up_block_forward.6} parent=0 // pred_check
    _
  $region35: #{unet_up_block_forward.6} parent=0 // pred_check_branch
    %1320 = sbr.rel (0) target = $region37
  $region36: #{unet_up_block_forward.6} parent=0 // pred_region
    _
  $region37: #{unet_up_block_forward.6} parent=0 // pred_fallthru
    _
  // Predicated region
  $region38: #{unet_up_block_forward.6} parent=0 // pred_check
    _
  $region39: #{unet_up_block_forward.6} parent=0 // pred_check_branch
    %1322 = sbr.rel (0) target = $region41
  $region40: #{unet_up_block_forward.6} parent=0 // pred_region
    _
  $region41: #{unet_up_block_forward.6} parent=0 // pred_fallthru
    _
  // Predicated region
  $region42: #{unet_up_block_forward.6} parent=0 // pred_check
    _
  $region43: #{unet_up_block_forward.6} parent=0 // pred_check_branch
    %1324 = sbr.rel (0) target = $region45
  $region44: #{unet_up_block_forward.6} parent=0 // pred_region
    _
  $region45: #{unet_up_block_forward.6} parent=0 // pred_fallthru
    _

</llo_original>
